<compile_context>
chip_gen: v7x
topology: tpu7x:2x2x1
jax: 0.10.0
libtpu: 0.0.40
codegen_flags: <defaults>
</compile_context>

<pallas_src>
import functools

import jax
import jax.numpy as jnp
from jax.experimental import pallas as pl
from jax.experimental.pallas import tpu as pltpu

LN_EPS = 1e-5  # PyTorch nn.LayerNorm default eps


# ---------------------------------------------------------------------------
# Fused Pallas kernel: T GRU steps, weights resident, history carried in VMEM
# ---------------------------------------------------------------------------
def gru_seq_kernel(
    x_ref, hist0_ref, m1_ref, m2_ref,
    win1_ref, wl1_ref, vec1_ref,
    win2_ref, wl2_ref, vec2_ref,
    out_ref, hist_scr,
    *, hidden_num, output_num, input_num, batch,
):
    f32 = jnp.float32
    bf16 = jnp.bfloat16
    O = output_num
    B = batch
    nrow = hidden_num + 3  # rows per {bias, gamma, beta} group in the vec pack

    t = pl.program_id(0)

    @pl.when(t == 0)
    def _():
        hist_scr[...] = hist0_ref[...]

    X = x_ref[0]            # (B, I) f32
    hist = hist_scr[...]    # (B, O) f32

    def sigmoid(v):
        # tanh formulation keeps the transcendental on the EUP on every generation
        return 0.5 * jnp.tanh(0.5 * v) + 0.5

    def group_ln(y, m, gamma, beta):
        # One MXU pass for both E[x] and E[x^2] per 32-feature group: stack [y ; y*y]
        # along sublanes and multiply by the block-diagonal averaging matrix (f32).
        stats = jnp.dot(jnp.concatenate([y, y * y], axis=0), m,
                        preferred_element_type=f32)
        mean = stats[:B]
        var = stats[B:] - mean * mean
        return (y - mean) * jax.lax.rsqrt(var + LN_EPS) * gamma + beta

    def dot_bf16(a, w):
        # MXU-native bf16 operands, f32 accumulation.
        return jnp.dot(a.astype(bf16), w, preferred_element_type=f32)

    def sigmoid_stage(x0, x1, win_ref, wl_ref, vec_ref, m):
        def vrow(g, j):                           # g: 0=b,1=gamma,2=beta ; j: layer
            r0 = g * nrow + j
            return vec_ref[r0:r0 + 1, :]          # (1, W) f32

        wx = win_ref[0:input_num, :]              # (I, W) bf16
        wh = win_ref[input_num:, :]               # (O, W) bf16
        a = group_ln(dot_bf16(x0, wx) + vrow(0, 0), m, vrow(1, 0), vrow(2, 0))
        b = group_ln(dot_bf16(x1, wh) + vrow(0, 1), m, vrow(1, 1), vrow(2, 1))
        residual = a + b
        output = sigmoid(residual)
        for i in range(hidden_num):               # static unroll (small hidden_num)
            y = dot_bf16(output, wl_ref[i]) + vrow(0, 2 + i)
            residual = residual + group_ln(y, m, vrow(1, 2 + i), vrow(2, 2 + i))
            output = sigmoid(residual)
        y = dot_bf16(output, wl_ref[hidden_num]) + vrow(0, 2 + hidden_num)
        return sigmoid(residual + group_ln(y, m, vrow(1, 2 + hidden_num),
                                           vrow(2, 2 + hidden_num)))

    # ---- Stage 1: units [r_left | r_right | z] on (X, history), width 3*O ----
    s1 = sigmoid_stage(X, hist, win1_ref, wl1_ref, vec1_ref, m1_ref[...])
    r = s1[:, 0:O] - s1[:, O:2 * O]               # CrossUnit(X, history)
    z = s1[:, 2 * O:3 * O]
    h_r = r * hist

    # ---- Stage 2: units [ht_left | ht_right] on (X, h_r), width 2*O ----
    s2 = sigmoid_stage(X, h_r, win2_ref, wl2_ref, vec2_ref, m2_ref[...])
    h_t = s2[:, 0:O] - s2[:, O:2 * O]             # CrossUnit(X, h_r)

    h_new = hist + z * (h_t - hist)               # == z*h_t + (1-z)*hist
    hist_scr[...] = h_new

    # Lane-dense output slab (unmasked full-lane stores); wrapper slices back to O.
    lane_pad = out_ref.shape[-1] - O
    if lane_pad > 0:
        out_row = jnp.concatenate([h_new, jnp.zeros((B, lane_pad), f32)], axis=-1)
    else:
        out_row = h_new
    out_ref[0] = out_row


# ---------------------------------------------------------------------------
# pallas_call wrappers
# ---------------------------------------------------------------------------
def gru_unit_sequence(x_seq, history0, packed):
    """Runs the GRUUnit forward T times (one pallas_call), returning (T, B, O)."""
    T, B, I = x_seq.shape
    O = packed["output_num"]
    H = packed["hidden_num"]
    Bp = max(8, ((B + 7) // 8) * 8)               # fill f32 sublane tile
    Op = max(128, ((O + 127) // 128) * 128)       # lane-dense output slab

    xp = jnp.zeros((T, Bp, I), jnp.float32).at[:, :B, :].set(x_seq.astype(jnp.float32))
    hp = jnp.zeros((Bp, O), jnp.float32).at[:B, :].set(history0.astype(jnp.float32))

    s1, s2 = packed["s1"], packed["s2"]
    m1, m2 = packed["m1"], packed["m2"]
    args = (xp, hp, m1, m2,
            s1["win"], s1["wl"], s1["vec"],
            s2["win"], s2["wl"], s2["vec"])

    def resident(a):
        # Full-array block, constant index_map → DMA'd once, VMEM-resident for all T.
        return pl.BlockSpec(a.shape, lambda t, _n=a.ndim: (0,) * _n)

    in_specs = [
        pl.BlockSpec((1, Bp, I), lambda t: (t, 0, 0)),   # stream X_t
        resident(hp), resident(m1), resident(m2),
        resident(s1["win"]), resident(s1["wl"]), resident(s1["vec"]),
        resident(s2["win"]), resident(s2["wl"]), resident(s2["vec"]),
    ]

    out = pl.pallas_call(
        functools.partial(gru_seq_kernel, hidden_num=H, output_num=O,
                          input_num=I, batch=Bp),
        out_shape=jax.ShapeDtypeStruct((T, Bp, Op), jnp.float32),
        grid_spec=pltpu.PrefetchScalarGridSpec(
            num_scalar_prefetch=0,
            grid=(T,),
            in_specs=in_specs,
            out_specs=pl.BlockSpec((1, Bp, Op), lambda t: (t, 0, 0)),
            scratch_shapes=[pltpu.VMEM((Bp, O), jnp.float32)],   # carried history
        ),
        compiler_params=pltpu.CompilerParams(
            dimension_semantics=("arbitrary",)),   # recurrence is serial over t
    )(*args)
    return out[:, :B, :O]


def gru_unit_forward(X, history, packed):
    """Single GRUUnit.forward step (== the PyTorch module's forward)."""
    return gru_unit_sequence(X[None, ...], history, packed)[0]


# ---------------------------------------------------------------------------
# Parameter construction (deterministic, PyTorch-default-like init)
# ---------------------------------------------------------------------------
def _init_linear(key, fan_in, fan_out):
    kw, kb = jax.random.split(key)
    s = 1.0 / jnp.sqrt(jnp.float32(fan_in))
    w = jax.random.uniform(kw, (fan_in, fan_out), jnp.float32, -s, s)
    b = jax.random.uniform(kb, (1, fan_out), jnp.float32, -s, s)
    return w, b


def init_sigmoid_unit(key, input_num, output_num, hidden_num):
    keys = jax.random.split(key, 3 + max(hidden_num, 1))
    p = {}
    p["w_in_x"], p["b_in_x"] = _init_linear(keys[0], input_num, output_num)
    p["g_in_x"] = jnp.ones((1, output_num), jnp.float32)
    p["be_in_x"] = jnp.zeros((1, output_num), jnp.float32)
    p["w_in_h"], p["b_in_h"] = _init_linear(keys[1], output_num, output_num)
    p["g_in_h"] = jnp.ones((1, output_num), jnp.float32)
    p["be_in_h"] = jnp.zeros((1, output_num), jnp.float32)
    w_h, b_h = [], []
    for i in range(hidden_num):
        w, b = _init_linear(keys[2 + i], output_num, output_num)
        w_h.append(w)
        b_h.append(b)
    p["w_h"] = jnp.stack(w_h, axis=0)                       # (H, O, O)
    p["b_h"] = jnp.stack(b_h, axis=0)                       # (H, 1, O)
    p["g_h"] = jnp.ones((hidden_num, 1, output_num), jnp.float32)
    p["be_h"] = jnp.zeros((hidden_num, 1, output_num), jnp.float32)
    p["w_out"], p["b_out"] = _init_linear(keys[-1], output_num, output_num)
    p["g_out"] = jnp.ones((1, output_num), jnp.float32)
    p["be_out"] = jnp.zeros((1, output_num), jnp.float32)
    return p


def init_gru_unit(key, input_num, output_num, hidden_num):
    k = jax.random.split(key, 5)
    return {
        "r_left": init_sigmoid_unit(k[0], input_num, output_num, hidden_num),
        "r_right": init_sigmoid_unit(k[1], input_num, output_num, hidden_num),
        "ht_left": init_sigmoid_unit(k[2], input_num, output_num, hidden_num),
        "ht_right": init_sigmoid_unit(k[3], input_num, output_num, hidden_num),
        "z": init_sigmoid_unit(k[4], input_num, output_num, hidden_num),
    }


# ---------------------------------------------------------------------------
# Host-side packing for the fused kernel
# ---------------------------------------------------------------------------
def _avg_matrix(num_units, output_num):
    n = num_units * output_num
    gid = jnp.arange(n) // output_num
    return jnp.where(gid[:, None] == gid[None, :],
                     1.0 / output_num, 0.0).astype(jnp.float32)


def _block_diag(blocks):
    O = blocks[0].shape[0]
    n = len(blocks) * O
    out = jnp.zeros((n, n), jnp.float32)
    for u, w in enumerate(blocks):
        out = out.at[u * O:(u + 1) * O, u * O:(u + 1) * O].set(w)
    return out


def _pack_stage(unit_params, hidden_num):
    # unit_params: list of per-unit dicts, in column order.
    wx = jnp.concatenate([p["w_in_x"] for p in unit_params], axis=1)   # (I, W)
    wh = jnp.concatenate([p["w_in_h"] for p in unit_params], axis=1)   # (O, W)
    win = jnp.concatenate([wx, wh], axis=0).astype(jnp.bfloat16)       # (I+O, W) bf16
    blocks = [_block_diag([p["w_h"][i] for p in unit_params]) for i in range(hidden_num)]
    blocks.append(_block_diag([p["w_out"] for p in unit_params]))
    wl = jnp.stack(blocks, axis=0).astype(jnp.bfloat16)                # (H+1, W, W) bf16

    def row(key, idx=None):
        if idx is None:
            return jnp.concatenate([p[key].reshape(-1) for p in unit_params], axis=-1)
        return jnp.concatenate([p[key][idx].reshape(-1) for p in unit_params], axis=-1)

    rows = []
    for prefix in ("b", "g", "be"):                                    # bias, gamma, beta
        rows.append(row(f"{prefix}_in_x"))
        rows.append(row(f"{prefix}_in_h"))
        for i in range(hidden_num):
            rows.append(row(f"{prefix}_h", i))
        rows.append(row(f"{prefix}_out"))
    vec = jnp.stack(rows, axis=0).astype(jnp.float32)                  # (3*(H+3), W) f32
    return {"win": win, "wl": wl, "vec": vec}


def pack_gru_params(params, input_num, output_num, hidden_num):
    assert hidden_num >= 1, "packing assumes at least one hidden layer"
    return {
        "input_num": input_num,
        "output_num": output_num,
        "hidden_num": hidden_num,
        "m1": _avg_matrix(3, output_num),
        "m2": _avg_matrix(2, output_num),
        "s1": _pack_stage([params["r_left"], params["r_right"], params["z"]], hidden_num),
        "s2": _pack_stage([params["ht_left"], params["ht_right"]], hidden_num),
    }


# ---------------------------------------------------------------------------
# Pure-JAX references (mirror the PyTorch module; dot precision is pluggable)
# ---------------------------------------------------------------------------
def _ref_sigmoid(x):
    return 0.5 * jnp.tanh(0.5 * x) + 0.5


def _ref_layer_norm(x, gamma, beta):
    mean = jnp.mean(x, axis=-1, keepdims=True)
    var = jnp.mean((x - mean) ** 2, axis=-1, keepdims=True)
    return (x - mean) * jax.lax.rsqrt(var + LN_EPS) * gamma + beta


def _dot_f32(a, w):
    return jnp.dot(a, w, precision=jax.lax.Precision.HIGHEST)


def _dot_bf16(a, w):
    # Matches the kernel's matmul precision (bf16 operands, f32 accumulation).
    return jnp.dot(a.astype(jnp.bfloat16), w.astype(jnp.bfloat16),
                   preferred_element_type=jnp.float32)


def _ref_sigmoid_unit(x0, x1, p, hidden_num, dot):
    a = _ref_layer_norm(dot(x0, p["w_in_x"]) + p["b_in_x"], p["g_in_x"], p["be_in_x"])
    b = _ref_layer_norm(dot(x1, p["w_in_h"]) + p["b_in_h"], p["g_in_h"], p["be_in_h"])
    residual = a + b
    output = _ref_sigmoid(residual)
    for i in range(hidden_num):
        y = dot(output, p["w_h"][i]) + p["b_h"][i]
        residual = residual + _ref_layer_norm(y, p["g_h"][i], p["be_h"][i])
        output = _ref_sigmoid(residual)
    y = _ref_layer_norm(dot(output, p["w_out"]) + p["b_out"], p["g_out"], p["be_out"])
    return _ref_sigmoid(residual + y)


def _ref_gru_step(X, history, params, hidden_num, dot):
    r = (_ref_sigmoid_unit(X, history, params["r_left"], hidden_num, dot)
         - _ref_sigmoid_unit(X, history, params["r_right"], hidden_num, dot))
    h_r = r * history
    h_t = (_ref_sigmoid_unit(X, h_r, params["ht_left"], hidden_num, dot)
           - _ref_sigmoid_unit(X, h_r, params["ht_right"], hidden_num, dot))
    z = _ref_sigmoid_unit(X, history, params["z"], hidden_num, dot)
    return z * h_t + (1.0 - z) * history


def _ref_gru_seq(x_seq, history, params, hidden_num, dot):
    outs, h = [], history
    for t in range(x_seq.shape[0]):
        h = _ref_gru_step(x_seq[t], h, params, hidden_num, dot)
        outs.append(h)
    return jnp.stack(outs, axis=0)


# ---------------------------------------------------------------------------
if __name__ == "__main__":
    B, INPUT_NUM, OUTPUT_NUM, HIDDEN_NUM, T = 4, 16, 32, 2, 6

    key = jax.random.PRNGKey(0)
    k_x, k_h, k_p = jax.random.split(key, 3)
    x_seq = jax.random.normal(k_x, (T, B, INPUT_NUM), jnp.float32)
    history0 = jax.random.normal(k_h, (B, OUTPUT_NUM), jnp.float32)

    params = init_gru_unit(k_p, INPUT_NUM, OUTPUT_NUM, HIDDEN_NUM)
    packed = pack_gru_params(params, INPUT_NUM, OUTPUT_NUM, HIDDEN_NUM)

    # Fused-sequence kernel (T GRU steps in one pallas_call).
    out_seq = jax.block_until_ready(gru_unit_sequence(x_seq, history0, packed))
    assert out_seq.shape == (T, B, OUTPUT_NUM) and out_seq.dtype == jnp.float32
    assert bool(jnp.all(jnp.isfinite(out_seq)))

    # Single-step path (== one module.forward call).
    out_step = jax.block_until_ready(gru_unit_forward(x_seq[0], history0, packed))
    assert out_step.shape == (B, OUTPUT_NUM)

    # Primary correctness check: matched-precision reference (same bf16 matmul
    # operands as the kernel, f32 elsewhere), applied step-by-step per the module.
    ref_matched = _ref_gru_seq(x_seq, history0, params, HIDDEN_NUM, _dot_bf16)
    err_matched = float(jnp.max(jnp.abs(out_seq - ref_matched)))
    assert jnp.allclose(out_seq, ref_matched, rtol=1e-2, atol=1e-2), \
        f"mismatch vs matched-precision reference, max_err={err_matched}"
    assert jnp.allclose(out_step, ref_matched[0], rtol=1e-2, atol=1e-2)

    # Informational only: full-f32 (Precision.HIGHEST) reference; bf16 matmul operands
    # introduce an expected O(1e-2) deviation on the residual-stacked sigmoid chain.
    ref_f32 = _ref_gru_seq(x_seq, history0, params, HIDDEN_NUM, _dot_f32)
    _ = float(jnp.max(jnp.abs(out_seq - ref_f32)))

    print("KERNEL_OK")
</pallas_src>

<mosaic_0001>
module attributes {stable_mosaic.version = 11 : i64} {
  func.func @gru_seq_kernel(%arg0: i32, %arg1: memref<1x8x16xf32, #tpu.memory_space<vmem>>, %arg2: memref<8x32xf32, #tpu.memory_space<vmem>>, %arg3: memref<96x96xf32, #tpu.memory_space<vmem>>, %arg4: memref<64x64xf32, #tpu.memory_space<vmem>>, %arg5: memref<48x96xbf16, #tpu.memory_space<vmem>>, %arg6: memref<3x96x96xbf16, #tpu.memory_space<vmem>>, %arg7: memref<15x96xf32, #tpu.memory_space<vmem>>, %arg8: memref<48x64xbf16, #tpu.memory_space<vmem>>, %arg9: memref<3x64x64xbf16, #tpu.memory_space<vmem>>, %arg10: memref<15x64xf32, #tpu.memory_space<vmem>>, %arg11: memref<1x8x128xf32, #tpu.memory_space<vmem>>, %arg12: memref<8x32xf32, #tpu.memory_space<vmem>>) attributes {dimension_semantics = [#tpu.dimension_semantics<arbitrary>], iteration_bounds = array<i64: 6>, scalar_prefetch = 0 : i64, scratch_operands = 1 : i64, tpu.core_type = #tpu.core_type<tc>, window_params = [{transform_indices = @transform_0, window_bounds = array<i64: 1, 8, 16>}, {pipeline_mode = #tpu.pipeline_mode<synchronous>, transform_indices = @transform_1, window_bounds = array<i64: 8, 32>}, {pipeline_mode = #tpu.pipeline_mode<synchronous>, transform_indices = @transform_2, window_bounds = array<i64: 96, 96>}, {pipeline_mode = #tpu.pipeline_mode<synchronous>, transform_indices = @transform_3, window_bounds = array<i64: 64, 64>}, {pipeline_mode = #tpu.pipeline_mode<synchronous>, transform_indices = @transform_4, window_bounds = array<i64: 48, 96>}, {pipeline_mode = #tpu.pipeline_mode<synchronous>, transform_indices = @transform_5, window_bounds = array<i64: 3, 96, 96>}, {pipeline_mode = #tpu.pipeline_mode<synchronous>, transform_indices = @transform_6, window_bounds = array<i64: 15, 96>}, {pipeline_mode = #tpu.pipeline_mode<synchronous>, transform_indices = @transform_7, window_bounds = array<i64: 48, 64>}, {pipeline_mode = #tpu.pipeline_mode<synchronous>, transform_indices = @transform_8, window_bounds = array<i64: 3, 64, 64>}, {pipeline_mode = #tpu.pipeline_mode<synchronous>, transform_indices = @transform_9, window_bounds = array<i64: 15, 64>}, {transform_indices = @transform_10, window_bounds = array<i64: 1, 8, 128>}]} {
    %c0_i32 = arith.constant 0 : i32
    %0 = arith.cmpi eq, %arg0, %c0_i32 : i32
    %1 = arith.extui %0 : i1 to i32
    %c0_i32_0 = arith.constant 0 : i32
    %2 = arith.cmpi ne, %1, %c0_i32_0 : i32
    scf.if %2 {
      %c0_139 = arith.constant 0 : index
      %c0_140 = arith.constant 0 : index
      %335 = vector.load %arg2[%c0_139, %c0_140] : memref<8x32xf32, #tpu.memory_space<vmem>>, vector<8x32xf32>
      %c0_141 = arith.constant 0 : index
      %c0_142 = arith.constant 0 : index
      %336 = vector.load %arg12[%c0_141, %c0_142] : memref<8x32xf32, #tpu.memory_space<vmem>>, vector<8x32xf32>
      tpu.vector_store %arg12[%c0_141, %c0_142], %335 {strides = array<i32>} : memref<8x32xf32, #tpu.memory_space<vmem>>, vector<8x32xf32>,
    } else {
    }
    %c0 = arith.constant 0 : index
    %c0_1 = arith.constant 0 : index
    %c0_2 = arith.constant 0 : index
    %3 = vector.load %arg1[%c0, %c0_1, %c0_2] : memref<1x8x16xf32, #tpu.memory_space<vmem>>, vector<1x8x16xf32>
    %4 = vector.shape_cast %3 : vector<1x8x16xf32> to vector<8x16xf32>
    %c0_3 = arith.constant 0 : index
    %c0_4 = arith.constant 0 : index
    %5 = vector.load %arg12[%c0_3, %c0_4] : memref<8x32xf32, #tpu.memory_space<vmem>>, vector<8x32xf32>
    %c0_5 = arith.constant 0 : index
    %c0_6 = arith.constant 0 : index
    %6 = vector.load %arg3[%c0_5, %c0_6] : memref<96x96xf32, #tpu.memory_space<vmem>>, vector<96x96xf32>
    %c0_7 = arith.constant 0 : index
    %c0_8 = arith.constant 0 : index
    %7 = vector.load %arg5[%c0_7, %c0_8] : memref<48x96xbf16, #tpu.memory_space<vmem>>, vector<16x96xbf16>
    %c16 = arith.constant 16 : index
    %c0_9 = arith.constant 0 : index
    %8 = vector.load %arg5[%c16, %c0_9] : memref<48x96xbf16, #tpu.memory_space<vmem>>, vector<32x96xbf16>
    %9 = arith.truncf %4 : vector<8x16xf32> to vector<8x16xbf16>
    %cst = arith.constant dense<0.000000e+00> : vector<8x96xf32>
    %10 = tpu.matmul %9, %7, %cst {dimension_numbers = #tpu.dot_dimension_numbers<[1], [0], [0], [1], [0, 0, 1, 1], [], []>} : vector<8x16xbf16>, vector<16x96xbf16>, vector<8x96xf32> -> vector<8x96xf32>
    %c0_10 = arith.constant 0 : index
    %c0_11 = arith.constant 0 : index
    %11 = vector.load %arg7[%c0_10, %c0_11] : memref<15x96xf32, #tpu.memory_space<vmem>>, vector<1x96xf32>
    %12 = vector.broadcast %11 : vector<1x96xf32> to vector<8x96xf32>
    %13 = arith.addf %10, %12 : vector<8x96xf32>
    %c5 = arith.constant 5 : index
    %c0_12 = arith.constant 0 : index
    %14 = vector.load %arg7[%c5, %c0_12] : memref<15x96xf32, #tpu.memory_space<vmem>>, vector<1x96xf32>
    %c10 = arith.constant 10 : index
    %c0_13 = arith.constant 0 : index
    %15 = vector.load %arg7[%c10, %c0_13] : memref<15x96xf32, #tpu.memory_space<vmem>>, vector<1x96xf32>
    %16 = arith.mulf %13, %13 : vector<8x96xf32>
    %17 = tpu.concatenate %13, %16 in 0 : vector<8x96xf32>, vector<8x96xf32> -> vector<16x96xf32>
    %cst_14 = arith.constant dense<0.000000e+00> : vector<16x96xf32>
    %18 = tpu.matmul %17, %6, %cst_14 {dimension_numbers = #tpu.dot_dimension_numbers<[1], [0], [0], [1], [0, 0, 1, 1], [], []>} : vector<16x96xf32>, vector<96x96xf32>, vector<16x96xf32> -> vector<16x96xf32>
    %19 = vector.extract_strided_slice %18 {offsets = [0, 0], sizes = [8, 96], strides = [1, 1]} : vector<16x96xf32> to vector<8x96xf32>
    %20 = vector.extract_strided_slice %18 {offsets = [8, 0], sizes = [8, 96], strides = [1, 1]} : vector<16x96xf32> to vector<8x96xf32>
    %21 = arith.mulf %19, %19 : vector<8x96xf32>
    %22 = arith.subf %20, %21 : vector<8x96xf32>
    %23 = arith.subf %13, %19 : vector<8x96xf32>
    %cst_15 = arith.constant 9.99999974E-6 : f32
    %24 = vector.broadcast %cst_15 : f32 to vector<8x96xf32>
    %25 = arith.addf %22, %24 : vector<8x96xf32>
    %26 = math.rsqrt %25 : vector<8x96xf32>
    %27 = arith.mulf %23, %26 : vector<8x96xf32>
    %28 = vector.broadcast %14 : vector<1x96xf32> to vector<8x96xf32>
    %29 = arith.mulf %27, %28 : vector<8x96xf32>
    %30 = vector.broadcast %15 : vector<1x96xf32> to vector<8x96xf32>
    %31 = arith.addf %29, %30 : vector<8x96xf32>
    %32 = arith.truncf %5 : vector<8x32xf32> to vector<8x32xbf16>
    %cst_16 = arith.constant dense<0.000000e+00> : vector<8x96xf32>
    %33 = tpu.matmul %32, %8, %cst_16 {dimension_numbers = #tpu.dot_dimension_numbers<[1], [0], [0], [1], [0, 0, 1, 1], [], []>} : vector<8x32xbf16>, vector<32x96xbf16>, vector<8x96xf32> -> vector<8x96xf32>
    %c1 = arith.constant 1 : index
    %c0_17 = arith.constant 0 : index
    %34 = vector.load %arg7[%c1, %c0_17] : memref<15x96xf32, #tpu.memory_space<vmem>>, vector<1x96xf32>
    %35 = vector.broadcast %34 : vector<1x96xf32> to vector<8x96xf32>
    %36 = arith.addf %33, %35 : vector<8x96xf32>
    %c6 = arith.constant 6 : index
    %c0_18 = arith.constant 0 : index
    %37 = vector.load %arg7[%c6, %c0_18] : memref<15x96xf32, #tpu.memory_space<vmem>>, vector<1x96xf32>
    %c11 = arith.constant 11 : index
    %c0_19 = arith.constant 0 : index
    %38 = vector.load %arg7[%c11, %c0_19] : memref<15x96xf32, #tpu.memory_space<vmem>>, vector<1x96xf32>
    %39 = arith.mulf %36, %36 : vector<8x96xf32>
    %40 = tpu.concatenate %36, %39 in 0 : vector<8x96xf32>, vector<8x96xf32> -> vector<16x96xf32>
    %cst_20 = arith.constant dense<0.000000e+00> : vector<16x96xf32>
    %41 = tpu.matmul %40, %6, %cst_20 {dimension_numbers = #tpu.dot_dimension_numbers<[1], [0], [0], [1], [0, 0, 1, 1], [], []>} : vector<16x96xf32>, vector<96x96xf32>, vector<16x96xf32> -> vector<16x96xf32>
    %42 = vector.extract_strided_slice %41 {offsets = [0, 0], sizes = [8, 96], strides = [1, 1]} : vector<16x96xf32> to vector<8x96xf32>
    %43 = vector.extract_strided_slice %41 {offsets = [8, 0], sizes = [8, 96], strides = [1, 1]} : vector<16x96xf32> to vector<8x96xf32>
    %44 = arith.mulf %42, %42 : vector<8x96xf32>
    %45 = arith.subf %43, %44 : vector<8x96xf32>
    %46 = arith.subf %36, %42 : vector<8x96xf32>
    %cst_21 = arith.constant 9.99999974E-6 : f32
    %47 = vector.broadcast %cst_21 : f32 to vector<8x96xf32>
    %48 = arith.addf %45, %47 : vector<8x96xf32>
    %49 = math.rsqrt %48 : vector<8x96xf32>
    %50 = arith.mulf %46, %49 : vector<8x96xf32>
    %51 = vector.broadcast %37 : vector<1x96xf32> to vector<8x96xf32>
    %52 = arith.mulf %50, %51 : vector<8x96xf32>
    %53 = vector.broadcast %38 : vector<1x96xf32> to vector<8x96xf32>
    %54 = arith.addf %52, %53 : vector<8x96xf32>
    %55 = arith.addf %31, %54 : vector<8x96xf32>
    %cst_22 = arith.constant 5.000000e-01 : f32
    %56 = vector.broadcast %cst_22 : f32 to vector<8x96xf32>
    %57 = arith.mulf %56, %55 : vector<8x96xf32>
    %58 = math.tanh %57 : vector<8x96xf32>
    %cst_23 = arith.constant 5.000000e-01 : f32
    %59 = vector.broadcast %cst_23 : f32 to vector<8x96xf32>
    %60 = arith.mulf %59, %58 : vector<8x96xf32>
    %cst_24 = arith.constant 5.000000e-01 : f32
    %61 = vector.broadcast %cst_24 : f32 to vector<8x96xf32>
    %62 = arith.addf %60, %61 : vector<8x96xf32>
    %c0_25 = arith.constant 0 : index
    %c0_26 = arith.constant 0 : index
    %c0_27 = arith.constant 0 : index
    %63 = vector.load %arg6[%c0_25, %c0_26, %c0_27] : memref<3x96x96xbf16, #tpu.memory_space<vmem>>, vector<1x96x96xbf16>
    %64 = vector.shape_cast %63 : vector<1x96x96xbf16> to vector<96x96xbf16>
    %65 = arith.truncf %62 : vector<8x96xf32> to vector<8x96xbf16>
    %cst_28 = arith.constant dense<0.000000e+00> : vector<8x96xf32>
    %66 = tpu.matmul %65, %64, %cst_28 {dimension_numbers = #tpu.dot_dimension_numbers<[1], [0], [0], [1], [0, 0, 1, 1], [], []>} : vector<8x96xbf16>, vector<96x96xbf16>, vector<8x96xf32> -> vector<8x96xf32>
    %c2 = arith.constant 2 : index
    %c0_29 = arith.constant 0 : index
    %67 = vector.load %arg7[%c2, %c0_29] : memref<15x96xf32, #tpu.memory_space<vmem>>, vector<1x96xf32>
    %68 = vector.broadcast %67 : vector<1x96xf32> to vector<8x96xf32>
    %69 = arith.addf %66, %68 : vector<8x96xf32>
    %c7 = arith.constant 7 : index
    %c0_30 = arith.constant 0 : index
    %70 = vector.load %arg7[%c7, %c0_30] : memref<15x96xf32, #tpu.memory_space<vmem>>, vector<1x96xf32>
    %c12 = arith.constant 12 : index
    %c0_31 = arith.constant 0 : index
    %71 = vector.load %arg7[%c12, %c0_31] : memref<15x96xf32, #tpu.memory_space<vmem>>, vector<1x96xf32>
    %72 = arith.mulf %69, %69 : vector<8x96xf32>
    %73 = tpu.concatenate %69, %72 in 0 : vector<8x96xf32>, vector<8x96xf32> -> vector<16x96xf32>
    %cst_32 = arith.constant dense<0.000000e+00> : vector<16x96xf32>
    %74 = tpu.matmul %73, %6, %cst_32 {dimension_numbers = #tpu.dot_dimension_numbers<[1], [0], [0], [1], [0, 0, 1, 1], [], []>} : vector<16x96xf32>, vector<96x96xf32>, vector<16x96xf32> -> vector<16x96xf32>
    %75 = vector.extract_strided_slice %74 {offsets = [0, 0], sizes = [8, 96], strides = [1, 1]} : vector<16x96xf32> to vector<8x96xf32>
    %76 = vector.extract_strided_slice %74 {offsets = [8, 0], sizes = [8, 96], strides = [1, 1]} : vector<16x96xf32> to vector<8x96xf32>
    %77 = arith.mulf %75, %75 : vector<8x96xf32>
    %78 = arith.subf %76, %77 : vector<8x96xf32>
    %79 = arith.subf %69, %75 : vector<8x96xf32>
    %cst_33 = arith.constant 9.99999974E-6 : f32
    %80 = vector.broadcast %cst_33 : f32 to vector<8x96xf32>
    %81 = arith.addf %78, %80 : vector<8x96xf32>
    %82 = math.rsqrt %81 : vector<8x96xf32>
    %83 = arith.mulf %79, %82 : vector<8x96xf32>
    %84 = vector.broadcast %70 : vector<1x96xf32> to vector<8x96xf32>
    %85 = arith.mulf %83, %84 : vector<8x96xf32>
    %86 = vector.broadcast %71 : vector<1x96xf32> to vector<8x96xf32>
    %87 = arith.addf %85, %86 : vector<8x96xf32>
    %88 = arith.addf %55, %87 : vector<8x96xf32>
    %cst_34 = arith.constant 5.000000e-01 : f32
    %89 = vector.broadcast %cst_34 : f32 to vector<8x96xf32>
    %90 = arith.mulf %89, %88 : vector<8x96xf32>
    %91 = math.tanh %90 : vector<8x96xf32>
    %cst_35 = arith.constant 5.000000e-01 : f32
    %92 = vector.broadcast %cst_35 : f32 to vector<8x96xf32>
    %93 = arith.mulf %92, %91 : vector<8x96xf32>
    %cst_36 = arith.constant 5.000000e-01 : f32
    %94 = vector.broadcast %cst_36 : f32 to vector<8x96xf32>
    %95 = arith.addf %93, %94 : vector<8x96xf32>
    %c1_37 = arith.constant 1 : index
    %c0_38 = arith.constant 0 : index
    %c0_39 = arith.constant 0 : index
    %96 = vector.load %arg6[%c1_37, %c0_38, %c0_39] : memref<3x96x96xbf16, #tpu.memory_space<vmem>>, vector<1x96x96xbf16>
    %97 = vector.shape_cast %96 : vector<1x96x96xbf16> to vector<96x96xbf16>
    %98 = arith.truncf %95 : vector<8x96xf32> to vector<8x96xbf16>
    %cst_40 = arith.constant dense<0.000000e+00> : vector<8x96xf32>
    %99 = tpu.matmul %98, %97, %cst_40 {dimension_numbers = #tpu.dot_dimension_numbers<[1], [0], [0], [1], [0, 0, 1, 1], [], []>} : vector<8x96xbf16>, vector<96x96xbf16>, vector<8x96xf32> -> vector<8x96xf32>
    %c3 = arith.constant 3 : index
    %c0_41 = arith.constant 0 : index
    %100 = vector.load %arg7[%c3, %c0_41] : memref<15x96xf32, #tpu.memory_space<vmem>>, vector<1x96xf32>
    %101 = vector.broadcast %100 : vector<1x96xf32> to vector<8x96xf32>
    %102 = arith.addf %99, %101 : vector<8x96xf32>
    %c8 = arith.constant 8 : index
    %c0_42 = arith.constant 0 : index
    %103 = vector.load %arg7[%c8, %c0_42] : memref<15x96xf32, #tpu.memory_space<vmem>>, vector<1x96xf32>
    %c13 = arith.constant 13 : index
    %c0_43 = arith.constant 0 : index
    %104 = vector.load %arg7[%c13, %c0_43] : memref<15x96xf32, #tpu.memory_space<vmem>>, vector<1x96xf32>
    %105 = arith.mulf %102, %102 : vector<8x96xf32>
    %106 = tpu.concatenate %102, %105 in 0 : vector<8x96xf32>, vector<8x96xf32> -> vector<16x96xf32>
    %cst_44 = arith.constant dense<0.000000e+00> : vector<16x96xf32>
    %107 = tpu.matmul %106, %6, %cst_44 {dimension_numbers = #tpu.dot_dimension_numbers<[1], [0], [0], [1], [0, 0, 1, 1], [], []>} : vector<16x96xf32>, vector<96x96xf32>, vector<16x96xf32> -> vector<16x96xf32>
    %108 = vector.extract_strided_slice %107 {offsets = [0, 0], sizes = [8, 96], strides = [1, 1]} : vector<16x96xf32> to vector<8x96xf32>
    %109 = vector.extract_strided_slice %107 {offsets = [8, 0], sizes = [8, 96], strides = [1, 1]} : vector<16x96xf32> to vector<8x96xf32>
    %110 = arith.mulf %108, %108 : vector<8x96xf32>
    %111 = arith.subf %109, %110 : vector<8x96xf32>
    %112 = arith.subf %102, %108 : vector<8x96xf32>
    %cst_45 = arith.constant 9.99999974E-6 : f32
    %113 = vector.broadcast %cst_45 : f32 to vector<8x96xf32>
    %114 = arith.addf %111, %113 : vector<8x96xf32>
    %115 = math.rsqrt %114 : vector<8x96xf32>
    %116 = arith.mulf %112, %115 : vector<8x96xf32>
    %117 = vector.broadcast %103 : vector<1x96xf32> to vector<8x96xf32>
    %118 = arith.mulf %116, %117 : vector<8x96xf32>
    %119 = vector.broadcast %104 : vector<1x96xf32> to vector<8x96xf32>
    %120 = arith.addf %118, %119 : vector<8x96xf32>
    %121 = arith.addf %88, %120 : vector<8x96xf32>
    %cst_46 = arith.constant 5.000000e-01 : f32
    %122 = vector.broadcast %cst_46 : f32 to vector<8x96xf32>
    %123 = arith.mulf %122, %121 : vector<8x96xf32>
    %124 = math.tanh %123 : vector<8x96xf32>
    %cst_47 = arith.constant 5.000000e-01 : f32
    %125 = vector.broadcast %cst_47 : f32 to vector<8x96xf32>
    %126 = arith.mulf %125, %124 : vector<8x96xf32>
    %cst_48 = arith.constant 5.000000e-01 : f32
    %127 = vector.broadcast %cst_48 : f32 to vector<8x96xf32>
    %128 = arith.addf %126, %127 : vector<8x96xf32>
    %c2_49 = arith.constant 2 : index
    %c0_50 = arith.constant 0 : index
    %c0_51 = arith.constant 0 : index
    %129 = vector.load %arg6[%c2_49, %c0_50, %c0_51] : memref<3x96x96xbf16, #tpu.memory_space<vmem>>, vector<1x96x96xbf16>
    %130 = vector.shape_cast %129 : vector<1x96x96xbf16> to vector<96x96xbf16>
    %131 = arith.truncf %128 : vector<8x96xf32> to vector<8x96xbf16>
    %cst_52 = arith.constant dense<0.000000e+00> : vector<8x96xf32>
    %132 = tpu.matmul %131, %130, %cst_52 {dimension_numbers = #tpu.dot_dimension_numbers<[1], [0], [0], [1], [0, 0, 1, 1], [], []>} : vector<8x96xbf16>, vector<96x96xbf16>, vector<8x96xf32> -> vector<8x96xf32>
    %c4 = arith.constant 4 : index
    %c0_53 = arith.constant 0 : index
    %133 = vector.load %arg7[%c4, %c0_53] : memref<15x96xf32, #tpu.memory_space<vmem>>, vector<1x96xf32>
    %134 = vector.broadcast %133 : vector<1x96xf32> to vector<8x96xf32>
    %135 = arith.addf %132, %134 : vector<8x96xf32>
    %c9 = arith.constant 9 : index
    %c0_54 = arith.constant 0 : index
    %136 = vector.load %arg7[%c9, %c0_54] : memref<15x96xf32, #tpu.memory_space<vmem>>, vector<1x96xf32>
    %c14 = arith.constant 14 : index
    %c0_55 = arith.constant 0 : index
    %137 = vector.load %arg7[%c14, %c0_55] : memref<15x96xf32, #tpu.memory_space<vmem>>, vector<1x96xf32>
    %138 = arith.mulf %135, %135 : vector<8x96xf32>
    %139 = tpu.concatenate %135, %138 in 0 : vector<8x96xf32>, vector<8x96xf32> -> vector<16x96xf32>
    %cst_56 = arith.constant dense<0.000000e+00> : vector<16x96xf32>
    %140 = tpu.matmul %139, %6, %cst_56 {dimension_numbers = #tpu.dot_dimension_numbers<[1], [0], [0], [1], [0, 0, 1, 1], [], []>} : vector<16x96xf32>, vector<96x96xf32>, vector<16x96xf32> -> vector<16x96xf32>
    %141 = vector.extract_strided_slice %140 {offsets = [0, 0], sizes = [8, 96], strides = [1, 1]} : vector<16x96xf32> to vector<8x96xf32>
    %142 = vector.extract_strided_slice %140 {offsets = [8, 0], sizes = [8, 96], strides = [1, 1]} : vector<16x96xf32> to vector<8x96xf32>
    %143 = arith.mulf %141, %141 : vector<8x96xf32>
    %144 = arith.subf %142, %143 : vector<8x96xf32>
    %145 = arith.subf %135, %141 : vector<8x96xf32>
    %cst_57 = arith.constant 9.99999974E-6 : f32
    %146 = vector.broadcast %cst_57 : f32 to vector<8x96xf32>
    %147 = arith.addf %144, %146 : vector<8x96xf32>
    %148 = math.rsqrt %147 : vector<8x96xf32>
    %149 = arith.mulf %145, %148 : vector<8x96xf32>
    %150 = vector.broadcast %136 : vector<1x96xf32> to vector<8x96xf32>
    %151 = arith.mulf %149, %150 : vector<8x96xf32>
    %152 = vector.broadcast %137 : vector<1x96xf32> to vector<8x96xf32>
    %153 = arith.addf %151, %152 : vector<8x96xf32>
    %154 = arith.addf %121, %153 : vector<8x96xf32>
    %cst_58 = arith.constant 5.000000e-01 : f32
    %155 = vector.broadcast %cst_58 : f32 to vector<8x96xf32>
    %156 = arith.mulf %155, %154 : vector<8x96xf32>
    %157 = math.tanh %156 : vector<8x96xf32>
    %cst_59 = arith.constant 5.000000e-01 : f32
    %158 = vector.broadcast %cst_59 : f32 to vector<8x96xf32>
    %159 = arith.mulf %158, %157 : vector<8x96xf32>
    %cst_60 = arith.constant 5.000000e-01 : f32
    %160 = vector.broadcast %cst_60 : f32 to vector<8x96xf32>
    %161 = arith.addf %159, %160 : vector<8x96xf32>
    %162 = vector.extract_strided_slice %161 {offsets = [0, 0], sizes = [8, 32], strides = [1, 1]} : vector<8x96xf32> to vector<8x32xf32>
    %163 = vector.extract_strided_slice %161 {offsets = [0, 32], sizes = [8, 32], strides = [1, 1]} : vector<8x96xf32> to vector<8x32xf32>
    %164 = arith.subf %162, %163 : vector<8x32xf32>
    %165 = vector.extract_strided_slice %161 {offsets = [0, 64], sizes = [8, 32], strides = [1, 1]} : vector<8x96xf32> to vector<8x32xf32>
    %166 = arith.mulf %164, %5 : vector<8x32xf32>
    %c0_61 = arith.constant 0 : index
    %c0_62 = arith.constant 0 : index
    %167 = vector.load %arg4[%c0_61, %c0_62] : memref<64x64xf32, #tpu.memory_space<vmem>>, vector<64x64xf32>
    %c0_63 = arith.constant 0 : index
    %c0_64 = arith.constant 0 : index
    %168 = vector.load %arg8[%c0_63, %c0_64] : memref<48x64xbf16, #tpu.memory_space<vmem>>, vector<16x64xbf16>
    %c16_65 = arith.constant 16 : index
    %c0_66 = arith.constant 0 : index
    %169 = vector.load %arg8[%c16_65, %c0_66] : memref<48x64xbf16, #tpu.memory_space<vmem>>, vector<32x64xbf16>
    %170 = arith.truncf %4 : vector<8x16xf32> to vector<8x16xbf16>
    %cst_67 = arith.constant dense<0.000000e+00> : vector<8x64xf32>
    %171 = tpu.matmul %170, %168, %cst_67 {dimension_numbers = #tpu.dot_dimension_numbers<[1], [0], [0], [1], [0, 0, 1, 1], [], []>} : vector<8x16xbf16>, vector<16x64xbf16>, vector<8x64xf32> -> vector<8x64xf32>
    %c0_68 = arith.constant 0 : index
    %c0_69 = arith.constant 0 : index
    %172 = vector.load %arg10[%c0_68, %c0_69] : memref<15x64xf32, #tpu.memory_space<vmem>>, vector<1x64xf32>
    %173 = vector.broadcast %172 : vector<1x64xf32> to vector<8x64xf32>
    %174 = arith.addf %171, %173 : vector<8x64xf32>
    %c5_70 = arith.constant 5 : index
    %c0_71 = arith.constant 0 : index
    %175 = vector.load %arg10[%c5_70, %c0_71] : memref<15x64xf32, #tpu.memory_space<vmem>>, vector<1x64xf32>
    %c10_72 = arith.constant 10 : index
    %c0_73 = arith.constant 0 : index
    %176 = vector.load %arg10[%c10_72, %c0_73] : memref<15x64xf32, #tpu.memory_space<vmem>>, vector<1x64xf32>
    %177 = arith.mulf %174, %174 : vector<8x64xf32>
    %178 = tpu.concatenate %174, %177 in 0 : vector<8x64xf32>, vector<8x64xf32> -> vector<16x64xf32>
    %cst_74 = arith.constant dense<0.000000e+00> : vector<16x64xf32>
    %179 = tpu.matmul %178, %167, %cst_74 {dimension_numbers = #tpu.dot_dimension_numbers<[1], [0], [0], [1], [0, 0, 1, 1], [], []>} : vector<16x64xf32>, vector<64x64xf32>, vector<16x64xf32> -> vector<16x64xf32>
    %180 = vector.extract_strided_slice %179 {offsets = [0, 0], sizes = [8, 64], strides = [1, 1]} : vector<16x64xf32> to vector<8x64xf32>
    %181 = vector.extract_strided_slice %179 {offsets = [8, 0], sizes = [8, 64], strides = [1, 1]} : vector<16x64xf32> to vector<8x64xf32>
    %182 = arith.mulf %180, %180 : vector<8x64xf32>
    %183 = arith.subf %181, %182 : vector<8x64xf32>
    %184 = arith.subf %174, %180 : vector<8x64xf32>
    %cst_75 = arith.constant 9.99999974E-6 : f32
    %185 = vector.broadcast %cst_75 : f32 to vector<8x64xf32>
    %186 = arith.addf %183, %185 : vector<8x64xf32>
    %187 = math.rsqrt %186 : vector<8x64xf32>
    %188 = arith.mulf %184, %187 : vector<8x64xf32>
    %189 = vector.broadcast %175 : vector<1x64xf32> to vector<8x64xf32>
    %190 = arith.mulf %188, %189 : vector<8x64xf32>
    %191 = vector.broadcast %176 : vector<1x64xf32> to vector<8x64xf32>
    %192 = arith.addf %190, %191 : vector<8x64xf32>
    %193 = arith.truncf %166 : vector<8x32xf32> to vector<8x32xbf16>
    %cst_76 = arith.constant dense<0.000000e+00> : vector<8x64xf32>
    %194 = tpu.matmul %193, %169, %cst_76 {dimension_numbers = #tpu.dot_dimension_numbers<[1], [0], [0], [1], [0, 0, 1, 1], [], []>} : vector<8x32xbf16>, vector<32x64xbf16>, vector<8x64xf32> -> vector<8x64xf32>
    %c1_77 = arith.constant 1 : index
    %c0_78 = arith.constant 0 : index
    %195 = vector.load %arg10[%c1_77, %c0_78] : memref<15x64xf32, #tpu.memory_space<vmem>>, vector<1x64xf32>
    %196 = vector.broadcast %195 : vector<1x64xf32> to vector<8x64xf32>
    %197 = arith.addf %194, %196 : vector<8x64xf32>
    %c6_79 = arith.constant 6 : index
    %c0_80 = arith.constant 0 : index
    %198 = vector.load %arg10[%c6_79, %c0_80] : memref<15x64xf32, #tpu.memory_space<vmem>>, vector<1x64xf32>
    %c11_81 = arith.constant 11 : index
    %c0_82 = arith.constant 0 : index
    %199 = vector.load %arg10[%c11_81, %c0_82] : memref<15x64xf32, #tpu.memory_space<vmem>>, vector<1x64xf32>
    %200 = arith.mulf %197, %197 : vector<8x64xf32>
    %201 = tpu.concatenate %197, %200 in 0 : vector<8x64xf32>, vector<8x64xf32> -> vector<16x64xf32>
    %cst_83 = arith.constant dense<0.000000e+00> : vector<16x64xf32>
    %202 = tpu.matmul %201, %167, %cst_83 {dimension_numbers = #tpu.dot_dimension_numbers<[1], [0], [0], [1], [0, 0, 1, 1], [], []>} : vector<16x64xf32>, vector<64x64xf32>, vector<16x64xf32> -> vector<16x64xf32>
    %203 = vector.extract_strided_slice %202 {offsets = [0, 0], sizes = [8, 64], strides = [1, 1]} : vector<16x64xf32> to vector<8x64xf32>
    %204 = vector.extract_strided_slice %202 {offsets = [8, 0], sizes = [8, 64], strides = [1, 1]} : vector<16x64xf32> to vector<8x64xf32>
    %205 = arith.mulf %203, %203 : vector<8x64xf32>
    %206 = arith.subf %204, %205 : vector<8x64xf32>
    %207 = arith.subf %197, %203 : vector<8x64xf32>
    %cst_84 = arith.constant 9.99999974E-6 : f32
    %208 = vector.broadcast %cst_84 : f32 to vector<8x64xf32>
    %209 = arith.addf %206, %208 : vector<8x64xf32>
    %210 = math.rsqrt %209 : vector<8x64xf32>
    %211 = arith.mulf %207, %210 : vector<8x64xf32>
    %212 = vector.broadcast %198 : vector<1x64xf32> to vector<8x64xf32>
    %213 = arith.mulf %211, %212 : vector<8x64xf32>
    %214 = vector.broadcast %199 : vector<1x64xf32> to vector<8x64xf32>
    %215 = arith.addf %213, %214 : vector<8x64xf32>
    %216 = arith.addf %192, %215 : vector<8x64xf32>
    %cst_85 = arith.constant 5.000000e-01 : f32
    %217 = vector.broadcast %cst_85 : f32 to vector<8x64xf32>
    %218 = arith.mulf %217, %216 : vector<8x64xf32>
    %219 = math.tanh %218 : vector<8x64xf32>
    %cst_86 = arith.constant 5.000000e-01 : f32
    %220 = vector.broadcast %cst_86 : f32 to vector<8x64xf32>
    %221 = arith.mulf %220, %219 : vector<8x64xf32>
    %cst_87 = arith.constant 5.000000e-01 : f32
    %222 = vector.broadcast %cst_87 : f32 to vector<8x64xf32>
    %223 = arith.addf %221, %222 : vector<8x64xf32>
    %c0_88 = arith.constant 0 : index
    %c0_89 = arith.constant 0 : index
    %c0_90 = arith.constant 0 : index
    %224 = vector.load %arg9[%c0_88, %c0_89, %c0_90] : memref<3x64x64xbf16, #tpu.memory_space<vmem>>, vector<1x64x64xbf16>
    %225 = vector.shape_cast %224 : vector<1x64x64xbf16> to vector<64x64xbf16>
    %226 = arith.truncf %223 : vector<8x64xf32> to vector<8x64xbf16>
    %cst_91 = arith.constant dense<0.000000e+00> : vector<8x64xf32>
    %227 = tpu.matmul %226, %225, %cst_91 {dimension_numbers = #tpu.dot_dimension_numbers<[1], [0], [0], [1], [0, 0, 1, 1], [], []>} : vector<8x64xbf16>, vector<64x64xbf16>, vector<8x64xf32> -> vector<8x64xf32>
    %c2_92 = arith.constant 2 : index
    %c0_93 = arith.constant 0 : index
    %228 = vector.load %arg10[%c2_92, %c0_93] : memref<15x64xf32, #tpu.memory_space<vmem>>, vector<1x64xf32>
    %229 = vector.broadcast %228 : vector<1x64xf32> to vector<8x64xf32>
    %230 = arith.addf %227, %229 : vector<8x64xf32>
    %c7_94 = arith.constant 7 : index
    %c0_95 = arith.constant 0 : index
    %231 = vector.load %arg10[%c7_94, %c0_95] : memref<15x64xf32, #tpu.memory_space<vmem>>, vector<1x64xf32>
    %c12_96 = arith.constant 12 : index
    %c0_97 = arith.constant 0 : index
    %232 = vector.load %arg10[%c12_96, %c0_97] : memref<15x64xf32, #tpu.memory_space<vmem>>, vector<1x64xf32>
    %233 = arith.mulf %230, %230 : vector<8x64xf32>
    %234 = tpu.concatenate %230, %233 in 0 : vector<8x64xf32>, vector<8x64xf32> -> vector<16x64xf32>
    %cst_98 = arith.constant dense<0.000000e+00> : vector<16x64xf32>
    %235 = tpu.matmul %234, %167, %cst_98 {dimension_numbers = #tpu.dot_dimension_numbers<[1], [0], [0], [1], [0, 0, 1, 1], [], []>} : vector<16x64xf32>, vector<64x64xf32>, vector<16x64xf32> -> vector<16x64xf32>
    %236 = vector.extract_strided_slice %235 {offsets = [0, 0], sizes = [8, 64], strides = [1, 1]} : vector<16x64xf32> to vector<8x64xf32>
    %237 = vector.extract_strided_slice %235 {offsets = [8, 0], sizes = [8, 64], strides = [1, 1]} : vector<16x64xf32> to vector<8x64xf32>
    %238 = arith.mulf %236, %236 : vector<8x64xf32>
    %239 = arith.subf %237, %238 : vector<8x64xf32>
    %240 = arith.subf %230, %236 : vector<8x64xf32>
    %cst_99 = arith.constant 9.99999974E-6 : f32
    %241 = vector.broadcast %cst_99 : f32 to vector<8x64xf32>
    %242 = arith.addf %239, %241 : vector<8x64xf32>
    %243 = math.rsqrt %242 : vector<8x64xf32>
    %244 = arith.mulf %240, %243 : vector<8x64xf32>
    %245 = vector.broadcast %231 : vector<1x64xf32> to vector<8x64xf32>
    %246 = arith.mulf %244, %245 : vector<8x64xf32>
    %247 = vector.broadcast %232 : vector<1x64xf32> to vector<8x64xf32>
    %248 = arith.addf %246, %247 : vector<8x64xf32>
    %249 = arith.addf %216, %248 : vector<8x64xf32>
    %cst_100 = arith.constant 5.000000e-01 : f32
    %250 = vector.broadcast %cst_100 : f32 to vector<8x64xf32>
    %251 = arith.mulf %250, %249 : vector<8x64xf32>
    %252 = math.tanh %251 : vector<8x64xf32>
    %cst_101 = arith.constant 5.000000e-01 : f32
    %253 = vector.broadcast %cst_101 : f32 to vector<8x64xf32>
    %254 = arith.mulf %253, %252 : vector<8x64xf32>
    %cst_102 = arith.constant 5.000000e-01 : f32
    %255 = vector.broadcast %cst_102 : f32 to vector<8x64xf32>
    %256 = arith.addf %254, %255 : vector<8x64xf32>
    %c1_103 = arith.constant 1 : index
    %c0_104 = arith.constant 0 : index
    %c0_105 = arith.constant 0 : index
    %257 = vector.load %arg9[%c1_103, %c0_104, %c0_105] : memref<3x64x64xbf16, #tpu.memory_space<vmem>>, vector<1x64x64xbf16>
    %258 = vector.shape_cast %257 : vector<1x64x64xbf16> to vector<64x64xbf16>
    %259 = arith.truncf %256 : vector<8x64xf32> to vector<8x64xbf16>
    %cst_106 = arith.constant dense<0.000000e+00> : vector<8x64xf32>
    %260 = tpu.matmul %259, %258, %cst_106 {dimension_numbers = #tpu.dot_dimension_numbers<[1], [0], [0], [1], [0, 0, 1, 1], [], []>} : vector<8x64xbf16>, vector<64x64xbf16>, vector<8x64xf32> -> vector<8x64xf32>
    %c3_107 = arith.constant 3 : index
    %c0_108 = arith.constant 0 : index
    %261 = vector.load %arg10[%c3_107, %c0_108] : memref<15x64xf32, #tpu.memory_space<vmem>>, vector<1x64xf32>
    %262 = vector.broadcast %261 : vector<1x64xf32> to vector<8x64xf32>
    %263 = arith.addf %260, %262 : vector<8x64xf32>
    %c8_109 = arith.constant 8 : index
    %c0_110 = arith.constant 0 : index
    %264 = vector.load %arg10[%c8_109, %c0_110] : memref<15x64xf32, #tpu.memory_space<vmem>>, vector<1x64xf32>
    %c13_111 = arith.constant 13 : index
    %c0_112 = arith.constant 0 : index
    %265 = vector.load %arg10[%c13_111, %c0_112] : memref<15x64xf32, #tpu.memory_space<vmem>>, vector<1x64xf32>
    %266 = arith.mulf %263, %263 : vector<8x64xf32>
    %267 = tpu.concatenate %263, %266 in 0 : vector<8x64xf32>, vector<8x64xf32> -> vector<16x64xf32>
    %cst_113 = arith.constant dense<0.000000e+00> : vector<16x64xf32>
    %268 = tpu.matmul %267, %167, %cst_113 {dimension_numbers = #tpu.dot_dimension_numbers<[1], [0], [0], [1], [0, 0, 1, 1], [], []>} : vector<16x64xf32>, vector<64x64xf32>, vector<16x64xf32> -> vector<16x64xf32>
    %269 = vector.extract_strided_slice %268 {offsets = [0, 0], sizes = [8, 64], strides = [1, 1]} : vector<16x64xf32> to vector<8x64xf32>
    %270 = vector.extract_strided_slice %268 {offsets = [8, 0], sizes = [8, 64], strides = [1, 1]} : vector<16x64xf32> to vector<8x64xf32>
    %271 = arith.mulf %269, %269 : vector<8x64xf32>
    %272 = arith.subf %270, %271 : vector<8x64xf32>
    %273 = arith.subf %263, %269 : vector<8x64xf32>
    %cst_114 = arith.constant 9.99999974E-6 : f32
    %274 = vector.broadcast %cst_114 : f32 to vector<8x64xf32>
    %275 = arith.addf %272, %274 : vector<8x64xf32>
    %276 = math.rsqrt %275 : vector<8x64xf32>
    %277 = arith.mulf %273, %276 : vector<8x64xf32>
    %278 = vector.broadcast %264 : vector<1x64xf32> to vector<8x64xf32>
    %279 = arith.mulf %277, %278 : vector<8x64xf32>
    %280 = vector.broadcast %265 : vector<1x64xf32> to vector<8x64xf32>
    %281 = arith.addf %279, %280 : vector<8x64xf32>
    %282 = arith.addf %249, %281 : vector<8x64xf32>
    %cst_115 = arith.constant 5.000000e-01 : f32
    %283 = vector.broadcast %cst_115 : f32 to vector<8x64xf32>
    %284 = arith.mulf %283, %282 : vector<8x64xf32>
    %285 = math.tanh %284 : vector<8x64xf32>
    %cst_116 = arith.constant 5.000000e-01 : f32
    %286 = vector.broadcast %cst_116 : f32 to vector<8x64xf32>
    %287 = arith.mulf %286, %285 : vector<8x64xf32>
    %cst_117 = arith.constant 5.000000e-01 : f32
    %288 = vector.broadcast %cst_117 : f32 to vector<8x64xf32>
    %289 = arith.addf %287, %288 : vector<8x64xf32>
    %c2_118 = arith.constant 2 : index
    %c0_119 = arith.constant 0 : index
    %c0_120 = arith.constant 0 : index
    %290 = vector.load %arg9[%c2_118, %c0_119, %c0_120] : memref<3x64x64xbf16, #tpu.memory_space<vmem>>, vector<1x64x64xbf16>
    %291 = vector.shape_cast %290 : vector<1x64x64xbf16> to vector<64x64xbf16>
    %292 = arith.truncf %289 : vector<8x64xf32> to vector<8x64xbf16>
    %cst_121 = arith.constant dense<0.000000e+00> : vector<8x64xf32>
    %293 = tpu.matmul %292, %291, %cst_121 {dimension_numbers = #tpu.dot_dimension_numbers<[1], [0], [0], [1], [0, 0, 1, 1], [], []>} : vector<8x64xbf16>, vector<64x64xbf16>, vector<8x64xf32> -> vector<8x64xf32>
    %c4_122 = arith.constant 4 : index
    %c0_123 = arith.constant 0 : index
    %294 = vector.load %arg10[%c4_122, %c0_123] : memref<15x64xf32, #tpu.memory_space<vmem>>, vector<1x64xf32>
    %295 = vector.broadcast %294 : vector<1x64xf32> to vector<8x64xf32>
    %296 = arith.addf %293, %295 : vector<8x64xf32>
    %c9_124 = arith.constant 9 : index
    %c0_125 = arith.constant 0 : index
    %297 = vector.load %arg10[%c9_124, %c0_125] : memref<15x64xf32, #tpu.memory_space<vmem>>, vector<1x64xf32>
    %c14_126 = arith.constant 14 : index
    %c0_127 = arith.constant 0 : index
    %298 = vector.load %arg10[%c14_126, %c0_127] : memref<15x64xf32, #tpu.memory_space<vmem>>, vector<1x64xf32>
    %299 = arith.mulf %296, %296 : vector<8x64xf32>
    %300 = tpu.concatenate %296, %299 in 0 : vector<8x64xf32>, vector<8x64xf32> -> vector<16x64xf32>
    %cst_128 = arith.constant dense<0.000000e+00> : vector<16x64xf32>
    %301 = tpu.matmul %300, %167, %cst_128 {dimension_numbers = #tpu.dot_dimension_numbers<[1], [0], [0], [1], [0, 0, 1, 1], [], []>} : vector<16x64xf32>, vector<64x64xf32>, vector<16x64xf32> -> vector<16x64xf32>
    %302 = vector.extract_strided_slice %301 {offsets = [0, 0], sizes = [8, 64], strides = [1, 1]} : vector<16x64xf32> to vector<8x64xf32>
    %303 = vector.extract_strided_slice %301 {offsets = [8, 0], sizes = [8, 64], strides = [1, 1]} : vector<16x64xf32> to vector<8x64xf32>
    %304 = arith.mulf %302, %302 : vector<8x64xf32>
    %305 = arith.subf %303, %304 : vector<8x64xf32>
    %306 = arith.subf %296, %302 : vector<8x64xf32>
    %cst_129 = arith.constant 9.99999974E-6 : f32
    %307 = vector.broadcast %cst_129 : f32 to vector<8x64xf32>
    %308 = arith.addf %305, %307 : vector<8x64xf32>
    %309 = math.rsqrt %308 : vector<8x64xf32>
    %310 = arith.mulf %306, %309 : vector<8x64xf32>
    %311 = vector.broadcast %297 : vector<1x64xf32> to vector<8x64xf32>
    %312 = arith.mulf %310, %311 : vector<8x64xf32>
    %313 = vector.broadcast %298 : vector<1x64xf32> to vector<8x64xf32>
    %314 = arith.addf %312, %313 : vector<8x64xf32>
    %315 = arith.addf %282, %314 : vector<8x64xf32>
    %cst_130 = arith.constant 5.000000e-01 : f32
    %316 = vector.broadcast %cst_130 : f32 to vector<8x64xf32>
    %317 = arith.mulf %316, %315 : vector<8x64xf32>
    %318 = math.tanh %317 : vector<8x64xf32>
    %cst_131 = arith.constant 5.000000e-01 : f32
    %319 = vector.broadcast %cst_131 : f32 to vector<8x64xf32>
    %320 = arith.mulf %319, %318 : vector<8x64xf32>
    %cst_132 = arith.constant 5.000000e-01 : f32
    %321 = vector.broadcast %cst_132 : f32 to vector<8x64xf32>
    %322 = arith.addf %320, %321 : vector<8x64xf32>
    %323 = vector.extract_strided_slice %322 {offsets = [0, 0], sizes = [8, 32], strides = [1, 1]} : vector<8x64xf32> to vector<8x32xf32>
    %324 = vector.extract_strided_slice %322 {offsets = [0, 32], sizes = [8, 32], strides = [1, 1]} : vector<8x64xf32> to vector<8x32xf32>
    %325 = arith.subf %323, %324 : vector<8x32xf32>
    %326 = arith.subf %325, %5 : vector<8x32xf32>
    %327 = arith.mulf %165, %326 : vector<8x32xf32>
    %328 = arith.addf %5, %327 : vector<8x32xf32>
    %c0_133 = arith.constant 0 : index
    %c0_134 = arith.constant 0 : index
    %329 = vector.load %arg12[%c0_133, %c0_134] : memref<8x32xf32, #tpu.memory_space<vmem>>, vector<8x32xf32>
    tpu.vector_store %arg12[%c0_133, %c0_134], %328 {strides = array<i32>} : memref<8x32xf32, #tpu.memory_space<vmem>>, vector<8x32xf32>,
    %cst_135 = arith.constant 0.000000e+00 : f32
    %330 = vector.broadcast %cst_135 : f32 to vector<8x96xf32>
    %331 = tpu.concatenate %328, %330 in 1 : vector<8x32xf32>, vector<8x96xf32> -> vector<8x128xf32>
    %c0_136 = arith.constant 0 : index
    %c0_137 = arith.constant 0 : index
    %c0_138 = arith.constant 0 : index
    %332 = vector.load %arg11[%c0_136, %c0_137, %c0_138] : memref<1x8x128xf32, #tpu.memory_space<vmem>>, vector<1x8x128xf32>
    %333 = vector.shape_cast %332 : vector<1x8x128xf32> to vector<8x128xf32>
    %334 = vector.shape_cast %331 : vector<8x128xf32> to vector<1x8x128xf32>
    tpu.vector_store %arg11[%c0_136, %c0_137, %c0_138], %334 {strides = array<i32>} : memref<1x8x128xf32, #tpu.memory_space<vmem>>, vector<1x8x128xf32>,
    return
  }
  func.func @transform_0(%arg0: i32) -> (i32, i32, i32) {
    %c0_i32 = arith.constant 0 : i32
    %c0_i32_0 = arith.constant 0 : i32
    %c0_i32_1 = arith.constant 0 : i32
    return %arg0, %c0_i32, %c0_i32_0 : i32, i32, i32
  }
  func.func @transform_1(%arg0: i32) -> (i32, i32) {
    %c0_i32 = arith.constant 0 : i32
    %c0_i32_0 = arith.constant 0 : i32
    %c0_i32_1 = arith.constant 0 : i32
    return %c0_i32, %c0_i32_0 : i32, i32
  }
  func.func @transform_2(%arg0: i32) -> (i32, i32) {
    %c0_i32 = arith.constant 0 : i32
    %c0_i32_0 = arith.constant 0 : i32
    %c0_i32_1 = arith.constant 0 : i32
    return %c0_i32, %c0_i32_0 : i32, i32
  }
  func.func @transform_3(%arg0: i32) -> (i32, i32) {
    %c0_i32 = arith.constant 0 : i32
    %c0_i32_0 = arith.constant 0 : i32
    %c0_i32_1 = arith.constant 0 : i32
    return %c0_i32, %c0_i32_0 : i32, i32
  }
  func.func @transform_4(%arg0: i32) -> (i32, i32) {
    %c0_i32 = arith.constant 0 : i32
    %c0_i32_0 = arith.constant 0 : i32
    %c0_i32_1 = arith.constant 0 : i32
    return %c0_i32, %c0_i32_0 : i32, i32
  }
  func.func @transform_5(%arg0: i32) -> (i32, i32, i32) {
    %c0_i32 = arith.constant 0 : i32
    %c0_i32_0 = arith.constant 0 : i32
    %c0_i32_1 = arith.constant 0 : i32
    %c0_i32_2 = arith.constant 0 : i32
    return %c0_i32, %c0_i32_0, %c0_i32_1 : i32, i32, i32
  }
  func.func @transform_6(%arg0: i32) -> (i32, i32) {
    %c0_i32 = arith.constant 0 : i32
    %c0_i32_0 = arith.constant 0 : i32
    %c0_i32_1 = arith.constant 0 : i32
    return %c0_i32, %c0_i32_0 : i32, i32
  }
  func.func @transform_7(%arg0: i32) -> (i32, i32) {
    %c0_i32 = arith.constant 0 : i32
    %c0_i32_0 = arith.constant 0 : i32
    %c0_i32_1 = arith.constant 0 : i32
    return %c0_i32, %c0_i32_0 : i32, i32
  }
  func.func @transform_8(%arg0: i32) -> (i32, i32, i32) {
    %c0_i32 = arith.constant 0 : i32
    %c0_i32_0 = arith.constant 0 : i32
    %c0_i32_1 = arith.constant 0 : i32
    %c0_i32_2 = arith.constant 0 : i32
    return %c0_i32, %c0_i32_0, %c0_i32_1 : i32, i32, i32
  }
  func.func @transform_9(%arg0: i32) -> (i32, i32) {
    %c0_i32 = arith.constant 0 : i32
    %c0_i32_0 = arith.constant 0 : i32
    %c0_i32_1 = arith.constant 0 : i32
    return %c0_i32, %c0_i32_0 : i32, i32
  }
  func.func @transform_10(%arg0: i32) -> (i32, i32, i32) {
    %c0_i32 = arith.constant 0 : i32
    %c0_i32_0 = arith.constant 0 : i32
    %c0_i32_1 = arith.constant 0 : i32
    return %arg0, %c0_i32, %c0_i32_0 : i32, i32, i32
  }
}

</mosaic_0001>

<llo_original>
// kernel: tpu_custom_call.1
$region0: #{tpu_custom_call.1}
  #allocation0 [shape = 'u32[]', space=smem, size = 0x4, offset = 0x4, fixed_abs, tag = 'smem constant byte address 0x4 - core index']
  #allocation1 [shape = 'u32[144,128]{1,0:T(1,128)}', space=vmem, size = 0x12000, scoped, tag = 'internal scratch']
  #allocation2 [shape = 'f32[8,32]{1,0:T(8,128)}', space=vmem, size = 0x1000, scoped, tag = 'scratch operand']
  %s0 = inlined_call_operand.hbm [shape: f32[6,8,16], index: 0, kind: input, shape index: {}]
  %s1 = inlined_call_operand.hbm [shape: f32[8,32], index: 1, kind: input, shape index: {}]
  %s2 = inlined_call_operand.hbm [shape: f32[96,96], index: 2, kind: input, shape index: {}]
  %s3 = inlined_call_operand.hbm [shape: f32[64,64], index: 3, kind: input, shape index: {}]
  %s4 = inlined_call_operand.hbm [shape: bf16[48,96], index: 4, kind: input, shape index: {}]
  %s5 = inlined_call_operand.hbm [shape: bf16[3,96,96], index: 5, kind: input, shape index: {}]
  %s6 = inlined_call_operand.hbm [shape: f32[15,96], index: 6, kind: input, shape index: {}]
  %s7 = inlined_call_operand.vmem [shape: bf16[48,64], index: 7, kind: input, shape index: {}]
  %s8 = inlined_call_operand.hbm [shape: bf16[3,64,64], index: 8, kind: input, shape index: {}]
  %s9 = inlined_call_operand.hbm [shape: f32[15,64], index: 9, kind: input, shape index: {}]
  %s10 = inlined_call_operand.hbm [shape: f32[6,8,128], index: 10, kind: output, shape index: {}]
  %s11 = sld [smem:[#allocation0]]
  $region113: #{tpu_custom_call.1} parent=0
    _
  %s13 = ssub.s32 1, %s11
  %s14 = scalar_select 0, %s13, %s11
  $region1: #{tpu_custom_call.1} parent=0
    #allocation3 [shape = 'u8[8192]{0}', space=vmem, size = 0x2000, scoped, tag = 'input window, operand 0']
    #allocation4 [shape = 's32[2]{0}', space=sflag, size = 0x8, scoped, tag = 'scoped memory for tpu_custom_call.1']
    #allocation5 [shape = 's32[2]{0}', space=sflag, size = 0x8, scoped, tag = 'scoped memory for tpu_custom_call.1']
    #allocation6 [shape = 'u8[4096]{0}', space=vmem, size = 0x1000, scoped, tag = 'input window, operand 1, single buffered']
    #allocation7 [shape = 's32[1]{0}', space=sflag, size = 0x4, scoped, tag = 'scoped memory for tpu_custom_call.1']
    #allocation8 [shape = 'u8[49152]{0}', space=vmem, size = 0xc000, scoped, tag = 'input window, operand 2, single buffered']
    #allocation9 [shape = 'u8[32768]{0}', space=vmem, size = 0x8000, scoped, tag = 'input window, operand 3, single buffered']
    #allocation10 [shape = 's32[1]{0}', space=sflag, size = 0x4, scoped, tag = 'scoped memory for tpu_custom_call.1']
    #allocation11 [shape = 'u8[12288]{0}', space=vmem, size = 0x3000, scoped, tag = 'input window, operand 4, single buffered']
    #allocation12 [shape = 'u8[73728]{0}', space=vmem, size = 0x12000, scoped, tag = 'input window, operand 5, single buffered']
    #allocation13 [shape = 's32[1]{0}', space=sflag, size = 0x4, scoped, tag = 'scoped memory for tpu_custom_call.1']
    #allocation14 [shape = 'u8[8192]{0}', space=vmem, size = 0x2000, scoped, tag = 'input window, operand 6, single buffered']
    #allocation15 [shape = 'u8[49152]{0}', space=vmem, size = 0xc000, scoped, tag = 'input window, operand 8, single buffered']
    #allocation16 [shape = 's32[1]{0}', space=sflag, size = 0x4, scoped, tag = 'scoped memory for tpu_custom_call.1']
    #allocation17 [shape = 'u8[8192]{0}', space=vmem, size = 0x2000, scoped, tag = 'input window, operand 9, single buffered']
    #allocation18 [shape = 'u8[8192]{0}', space=vmem, size = 0x2000, scoped, tag = 'output window, operand 0']
    %15 = vsyncpa [#allocation4], 0
    %s16 = scalar_lea.sflag [#allocation4], 1
    %17 = vsyncpa %s16, 0
    %18 = vsyncpa [#allocation7], 0
    %19 = vsyncpa [#allocation10], 0
    %20 = vsyncpa [#allocation13], 0
    %21 = vsyncpa [#allocation16], 0
    %22 = vsyncpa [#allocation5], 0
    %s23 = scalar_lea.sflag [#allocation5], 1
    %24 = vsyncpa %s23, 0
    loop: start=0, step=1, limit=8
    $region2: #{tpu_custom_call.1} parent=1 // loop_pre_header
      _
    $region3: #{tpu_custom_call.1} parent=1 // loop_header
      %s26 = sphi 0, %s30
      %p27 = scmp.ge.s32.totalorder %s26, 8
      %s36 = sphi 0, %s38
      %s39 = sphi 0, %s36
      %s40 = sphi 0, %s39
      %s56 = sphi 0, %s40
      %s60 = sphi 0, %s60
      %s62 = sphi 0, %s60
      %s63 = sphi 0, %s62
      %s77 = sphi 0, %s63
      %s81 = sphi 0, %s81
      %s83 = sphi 0, %s81
      %s84 = sphi 0, %s83
      %s98 = sphi 0, %s84
      %s102 = sphi 0, %s102
      %s104 = sphi 0, %s102
      %s105 = sphi 0, %s104
      %s119 = sphi 0, %s105
      %s123 = sphi 0, %s123
      %s125 = sphi 0, %s123
      %s126 = sphi 0, %s125
      %s140 = sphi 0, %s126
      %s144 = sphi 0, %s144
      %s146 = sphi 0, %s144
      %s147 = sphi 0, %s146
      %s161 = sphi 0, %s147
      %s165 = sphi 0, %s165
      %s167 = sphi 0, %s165
      %s168 = sphi 0, %s167
      %s182 = sphi 0, %s168
      %s186 = sphi 0, %s186
      %s188 = sphi 0, %s186
      %s189 = sphi 0, %s188
      %s203 = sphi 0, %s189
      %s207 = sphi 0, %s207
      %s209 = sphi 0, %s207
      %s210 = sphi 0, %s209
      %s224 = sphi 0, %s210
      %s228 = sphi 0, %s228
      %s230 = sphi 0, %s228
      %s231 = sphi 0, %s230
      %s245 = sphi 0, %s231
      %s251 = sphi 0, %s253
      %s254 = sphi 0, %s251
      %s255 = sphi 0, %s254
      %s271 = sphi 0, %s255
    $region4: #{tpu_custom_call.1} parent=1 // loop_header_branch
      %29 = sbr.rel (%p27) target = $region8
    $region5: #{tpu_custom_call.1} parent=1 // loop_body
      %s31 = ssub.s32 %s26, 1
      %s32 = ssub.s32 %s26, 2
      %s33 = sadd.s32 %s26, 1
      %s34 = ssub.s32 %s26, %s33
      %p35 = scmp.eq.s32.totalorder %s34, 0
      %s37 = sadd.s32 %s36, 1
      %s38 = scalar_select %p35, %s36, %s37
      %p41 = pneg %p35
      %p42 = scmp.eq.s32.totalorder %s26, 5
      %p43 = por %p41, %p42
      %p44 = scmp.ne.s32.totalorder %s36, %s39
      %p45 = scmp.eq.s32.totalorder %s26, 0
      %p46 = por %p44, %p45
      %p47 = scmp.ne.s32.totalorder %s36, %s39
      %p48 = scmp.eq.s32.totalorder %s31, 5
      %p49 = por %p47, %p48
      %p50 = scmp.ne.s32.totalorder %s39, %s40
      %p51 = scmp.eq.s32.totalorder %s31, 0
      %p52 = por %p50, %p51
      %p53 = scmp.ne.s32.totalorder %s39, %s40
      %p54 = scmp.eq.s32.totalorder %s32, 5
      %p55 = por %p53, %p54
      %p57 = scmp.ne.s32.totalorder %s40, %s56
      %p58 = scmp.eq.s32.totalorder %s32, 0
      %p59 = por %p57, %p58
      %s61 = sadd.s32 %s60, 1
      %p64 = scmp.eq.s32.totalorder %s26, 5
      %p65 = scmp.ne.s32.totalorder %s60, %s62
      %p66 = scmp.eq.s32.totalorder %s26, 0
      %p67 = por %p65, %p66
      %p68 = scmp.ne.s32.totalorder %s60, %s62
      %p69 = scmp.eq.s32.totalorder %s31, 5
      %p70 = por %p68, %p69
      %p71 = scmp.ne.s32.totalorder %s62, %s63
      %p72 = scmp.eq.s32.totalorder %s31, 0
      %p73 = por %p71, %p72
      %p74 = scmp.ne.s32.totalorder %s62, %s63
      %p75 = scmp.eq.s32.totalorder %s32, 5
      %p76 = por %p74, %p75
      %p78 = scmp.ne.s32.totalorder %s63, %s77
      %p79 = scmp.eq.s32.totalorder %s32, 0
      %p80 = por %p78, %p79
      %s82 = sadd.s32 %s81, 1
      %p85 = scmp.eq.s32.totalorder %s26, 5
      %p86 = scmp.ne.s32.totalorder %s81, %s83
      %p87 = scmp.eq.s32.totalorder %s26, 0
      %p88 = por %p86, %p87
      %p89 = scmp.ne.s32.totalorder %s81, %s83
      %p90 = scmp.eq.s32.totalorder %s31, 5
      %p91 = por %p89, %p90
      %p92 = scmp.ne.s32.totalorder %s83, %s84
      %p93 = scmp.eq.s32.totalorder %s31, 0
      %p94 = por %p92, %p93
      %p95 = scmp.ne.s32.totalorder %s83, %s84
      %p96 = scmp.eq.s32.totalorder %s32, 5
      %p97 = por %p95, %p96
      %p99 = scmp.ne.s32.totalorder %s84, %s98
      %p100 = scmp.eq.s32.totalorder %s32, 0
      %p101 = por %p99, %p100
      %s103 = sadd.s32 %s102, 1
      %p106 = scmp.eq.s32.totalorder %s26, 5
      %p107 = scmp.ne.s32.totalorder %s102, %s104
      %p108 = scmp.eq.s32.totalorder %s26, 0
      %p109 = por %p107, %p108
      %p110 = scmp.ne.s32.totalorder %s102, %s104
      %p111 = scmp.eq.s32.totalorder %s31, 5
      %p112 = por %p110, %p111
      %p113 = scmp.ne.s32.totalorder %s104, %s105
      %p114 = scmp.eq.s32.totalorder %s31, 0
      %p115 = por %p113, %p114
      %p116 = scmp.ne.s32.totalorder %s104, %s105
      %p117 = scmp.eq.s32.totalorder %s32, 5
      %p118 = por %p116, %p117
      %p120 = scmp.ne.s32.totalorder %s105, %s119
      %p121 = scmp.eq.s32.totalorder %s32, 0
      %p122 = por %p120, %p121
      %s124 = sadd.s32 %s123, 1
      %p127 = scmp.eq.s32.totalorder %s26, 5
      %p128 = scmp.ne.s32.totalorder %s123, %s125
      %p129 = scmp.eq.s32.totalorder %s26, 0
      %p130 = por %p128, %p129
      %p131 = scmp.ne.s32.totalorder %s123, %s125
      %p132 = scmp.eq.s32.totalorder %s31, 5
      %p133 = por %p131, %p132
      %p134 = scmp.ne.s32.totalorder %s125, %s126
      %p135 = scmp.eq.s32.totalorder %s31, 0
      %p136 = por %p134, %p135
      %p137 = scmp.ne.s32.totalorder %s125, %s126
      %p138 = scmp.eq.s32.totalorder %s32, 5
      %p139 = por %p137, %p138
      %p141 = scmp.ne.s32.totalorder %s126, %s140
      %p142 = scmp.eq.s32.totalorder %s32, 0
      %p143 = por %p141, %p142
      %s145 = sadd.s32 %s144, 1
      %p148 = scmp.eq.s32.totalorder %s26, 5
      %p149 = scmp.ne.s32.totalorder %s144, %s146
      %p150 = scmp.eq.s32.totalorder %s26, 0
      %p151 = por %p149, %p150
      %p152 = scmp.ne.s32.totalorder %s144, %s146
      %p153 = scmp.eq.s32.totalorder %s31, 5
      %p154 = por %p152, %p153
      %p155 = scmp.ne.s32.totalorder %s146, %s147
      %p156 = scmp.eq.s32.totalorder %s31, 0
      %p157 = por %p155, %p156
      %p158 = scmp.ne.s32.totalorder %s146, %s147
      %p159 = scmp.eq.s32.totalorder %s32, 5
      %p160 = por %p158, %p159
      %p162 = scmp.ne.s32.totalorder %s147, %s161
      %p163 = scmp.eq.s32.totalorder %s32, 0
      %p164 = por %p162, %p163
      %s166 = sadd.s32 %s165, 1
      %p169 = scmp.eq.s32.totalorder %s26, 5
      %p170 = scmp.ne.s32.totalorder %s165, %s167
      %p171 = scmp.eq.s32.totalorder %s26, 0
      %p172 = por %p170, %p171
      %p173 = scmp.ne.s32.totalorder %s165, %s167
      %p174 = scmp.eq.s32.totalorder %s31, 5
      %p175 = por %p173, %p174
      %p176 = scmp.ne.s32.totalorder %s167, %s168
      %p177 = scmp.eq.s32.totalorder %s31, 0
      %p178 = por %p176, %p177
      %p179 = scmp.ne.s32.totalorder %s167, %s168
      %p180 = scmp.eq.s32.totalorder %s32, 5
      %p181 = por %p179, %p180
      %p183 = scmp.ne.s32.totalorder %s168, %s182
      %p184 = scmp.eq.s32.totalorder %s32, 0
      %p185 = por %p183, %p184
      %s187 = sadd.s32 %s186, 1
      %p190 = scmp.eq.s32.totalorder %s26, 5
      %p191 = scmp.ne.s32.totalorder %s186, %s188
      %p192 = scmp.eq.s32.totalorder %s26, 0
      %p193 = por %p191, %p192
      %p194 = scmp.ne.s32.totalorder %s186, %s188
      %p195 = scmp.eq.s32.totalorder %s31, 5
      %p196 = por %p194, %p195
      %p197 = scmp.ne.s32.totalorder %s188, %s189
      %p198 = scmp.eq.s32.totalorder %s31, 0
      %p199 = por %p197, %p198
      %p200 = scmp.ne.s32.totalorder %s188, %s189
      %p201 = scmp.eq.s32.totalorder %s32, 5
      %p202 = por %p200, %p201
      %p204 = scmp.ne.s32.totalorder %s189, %s203
      %p205 = scmp.eq.s32.totalorder %s32, 0
      %p206 = por %p204, %p205
      %s208 = sadd.s32 %s207, 1
      %p211 = scmp.eq.s32.totalorder %s26, 5
      %p212 = scmp.ne.s32.totalorder %s207, %s209
      %p213 = scmp.eq.s32.totalorder %s26, 0
      %p214 = por %p212, %p213
      %p215 = scmp.ne.s32.totalorder %s207, %s209
      %p216 = scmp.eq.s32.totalorder %s31, 5
      %p217 = por %p215, %p216
      %p218 = scmp.ne.s32.totalorder %s209, %s210
      %p219 = scmp.eq.s32.totalorder %s31, 0
      %p220 = por %p218, %p219
      %p221 = scmp.ne.s32.totalorder %s209, %s210
      %p222 = scmp.eq.s32.totalorder %s32, 5
      %p223 = por %p221, %p222
      %p225 = scmp.ne.s32.totalorder %s210, %s224
      %p226 = scmp.eq.s32.totalorder %s32, 0
      %p227 = por %p225, %p226
      %s229 = sadd.s32 %s228, 1
      %p232 = scmp.eq.s32.totalorder %s26, 5
      %p233 = scmp.ne.s32.totalorder %s228, %s230
      %p234 = scmp.eq.s32.totalorder %s26, 0
      %p235 = por %p233, %p234
      %p236 = scmp.ne.s32.totalorder %s228, %s230
      %p237 = scmp.eq.s32.totalorder %s31, 5
      %p238 = por %p236, %p237
      %p239 = scmp.ne.s32.totalorder %s230, %s231
      %p240 = scmp.eq.s32.totalorder %s31, 0
      %p241 = por %p239, %p240
      %p242 = scmp.ne.s32.totalorder %s230, %s231
      %p243 = scmp.eq.s32.totalorder %s32, 5
      %p244 = por %p242, %p243
      %p246 = scmp.ne.s32.totalorder %s231, %s245
      %p247 = scmp.eq.s32.totalorder %s32, 0
      %p248 = por %p246, %p247
      %s249 = ssub.s32 %s26, %s33
      %p250 = scmp.eq.s32.totalorder %s249, 0
      %s252 = sadd.s32 %s251, 1
      %s253 = scalar_select %p250, %s251, %s252
      %p256 = pneg %p250
      %p257 = scmp.eq.s32.totalorder %s26, 5
      %p258 = por %p256, %p257
      %p259 = scmp.ne.s32.totalorder %s251, %s254
      %p260 = scmp.eq.s32.totalorder %s26, 0
      %p261 = por %p259, %p260
      %p262 = scmp.ne.s32.totalorder %s251, %s254
      %p263 = scmp.eq.s32.totalorder %s31, 5
      %p264 = por %p262, %p263
      %p265 = scmp.ne.s32.totalorder %s254, %s255
      %p266 = scmp.eq.s32.totalorder %s31, 0
      %p267 = por %p265, %p266
      %p268 = scmp.ne.s32.totalorder %s254, %s255
      %p269 = scmp.eq.s32.totalorder %s32, 5
      %p270 = por %p268, %p269
      %p272 = scmp.ne.s32.totalorder %s255, %s271
      %p273 = scmp.eq.s32.totalorder %s32, 0
      %p274 = por %p272, %p273
      %p275 = scmp.le.s32.totalorder 1, %s26
      %p276 = scmp.lt.s32.totalorder %s26, 7
      %p277 = pnand %p275, %p276
      %p278 = pneg %p277
      // Predicated region
      $region9: #{tpu_custom_call.1} parent=5 // pred_check
        _
      $region10: #{tpu_custom_call.1} parent=5 // pred_check_branch
        %280 = sbr.rel (%p277) target = $region12
      $region11: #{tpu_custom_call.1} parent=5 // pred_region
        %s281 = ssub.s32 %s26, 1
        // Predicated region
        $region13: #{tpu_custom_call.1} parent=11 // pred_check
          %p282 = pneg %p73
        $region14: #{tpu_custom_call.1} parent=11 // pred_check_branch
          %284 = sbr.rel (%p282) target = $region16
        $region15: #{tpu_custom_call.1} parent=11 // pred_region
          %s286 = ssub.s32 128, 128
          %287 = vsyncadd [#allocation7], %s286
          %s289 = sshll.u32 [#allocation6], 4
          %s290 = int_to_ptr.vmem [resolvable:$true] %s289
          %292 = dma.hbm_to_vmem [thread:$0]  %s1, 128, %s290, [#allocation7]
        $region16: #{tpu_custom_call.1} parent=11 // pred_fallthru
          _
        // Predicated region
        $region17: #{tpu_custom_call.1} parent=11 // pred_check
          %p293 = pneg %p94
        $region18: #{tpu_custom_call.1} parent=11 // pred_check_branch
          %295 = sbr.rel (%p293) target = $region20
        $region19: #{tpu_custom_call.1} parent=11 // pred_region
          %s297 = ssub.s32 1536, 1536
          %298 = vsyncadd [#allocation7], %s297
          %s299 = sshll.u32 [#allocation8], 4
          %s300 = int_to_ptr.vmem [resolvable:$true] %s299
          %305 = dma.hbm_to_vmem [thread:$0]  %s2, 1536, %s300, [#allocation7], 128, 128, 8
        $region20: #{tpu_custom_call.1} parent=11 // pred_fallthru
          _
        // Predicated region
        $region21: #{tpu_custom_call.1} parent=11 // pred_check
          %p306 = pneg %p115
        $region22: #{tpu_custom_call.1} parent=11 // pred_check_branch
          %308 = sbr.rel (%p306) target = $region24
        $region23: #{tpu_custom_call.1} parent=11 // pred_region
          %s310 = ssub.s32 1024, 1024
          %311 = vsyncadd [#allocation10], %s310
          %s312 = sshll.u32 [#allocation9], 4
          %s313 = int_to_ptr.vmem [resolvable:$true] %s312
          %318 = dma.hbm_to_vmem [thread:$0]  %s3, 1024, %s313, [#allocation10], 128, 128, 8
        $region24: #{tpu_custom_call.1} parent=11 // pred_fallthru
          _
        // Predicated region
        $region25: #{tpu_custom_call.1} parent=11 // pred_check
          %p319 = pneg %p136
        $region26: #{tpu_custom_call.1} parent=11 // pred_check_branch
          %321 = sbr.rel (%p319) target = $region28
        $region27: #{tpu_custom_call.1} parent=11 // pred_region
          %s323 = ssub.s32 384, 384
          %324 = vsyncadd [#allocation10], %s323
          %s325 = sshll.u32 [#allocation11], 4
          %s326 = int_to_ptr.vmem [resolvable:$true] %s325
          %331 = dma.hbm_to_vmem [thread:$0]  %s4, 384, %s326, [#allocation10], 64, 64, 4
        $region28: #{tpu_custom_call.1} parent=11 // pred_fallthru
          _
        // Predicated region
        $region29: #{tpu_custom_call.1} parent=11 // pred_check
          %p332 = pneg %p157
        $region30: #{tpu_custom_call.1} parent=11 // pred_check_branch
          %334 = sbr.rel (%p332) target = $region32
        $region31: #{tpu_custom_call.1} parent=11 // pred_region
          %s336 = ssub.s32 2304, 2304
          %337 = vsyncadd [#allocation13], %s336
          %s338 = sshll.u32 [#allocation12], 4
          %s339 = int_to_ptr.vmem [resolvable:$true] %s338
          %344 = dma.hbm_to_vmem [thread:$0]  %s5, 2304, %s339, [#allocation13], 64, 64, 4
        $region32: #{tpu_custom_call.1} parent=11 // pred_fallthru
          _
        // Predicated region
        $region33: #{tpu_custom_call.1} parent=11 // pred_check
          %p345 = pneg %p178
        $region34: #{tpu_custom_call.1} parent=11 // pred_check_branch
          %347 = sbr.rel (%p345) target = $region36
        $region35: #{tpu_custom_call.1} parent=11 // pred_region
          %s349 = ssub.s32 256, 256
          %350 = vsyncadd [#allocation13], %s349
          %s351 = sshll.u32 [#allocation14], 4
          %s352 = int_to_ptr.vmem [resolvable:$true] %s351
          %357 = dma.hbm_to_vmem [thread:$0]  %s6, 256, %s352, [#allocation13], 128, 128, 8
        $region36: #{tpu_custom_call.1} parent=11 // pred_fallthru
          _
        // Predicated region
        $region37: #{tpu_custom_call.1} parent=11 // pred_check
          %p358 = pneg %p199
        $region38: #{tpu_custom_call.1} parent=11 // pred_check_branch
          %360 = sbr.rel (%p358) target = $region40
        $region39: #{tpu_custom_call.1} parent=11 // pred_region
          _
        $region40: #{tpu_custom_call.1} parent=11 // pred_fallthru
          _
        // Predicated region
        $region41: #{tpu_custom_call.1} parent=11 // pred_check
          %p361 = pneg %p220
        $region42: #{tpu_custom_call.1} parent=11 // pred_check_branch
          %363 = sbr.rel (%p361) target = $region44
        $region43: #{tpu_custom_call.1} parent=11 // pred_region
          %s365 = ssub.s32 1536, 1536
          %366 = vsyncadd [#allocation16], %s365
          %s367 = sshll.u32 [#allocation15], 4
          %s368 = int_to_ptr.vmem [resolvable:$true] %s367
          %373 = dma.hbm_to_vmem [thread:$0]  %s8, 1536, %s368, [#allocation16], 64, 64, 4
        $region44: #{tpu_custom_call.1} parent=11 // pred_fallthru
          _
        // Predicated region
        $region45: #{tpu_custom_call.1} parent=11 // pred_check
          %p374 = pneg %p241
        $region46: #{tpu_custom_call.1} parent=11 // pred_check_branch
          %376 = sbr.rel (%p374) target = $region48
        $region47: #{tpu_custom_call.1} parent=11 // pred_region
          %s378 = ssub.s32 256, 256
          %379 = vsyncadd [#allocation16], %s378
          %s380 = sshll.u32 [#allocation17], 4
          %s381 = int_to_ptr.vmem [resolvable:$true] %s380
          %386 = dma.hbm_to_vmem [thread:$0]  %s9, 256, %s381, [#allocation16], 128, 128, 8
        $region48: #{tpu_custom_call.1} parent=11 // pred_fallthru
          _
      $region12: #{tpu_custom_call.1} parent=5 // pred_fallthru
        _
      %p387 = scmp.lt.s32.totalorder %s26, 6
      // Predicated region
      $region49: #{tpu_custom_call.1} parent=5 // pred_check
        %p388 = pneg %p387
      $region50: #{tpu_custom_call.1} parent=5 // pred_check_branch
        %390 = sbr.rel (%p388) target = $region52
      $region51: #{tpu_custom_call.1} parent=5 // pred_region
        // Predicated region
        $region53: #{tpu_custom_call.1} parent=51 // pred_check
          %p391 = pneg %p46
        $region54: #{tpu_custom_call.1} parent=51 // pred_check_branch
          %393 = sbr.rel (%p391) target = $region56
        $region55: #{tpu_custom_call.1} parent=51 // pred_region
          %s394 = sand.u32 %s36, 1
          %s395 = scalar_lea.sflag [#allocation4], %s394
          %s396 = sand.u32 %s36, 1
          %s397 = smul.addr %s396, 8
          %s398 = scalar_lea.vmem [#allocation3], %s397
          %s400 = ssub.s32 128, 128
          %401 = vsyncadd %s395, %s400
          %s402 = smul.addr %s26, 128
          %s403 = scalar_lea.hbm %s0, %s402
          %s405 = sshll.u32 %s398, 4
          %s406 = int_to_ptr.vmem [resolvable:$true] %s405
          %408 = dma.hbm_to_vmem [thread:$0]  %s403, 128, %s406, %s395
        $region56: #{tpu_custom_call.1} parent=51 // pred_fallthru
          _
      $region52: #{tpu_custom_call.1} parent=5 // pred_fallthru
        _
      %p409 = scmp.le.s32.totalorder 1, %s26
      %p410 = scmp.lt.s32.totalorder %s26, 7
      %p411 = pnand %p409, %p410
      %p412 = pneg %p411
      // Predicated region
      $region57: #{tpu_custom_call.1} parent=5 // pred_check
        _
      $region58: #{tpu_custom_call.1} parent=5 // pred_check_branch
        %414 = sbr.rel (%p411) target = $region60
      $region59: #{tpu_custom_call.1} parent=5 // pred_region
        %s415 = ssub.s32 %s26, 1
        %s416 = sand.u32 %s39, 1
        %s417 = scalar_lea.sflag [#allocation4], %s416
        %s418 = sand.u32 %s39, 1
        %s419 = smul.addr %s418, 8
        %s420 = scalar_lea.vmem [#allocation3], %s419
        // Predicated region
        $region61: #{tpu_custom_call.1} parent=59 // pred_check
          %p421 = pneg %p52
        $region62: #{tpu_custom_call.1} parent=59 // pred_check_branch
          %423 = sbr.rel (%p421) target = $region64
        $region63: #{tpu_custom_call.1} parent=59 // pred_region
          %424 = dma.done %s417, 128
        $region64: #{tpu_custom_call.1} parent=59 // pred_fallthru
          _
        // Predicated region
        $region65: #{tpu_custom_call.1} parent=59 // pred_check
          %p425 = pneg %p73
        $region66: #{tpu_custom_call.1} parent=59 // pred_check_branch
          %427 = sbr.rel (%p425) target = $region68
        $region67: #{tpu_custom_call.1} parent=59 // pred_region
          %428 = dma.done [#allocation7], 128
        $region68: #{tpu_custom_call.1} parent=59 // pred_fallthru
          _
        // Predicated region
        $region69: #{tpu_custom_call.1} parent=59 // pred_check
          %p429 = pneg %p94
        $region70: #{tpu_custom_call.1} parent=59 // pred_check_branch
          %431 = sbr.rel (%p429) target = $region72
        $region71: #{tpu_custom_call.1} parent=59 // pred_region
          %432 = dma.done [#allocation7], 1536
        $region72: #{tpu_custom_call.1} parent=59 // pred_fallthru
          _
        // Predicated region
        $region73: #{tpu_custom_call.1} parent=59 // pred_check
          %p433 = pneg %p115
        $region74: #{tpu_custom_call.1} parent=59 // pred_check_branch
          %435 = sbr.rel (%p433) target = $region76
        $region75: #{tpu_custom_call.1} parent=59 // pred_region
          %436 = dma.done [#allocation10], 1024
        $region76: #{tpu_custom_call.1} parent=59 // pred_fallthru
          _
        // Predicated region
        $region77: #{tpu_custom_call.1} parent=59 // pred_check
          %p437 = pneg %p136
        $region78: #{tpu_custom_call.1} parent=59 // pred_check_branch
          %439 = sbr.rel (%p437) target = $region80
        $region79: #{tpu_custom_call.1} parent=59 // pred_region
          %440 = dma.done [#allocation10], 384
        $region80: #{tpu_custom_call.1} parent=59 // pred_fallthru
          _
        // Predicated region
        $region81: #{tpu_custom_call.1} parent=59 // pred_check
          %p441 = pneg %p157
        $region82: #{tpu_custom_call.1} parent=59 // pred_check_branch
          %443 = sbr.rel (%p441) target = $region84
        $region83: #{tpu_custom_call.1} parent=59 // pred_region
          %444 = dma.done [#allocation13], 2304
        $region84: #{tpu_custom_call.1} parent=59 // pred_fallthru
          _
        // Predicated region
        $region85: #{tpu_custom_call.1} parent=59 // pred_check
          %p445 = pneg %p178
        $region86: #{tpu_custom_call.1} parent=59 // pred_check_branch
          %447 = sbr.rel (%p445) target = $region88
        $region87: #{tpu_custom_call.1} parent=59 // pred_region
          %448 = dma.done [#allocation13], 256
        $region88: #{tpu_custom_call.1} parent=59 // pred_fallthru
          _
        // Predicated region
        $region89: #{tpu_custom_call.1} parent=59 // pred_check
          %p449 = pneg %p220
        $region90: #{tpu_custom_call.1} parent=59 // pred_check_branch
          %451 = sbr.rel (%p449) target = $region92
        $region91: #{tpu_custom_call.1} parent=59 // pred_region
          %452 = dma.done [#allocation16], 1536
        $region92: #{tpu_custom_call.1} parent=59 // pred_fallthru
          _
        // Predicated region
        $region93: #{tpu_custom_call.1} parent=59 // pred_check
          %p453 = pneg %p241
        $region94: #{tpu_custom_call.1} parent=59 // pred_check_branch
          %455 = sbr.rel (%p453) target = $region96
        $region95: #{tpu_custom_call.1} parent=59 // pred_region
          %456 = dma.done [#allocation16], 256
        $region96: #{tpu_custom_call.1} parent=59 // pred_fallthru
          _
        %s457 = sand.u32 %s39, 1
        %s458 = scalar_lea.sflag [#allocation4], %s457
        %s459 = sand.u32 %s39, 1
        %s460 = smul.addr %s459, 8
        %s461 = scalar_lea.vmem [#allocation3], %s460
        %p462 = pneg %p52
        %p463 = pneg %p49
        %p464 = pneg %p73
        %p465 = pneg %p70
        %p466 = pneg %p94
        %p467 = pneg %p91
        %p468 = pneg %p115
        %p469 = pneg %p112
        %p470 = pneg %p136
        %p471 = pneg %p133
        %p472 = pneg %p157
        %p473 = pneg %p154
        %p474 = pneg %p178
        %p475 = pneg %p175
        %p476 = pneg %p199
        %p477 = pneg %p196
        %p478 = pneg %p220
        %p479 = pneg %p217
        %p480 = pneg %p241
        %p481 = pneg %p238
        %p482 = pneg %p267
        %p483 = pneg %p264
        %s484 = sand.u32 %s254, 1
        %s485 = scalar_lea.sflag [#allocation5], %s484
        %s486 = sand.u32 %s254, 1
        %s487 = smul.addr %s486, 8
        %s488 = scalar_lea.vmem [#allocation18], %s487
        %p490 = scmp.eq.s32.totalorder %s31, 0
        // Predicated region
        $region97: #{tpu_custom_call.1} parent=59 // pred_check
          %p491 = pneg %p490
        $region98: #{tpu_custom_call.1} parent=59 // pred_check_branch
          %493 = sbr.rel (%p491) target = $region100
        $region99: #{tpu_custom_call.1} parent=59 // pred_region
          %v494 = vld [vmem:[#allocation6] sm:$0xff]
          %vm495 = vcmask 261120
          %496 = vst.msk [vmem:[#allocation2] sm:$0xff] %vm495, %v494
        $region100: #{tpu_custom_call.1} parent=59 // pred_fallthru
          _
        %v497 = vld [vmem:[%s420] sm:$0xff]
        %v498 = vld [vmem:[#allocation2] sm:$0xff]
        %v499 = vld [vmem:[#allocation8] sm:$0xff]
        %v500 = vld [vmem:[#allocation8 + $0x8] sm:$0xff]
        %v501 = vld [vmem:[#allocation8 + $0x10] sm:$0xff]
        %v502 = vld [vmem:[#allocation8 + $0x18] sm:$0xff]
        %v503 = vld [vmem:[#allocation8 + $0x20] sm:$0xff]
        %v504 = vld [vmem:[#allocation8 + $0x28] sm:$0xff]
        %v505 = vld [vmem:[#allocation8 + $0x30] sm:$0xff]
        %v506 = vld [vmem:[#allocation8 + $0x38] sm:$0xff]
        %v507 = vld [vmem:[#allocation8 + $0x40] sm:$0xff]
        %v508 = vld [vmem:[#allocation8 + $0x48] sm:$0xff]
        %v509 = vld [vmem:[#allocation8 + $0x50] sm:$0xff]
        %v510 = vld [vmem:[#allocation8 + $0x58] sm:$0xff]
        %v511 = vld [vmem:[#allocation11] sm:$0xf]
        %v512 = vld [vmem:[#allocation11 + $0x4] sm:$0xf]
        %v513 = vld [vmem:[#allocation11 + $0x8] sm:$0xf]
        %v514 = vld [vmem:[#allocation11 + $0xc] sm:$0xf]
        %v515 = vld [vmem:[#allocation11 + $0x10] sm:$0xf]
        %v516 = vld [vmem:[#allocation11 + $0x14] sm:$0xf]
        %v517 = vpack.c.bf16 %v497, %v497
        %v518 = vld [vmem:[#allocation14] sm:$0x1]
        %v519 = vlaneseq
        %v520 = vshrl.u32 %v519, 7
        %v521 = vsub.s32 0, %v520
        %v522 = vrot.slane %v518, %v521
        %v525 = vunpack.c.l.b16 %v511
        %v526 = vunpack.c.l.b16 %v512
        %v527 = vpack.c.b16 %v526, %v525
        %vm529 = vcmask 130048
        %v531 = vsel %vm529, %v517, 0
        %533 = vmatprep.subr.bf16.mxu0 0
        %534 = vmatpush1.bf16.msra.mxu0 %v527
        %535 = vmatprep.subr.bf16.mxu0 0
        %536 = vmatpush1.bf16.msra.mxu0 0
        %537 = vmatprep.subr.bf16.mxu0 0
        %538 = vmatpush1.bf16.msra.mxu0 0
        %539 = vmatprep.subr.bf16.mxu0 0
        %540 = vmatpush1.bf16.msra.mxu0 0
        %541 = vmatprep.subr.bf16.mxu0 0
        %542 = vmatpush1.bf16.msra.mxu0 0
        %543 = vmatprep.subr.bf16.mxu0 0
        %544 = vmatpush1.bf16.msra.mxu0 0
        %545 = vmatprep.subr.bf16.mxu0 0
        %546 = vmatpush1.bf16.msra.mxu0 0
        %547 = vmatprep.subr.bf16.mxu0 0
        %548 = vmatpush1.bf16.msra.mxu0 0
        %549 = vmatprep.subr.bf16.mxu0 0
        %550 = vmatpush1.bf16.msra.mxu0 0
        %551 = vmatprep.subr.bf16.mxu0 0
        %552 = vmatpush1.bf16.msra.mxu0 0
        %553 = vmatprep.subr.bf16.mxu0 0
        %554 = vmatpush1.bf16.msra.mxu0 0
        %555 = vmatprep.subr.bf16.mxu0 0
        %556 = vmatpush1.bf16.msra.mxu0 0
        %557 = vmatprep.subr.bf16.mxu0 0
        %558 = vmatpush1.bf16.msra.mxu0 0
        %559 = vmatprep.subr.bf16.mxu0 0
        %560 = vmatpush1.bf16.msra.mxu0 0
        %561 = vmatprep.subr.bf16.mxu0 0
        %562 = vmatpush1.bf16.msra.mxu0 0
        %563 = vmatprep.subr.bf16.mxu0 0
        %564 = vmatpush1.bf16.msra.mxu0 0
        %565 = vmatprep.mubr.bf16.mxu0 0
        %566 = vmatmul.mubr.bf16.gmra.mrb[0].mxu0 %v531
        %v567 = vpop.f32.mrb[0].mxu0
        %v568 = vadd.f32 %v522, %v567
        %v569 = vpop.f32.mrb[0].mxu0
        %v570 = vpop.f32.mrb[0].mxu0
        %v571 = vpop.f32.mrb[0].mxu0
        %572 = vdwg.mxu0
        %v573 = vld [vmem:[#allocation14 + $0x5] sm:$0x1]
        %v574 = vld [vmem:[#allocation14 + $0xa] sm:$0x1]
        %v575 = vmul.f32 %v568, %v568
        %vm576 = vcmask 785408
        %v578 = vsel %vm576, %v568, 0
        %v581 = vsel %vm576, %v575, 0
        %583 = vmatprep.subr.mxu0 0.0
        %584 = vmatpush1.msra.mxu0 %v499
        %585 = vmatprep.subr.mxu0 0.0
        %586 = vmatpush1.msra.mxu0 %v500
        %587 = vmatprep.subr.mxu0 0.0
        %588 = vmatpush1.msra.mxu0 %v501
        %589 = vmatprep.subr.mxu0 0.0
        %590 = vmatpush1.msra.mxu0 %v502
        %591 = vmatprep.subr.mxu0 0.0
        %592 = vmatpush1.msra.mxu0 %v503
        %593 = vmatprep.subr.mxu0 0.0
        %594 = vmatpush1.msra.mxu0 %v504
        %595 = vmatprep.subr.mxu0 0.0
        %596 = vmatpush1.msra.mxu0 %v505
        %597 = vmatprep.subr.mxu0 0.0
        %598 = vmatpush1.msra.mxu0 %v506
        %599 = vmatprep.subr.mxu0 0.0
        %600 = vmatpush1.msra.mxu0 %v507
        %601 = vmatprep.subr.mxu0 0.0
        %602 = vmatpush1.msra.mxu0 %v508
        %603 = vmatprep.subr.mxu0 0.0
        %604 = vmatpush1.msra.mxu0 %v509
        %605 = vmatprep.subr.mxu0 0.0
        %606 = vmatpush1.msra.mxu0 %v510
        %607 = vmatprep.subr.mxu0 0.0
        %608 = vmatpush1.msra.mxu0 0.0
        %609 = vmatprep.subr.mxu0 0.0
        %610 = vmatpush1.msra.mxu0 0.0
        %611 = vmatprep.subr.mxu0 0.0
        %612 = vmatpush1.msra.mxu0 0.0
        %613 = vmatprep.subr.mxu0 0.0
        %614 = vmatpush1.msra.mxu0 0.0
        %615 = vmatprep.subr.mxu0 0.0
        %616 = vmatpush1.msra.mxu0 0.0
        %617 = vmatprep.subr.mxu0 0.0
        %618 = vmatpush1.msra.mxu0 0.0
        %619 = vmatprep.subr.mxu0 0.0
        %620 = vmatpush1.msra.mxu0 0.0
        %621 = vmatprep.subr.mxu0 0.0
        %622 = vmatpush1.msra.mxu0 0.0
        %623 = vmatprep.subr.mxu0 0.0
        %624 = vmatpush1.msra.mxu0 0.0
        %625 = vmatprep.subr.mxu0 0.0
        %626 = vmatpush1.msra.mxu0 0.0
        %627 = vmatprep.subr.mxu0 0.0
        %628 = vmatpush1.msra.mxu0 0.0
        %629 = vmatprep.subr.mxu0 0.0
        %630 = vmatpush1.msra.mxu0 0.0
        %631 = vmatprep.subr.mxu0 0.0
        %632 = vmatpush1.msra.mxu0 0.0
        %633 = vmatprep.subr.mxu0 0.0
        %634 = vmatpush1.msra.mxu0 0.0
        %635 = vmatprep.subr.mxu0 0.0
        %636 = vmatpush1.msra.mxu0 0.0
        %637 = vmatprep.subr.mxu0 0.0
        %638 = vmatpush1.msra.mxu0 0.0
        %639 = vmatprep.subr.mxu0 0.0
        %640 = vmatpush1.msra.mxu0 0.0
        %641 = vmatprep.subr.mxu0 0.0
        %642 = vmatpush1.msra.mxu0 0.0
        %643 = vmatprep.subr.mxu0 0.0
        %644 = vmatpush1.msra.mxu0 0.0
        %645 = vmatprep.subr.mxu0 0.0
        %646 = vmatpush1.msra.mxu0 0.0
        %647 = vmatprep.mubr.f32.mxu0 0.0
        %648 = vmatmul.mubr.f32.gmra.mrb[0].mxu0 %v578
        %v649 = vpop.f32.mrb[0].mxu0
        %v650 = vadd.f32 0.0, %v649
        %v651 = vpop.f32.mrb[0].mxu0
        %652 = vmatprep.mubr.f32.mxu0 0.0
        %653 = vmatmul.mubr.f32.gmra.mrb[0].mxu0 %v581
        %v654 = vpop.f32.mrb[0].mxu0
        %v655 = vadd.f32 0.0, %v654
        %v656 = vpop.f32.mrb[0].mxu0
        %657 = vdwg.mxu0
        %v658 = vmul.f32 %v650, %v650
        %v659 = vsub.f32 %v655, %v658
        %v660 = vsub.f32 %v568, %v650
        %v661 = vadd.f32 %v659, 1e-05
        %v662 = vrsqrt.pop %v661
        %v663 = vmul.f32 %v660, %v662
        %v664 = vlaneseq
        %v665 = vshrl.u32 %v664, 7
        %v666 = vsub.s32 0, %v665
        %v667 = vrot.slane %v573, %v666
        %v668 = vmul.f32 %v663, %v667
        %v669 = vlaneseq
        %v670 = vshrl.u32 %v669, 7
        %v671 = vsub.s32 0, %v670
        %v672 = vrot.slane %v574, %v671
        %v673 = vadd.f32 %v668, %v672
        %v674 = vpack.c.bf16 %v498, %v498
        %v675 = vld [vmem:[#allocation14 + $0x1] sm:$0x1]
        %v676 = vlaneseq
        %v677 = vshrl.u32 %v676, 7
        %v678 = vsub.s32 0, %v677
        %v679 = vrot.slane %v675, %v678
        %v684 = vunpack.c.l.b16 %v513
        %v685 = vunpack.c.l.b16 %v514
        %v686 = vunpack.c.l.b16 %v515
        %v687 = vunpack.c.l.b16 %v516
        %v688 = vpack.c.b16 %v685, %v684
        %v689 = vpack.c.b16 %v687, %v686
        %vm692 = vcmask 261120
        %v694 = vsel %vm692, %v674, 0
        %696 = vmatprep.subr.bf16.mxu0 0
        %697 = vmatpush1.bf16.msra.mxu0 %v688
        %698 = vmatprep.subr.bf16.mxu0 0
        %699 = vmatpush1.bf16.msra.mxu0 %v689
        %700 = vmatprep.subr.bf16.mxu0 0
        %701 = vmatpush1.bf16.msra.mxu0 0
        %702 = vmatprep.subr.bf16.mxu0 0
        %703 = vmatpush1.bf16.msra.mxu0 0
        %704 = vmatprep.subr.bf16.mxu0 0
        %705 = vmatpush1.bf16.msra.mxu0 0
        %706 = vmatprep.subr.bf16.mxu0 0
        %707 = vmatpush1.bf16.msra.mxu0 0
        %708 = vmatprep.subr.bf16.mxu0 0
        %709 = vmatpush1.bf16.msra.mxu0 0
        %710 = vmatprep.subr.bf16.mxu0 0
        %711 = vmatpush1.bf16.msra.mxu0 0
        %712 = vmatprep.subr.bf16.mxu0 0
        %713 = vmatpush1.bf16.msra.mxu0 0
        %714 = vmatprep.subr.bf16.mxu0 0
        %715 = vmatpush1.bf16.msra.mxu0 0
        %716 = vmatprep.subr.bf16.mxu0 0
        %717 = vmatpush1.bf16.msra.mxu0 0
        %718 = vmatprep.subr.bf16.mxu0 0
        %719 = vmatpush1.bf16.msra.mxu0 0
        %720 = vmatprep.subr.bf16.mxu0 0
        %721 = vmatpush1.bf16.msra.mxu0 0
        %722 = vmatprep.subr.bf16.mxu0 0
        %723 = vmatpush1.bf16.msra.mxu0 0
        %724 = vmatprep.subr.bf16.mxu0 0
        %725 = vmatpush1.bf16.msra.mxu0 0
        %726 = vmatprep.subr.bf16.mxu0 0
        %727 = vmatpush1.bf16.msra.mxu0 0
        %728 = vmatprep.mubr.bf16.mxu0 0
        %729 = vmatmul.mubr.bf16.gmra.mrb[0].mxu0 %v694
        %v730 = vpop.f32.mrb[0].mxu0
        %v731 = vadd.f32 %v679, %v730
        %v732 = vpop.f32.mrb[0].mxu0
        %v733 = vpop.f32.mrb[0].mxu0
        %v734 = vpop.f32.mrb[0].mxu0
        %735 = vdwg.mxu0
        %v736 = vld [vmem:[#allocation14 + $0x6] sm:$0x1]
        %v737 = vld [vmem:[#allocation14 + $0xb] sm:$0x1]
        %v738 = vmul.f32 %v731, %v731
        %v740 = vsel %vm576, %v731, 0
        %v743 = vsel %vm576, %v738, 0
        %745 = vmatprep.subr.mxu0 0.0
        %746 = vmatpush1.msra.mxu0 %v499
        %747 = vmatprep.subr.mxu0 0.0
        %748 = vmatpush1.msra.mxu0 %v500
        %749 = vmatprep.subr.mxu0 0.0
        %750 = vmatpush1.msra.mxu0 %v501
        %751 = vmatprep.subr.mxu0 0.0
        %752 = vmatpush1.msra.mxu0 %v502
        %753 = vmatprep.subr.mxu0 0.0
        %754 = vmatpush1.msra.mxu0 %v503
        %755 = vmatprep.subr.mxu0 0.0
        %756 = vmatpush1.msra.mxu0 %v504
        %757 = vmatprep.subr.mxu0 0.0
        %758 = vmatpush1.msra.mxu0 %v505
        %759 = vmatprep.subr.mxu0 0.0
        %760 = vmatpush1.msra.mxu0 %v506
        %761 = vmatprep.subr.mxu0 0.0
        %762 = vmatpush1.msra.mxu0 %v507
        %763 = vmatprep.subr.mxu0 0.0
        %764 = vmatpush1.msra.mxu0 %v508
        %765 = vmatprep.subr.mxu0 0.0
        %766 = vmatpush1.msra.mxu0 %v509
        %767 = vmatprep.subr.mxu0 0.0
        %768 = vmatpush1.msra.mxu0 %v510
        %769 = vmatprep.subr.mxu0 0.0
        %770 = vmatpush1.msra.mxu0 0.0
        %771 = vmatprep.subr.mxu0 0.0
        %772 = vmatpush1.msra.mxu0 0.0
        %773 = vmatprep.subr.mxu0 0.0
        %774 = vmatpush1.msra.mxu0 0.0
        %775 = vmatprep.subr.mxu0 0.0
        %776 = vmatpush1.msra.mxu0 0.0
        %777 = vmatprep.subr.mxu0 0.0
        %778 = vmatpush1.msra.mxu0 0.0
        %779 = vmatprep.subr.mxu0 0.0
        %780 = vmatpush1.msra.mxu0 0.0
        %781 = vmatprep.subr.mxu0 0.0
        %782 = vmatpush1.msra.mxu0 0.0
        %783 = vmatprep.subr.mxu0 0.0
        %784 = vmatpush1.msra.mxu0 0.0
        %785 = vmatprep.subr.mxu0 0.0
        %786 = vmatpush1.msra.mxu0 0.0
        %787 = vmatprep.subr.mxu0 0.0
        %788 = vmatpush1.msra.mxu0 0.0
        %789 = vmatprep.subr.mxu0 0.0
        %790 = vmatpush1.msra.mxu0 0.0
        %791 = vmatprep.subr.mxu0 0.0
        %792 = vmatpush1.msra.mxu0 0.0
        %793 = vmatprep.subr.mxu0 0.0
        %794 = vmatpush1.msra.mxu0 0.0
        %795 = vmatprep.subr.mxu0 0.0
        %796 = vmatpush1.msra.mxu0 0.0
        %797 = vmatprep.subr.mxu0 0.0
        %798 = vmatpush1.msra.mxu0 0.0
        %799 = vmatprep.subr.mxu0 0.0
        %800 = vmatpush1.msra.mxu0 0.0
        %801 = vmatprep.subr.mxu0 0.0
        %802 = vmatpush1.msra.mxu0 0.0
        %803 = vmatprep.subr.mxu0 0.0
        %804 = vmatpush1.msra.mxu0 0.0
        %805 = vmatprep.subr.mxu0 0.0
        %806 = vmatpush1.msra.mxu0 0.0
        %807 = vmatprep.subr.mxu0 0.0
        %808 = vmatpush1.msra.mxu0 0.0
        %809 = vmatprep.mubr.f32.mxu0 0.0
        %810 = vmatmul.mubr.f32.gmra.mrb[0].mxu0 %v740
        %v811 = vpop.f32.mrb[0].mxu0
        %v812 = vadd.f32 0.0, %v811
        %v813 = vpop.f32.mrb[0].mxu0
        %814 = vmatprep.mubr.f32.mxu0 0.0
        %815 = vmatmul.mubr.f32.gmra.mrb[0].mxu0 %v743
        %v816 = vpop.f32.mrb[0].mxu0
        %v817 = vadd.f32 0.0, %v816
        %v818 = vpop.f32.mrb[0].mxu0
        %819 = vdwg.mxu0
        %v820 = vmul.f32 %v812, %v812
        %v821 = vsub.f32 %v817, %v820
        %v822 = vsub.f32 %v731, %v812
        %v823 = vadd.f32 %v821, 1e-05
        %v824 = vrsqrt.pop %v823
        %v825 = vmul.f32 %v822, %v824
        %v826 = vlaneseq
        %v827 = vshrl.u32 %v826, 7
        %v828 = vsub.s32 0, %v827
        %v829 = vrot.slane %v736, %v828
        %v830 = vmul.f32 %v825, %v829
        %v831 = vlaneseq
        %v832 = vshrl.u32 %v831, 7
        %v833 = vsub.s32 0, %v832
        %v834 = vrot.slane %v737, %v833
        %v835 = vadd.f32 %v830, %v834
        %v836 = vadd.f32 %v673, %v835
        %v837 = vmul.f32 %v836, 0.5
        %v838 = vtanh.pop %v837
        %v839 = vmul.f32 %v838, 0.5
        %v840 = vadd.f32 %v839, 0.5
        %v841 = vld [vmem:[#allocation12] sm:$0xf]
        %v842 = vld [vmem:[#allocation12 + $0x4] sm:$0xf]
        %v843 = vld [vmem:[#allocation12 + $0x8] sm:$0xf]
        %v844 = vld [vmem:[#allocation12 + $0xc] sm:$0xf]
        %v845 = vld [vmem:[#allocation12 + $0x10] sm:$0xf]
        %v846 = vld [vmem:[#allocation12 + $0x14] sm:$0xf]
        %v847 = vld [vmem:[#allocation12 + $0x18] sm:$0xf]
        %v848 = vld [vmem:[#allocation12 + $0x1c] sm:$0xf]
        %v849 = vld [vmem:[#allocation12 + $0x20] sm:$0xf]
        %v850 = vld [vmem:[#allocation12 + $0x24] sm:$0xf]
        %v851 = vld [vmem:[#allocation12 + $0x28] sm:$0xf]
        %v852 = vld [vmem:[#allocation12 + $0x2c] sm:$0xf]
        %v853 = vpack.c.bf16 %v840, %v840
        %v854 = vld [vmem:[#allocation14 + $0x2] sm:$0x1]
        %v855 = vlaneseq
        %v856 = vshrl.u32 %v855, 7
        %v857 = vsub.s32 0, %v856
        %v858 = vrot.slane %v854, %v857
        %v871 = vunpack.c.l.b16 %v841
        %v872 = vunpack.c.l.b16 %v842
        %v873 = vunpack.c.l.b16 %v843
        %v874 = vunpack.c.l.b16 %v844
        %v875 = vunpack.c.l.b16 %v845
        %v876 = vunpack.c.l.b16 %v846
        %v877 = vunpack.c.l.b16 %v847
        %v878 = vunpack.c.l.b16 %v848
        %v879 = vunpack.c.l.b16 %v849
        %v880 = vunpack.c.l.b16 %v850
        %v881 = vunpack.c.l.b16 %v851
        %v882 = vunpack.c.l.b16 %v852
        %v883 = vpack.c.b16 %v872, %v871
        %v884 = vpack.c.b16 %v874, %v873
        %v885 = vpack.c.b16 %v876, %v875
        %v886 = vpack.c.b16 %v878, %v877
        %v887 = vpack.c.b16 %v880, %v879
        %v888 = vpack.c.b16 %v882, %v881
        %v896 = vsel %vm576, %v853, 0
        %898 = vmatprep.subr.bf16.mxu0 0
        %899 = vmatpush1.bf16.msra.mxu0 %v883
        %900 = vmatprep.subr.bf16.mxu0 0
        %901 = vmatpush1.bf16.msra.mxu0 %v884
        %902 = vmatprep.subr.bf16.mxu0 0
        %903 = vmatpush1.bf16.msra.mxu0 %v885
        %904 = vmatprep.subr.bf16.mxu0 0
        %905 = vmatpush1.bf16.msra.mxu0 %v886
        %906 = vmatprep.subr.bf16.mxu0 0
        %907 = vmatpush1.bf16.msra.mxu0 %v887
        %908 = vmatprep.subr.bf16.mxu0 0
        %909 = vmatpush1.bf16.msra.mxu0 %v888
        %910 = vmatprep.subr.bf16.mxu0 0
        %911 = vmatpush1.bf16.msra.mxu0 0
        %912 = vmatprep.subr.bf16.mxu0 0
        %913 = vmatpush1.bf16.msra.mxu0 0
        %914 = vmatprep.subr.bf16.mxu0 0
        %915 = vmatpush1.bf16.msra.mxu0 0
        %916 = vmatprep.subr.bf16.mxu0 0
        %917 = vmatpush1.bf16.msra.mxu0 0
        %918 = vmatprep.subr.bf16.mxu0 0
        %919 = vmatpush1.bf16.msra.mxu0 0
        %920 = vmatprep.subr.bf16.mxu0 0
        %921 = vmatpush1.bf16.msra.mxu0 0
        %922 = vmatprep.subr.bf16.mxu0 0
        %923 = vmatpush1.bf16.msra.mxu0 0
        %924 = vmatprep.subr.bf16.mxu0 0
        %925 = vmatpush1.bf16.msra.mxu0 0
        %926 = vmatprep.subr.bf16.mxu0 0
        %927 = vmatpush1.bf16.msra.mxu0 0
        %928 = vmatprep.subr.bf16.mxu0 0
        %929 = vmatpush1.bf16.msra.mxu0 0
        %930 = vmatprep.mubr.bf16.mxu0 0
        %931 = vmatmul.mubr.bf16.gmra.mrb[0].mxu0 %v896
        %v932 = vpop.f32.mrb[0].mxu0
        %v933 = vadd.f32 %v858, %v932
        %v934 = vpop.f32.mrb[0].mxu0
        %v935 = vpop.f32.mrb[0].mxu0
        %v936 = vpop.f32.mrb[0].mxu0
        %937 = vdwg.mxu0
        %v938 = vld [vmem:[#allocation14 + $0x7] sm:$0x1]
        %v939 = vld [vmem:[#allocation14 + $0xc] sm:$0x1]
        %v940 = vmul.f32 %v933, %v933
        %v942 = vsel %vm576, %v933, 0
        %v945 = vsel %vm576, %v940, 0
        %947 = vmatprep.subr.mxu0 0.0
        %948 = vmatpush1.msra.mxu0 %v499
        %949 = vmatprep.subr.mxu0 0.0
        %950 = vmatpush1.msra.mxu0 %v500
        %951 = vmatprep.subr.mxu0 0.0
        %952 = vmatpush1.msra.mxu0 %v501
        %953 = vmatprep.subr.mxu0 0.0
        %954 = vmatpush1.msra.mxu0 %v502
        %955 = vmatprep.subr.mxu0 0.0
        %956 = vmatpush1.msra.mxu0 %v503
        %957 = vmatprep.subr.mxu0 0.0
        %958 = vmatpush1.msra.mxu0 %v504
        %959 = vmatprep.subr.mxu0 0.0
        %960 = vmatpush1.msra.mxu0 %v505
        %961 = vmatprep.subr.mxu0 0.0
        %962 = vmatpush1.msra.mxu0 %v506
        %963 = vmatprep.subr.mxu0 0.0
        %964 = vmatpush1.msra.mxu0 %v507
        %965 = vmatprep.subr.mxu0 0.0
        %966 = vmatpush1.msra.mxu0 %v508
        %967 = vmatprep.subr.mxu0 0.0
        %968 = vmatpush1.msra.mxu0 %v509
        %969 = vmatprep.subr.mxu0 0.0
        %970 = vmatpush1.msra.mxu0 %v510
        %971 = vmatprep.subr.mxu0 0.0
        %972 = vmatpush1.msra.mxu0 0.0
        %973 = vmatprep.subr.mxu0 0.0
        %974 = vmatpush1.msra.mxu0 0.0
        %975 = vmatprep.subr.mxu0 0.0
        %976 = vmatpush1.msra.mxu0 0.0
        %977 = vmatprep.subr.mxu0 0.0
        %978 = vmatpush1.msra.mxu0 0.0
        %979 = vmatprep.subr.mxu0 0.0
        %980 = vmatpush1.msra.mxu0 0.0
        %981 = vmatprep.subr.mxu0 0.0
        %982 = vmatpush1.msra.mxu0 0.0
        %983 = vmatprep.subr.mxu0 0.0
        %984 = vmatpush1.msra.mxu0 0.0
        %985 = vmatprep.subr.mxu0 0.0
        %986 = vmatpush1.msra.mxu0 0.0
        %987 = vmatprep.subr.mxu0 0.0
        %988 = vmatpush1.msra.mxu0 0.0
        %989 = vmatprep.subr.mxu0 0.0
        %990 = vmatpush1.msra.mxu0 0.0
        %991 = vmatprep.subr.mxu0 0.0
        %992 = vmatpush1.msra.mxu0 0.0
        %993 = vmatprep.subr.mxu0 0.0
        %994 = vmatpush1.msra.mxu0 0.0
        %995 = vmatprep.subr.mxu0 0.0
        %996 = vmatpush1.msra.mxu0 0.0
        %997 = vmatprep.subr.mxu0 0.0
        %998 = vmatpush1.msra.mxu0 0.0
        %999 = vmatprep.subr.mxu0 0.0
        %1000 = vmatpush1.msra.mxu0 0.0
        %1001 = vmatprep.subr.mxu0 0.0
        %1002 = vmatpush1.msra.mxu0 0.0
        %1003 = vmatprep.subr.mxu0 0.0
        %1004 = vmatpush1.msra.mxu0 0.0
        %1005 = vmatprep.subr.mxu0 0.0
        %1006 = vmatpush1.msra.mxu0 0.0
        %1007 = vmatprep.subr.mxu0 0.0
        %1008 = vmatpush1.msra.mxu0 0.0
        %1009 = vmatprep.subr.mxu0 0.0
        %1010 = vmatpush1.msra.mxu0 0.0
        %1011 = vmatprep.mubr.f32.mxu0 0.0
        %1012 = vmatmul.mubr.f32.gmra.mrb[0].mxu0 %v942
        %v1013 = vpop.f32.mrb[0].mxu0
        %v1014 = vadd.f32 0.0, %v1013
        %v1015 = vpop.f32.mrb[0].mxu0
        %1016 = vmatprep.mubr.f32.mxu0 0.0
        %1017 = vmatmul.mubr.f32.gmra.mrb[0].mxu0 %v945
        %v1018 = vpop.f32.mrb[0].mxu0
        %v1019 = vadd.f32 0.0, %v1018
        %v1020 = vpop.f32.mrb[0].mxu0
        %1021 = vdwg.mxu0
        %v1022 = vmul.f32 %v1014, %v1014
        %v1023 = vsub.f32 %v1019, %v1022
        %v1024 = vsub.f32 %v933, %v1014
        %v1025 = vadd.f32 %v1023, 1e-05
        %v1026 = vrsqrt.pop %v1025
        %v1027 = vmul.f32 %v1024, %v1026
        %v1028 = vlaneseq
        %v1029 = vshrl.u32 %v1028, 7
        %v1030 = vsub.s32 0, %v1029
        %v1031 = vrot.slane %v938, %v1030
        %v1032 = vmul.f32 %v1027, %v1031
        %v1033 = vlaneseq
        %v1034 = vshrl.u32 %v1033, 7
        %v1035 = vsub.s32 0, %v1034
        %v1036 = vrot.slane %v939, %v1035
        %v1037 = vadd.f32 %v1032, %v1036
        %v1038 = vadd.f32 %v836, %v1037
        %v1039 = vmul.f32 %v1038, 0.5
        %v1040 = vtanh.pop %v1039
        %v1041 = vmul.f32 %v1040, 0.5
        %v1042 = vadd.f32 %v1041, 0.5
        %s1043 = scalar_lea.vmem [#allocation12], 48
        %v1044 = vld [vmem:[%s1043] sm:$0xf]
        %v1045 = vld [vmem:[%s1043 + $0x4] sm:$0xf]
        %v1046 = vld [vmem:[%s1043 + $0x8] sm:$0xf]
        %v1047 = vld [vmem:[%s1043 + $0xc] sm:$0xf]
        %v1048 = vld [vmem:[%s1043 + $0x10] sm:$0xf]
        %v1049 = vld [vmem:[%s1043 + $0x14] sm:$0xf]
        %v1050 = vld [vmem:[%s1043 + $0x18] sm:$0xf]
        %v1051 = vld [vmem:[%s1043 + $0x1c] sm:$0xf]
        %v1052 = vld [vmem:[%s1043 + $0x20] sm:$0xf]
        %v1053 = vld [vmem:[%s1043 + $0x24] sm:$0xf]
        %v1054 = vld [vmem:[%s1043 + $0x28] sm:$0xf]
        %v1055 = vld [vmem:[%s1043 + $0x2c] sm:$0xf]
        %v1056 = vpack.c.bf16 %v1042, %v1042
        %v1057 = vld [vmem:[#allocation14 + $0x3] sm:$0x1]
        %v1058 = vlaneseq
        %v1059 = vshrl.u32 %v1058, 7
        %v1060 = vsub.s32 0, %v1059
        %v1061 = vrot.slane %v1057, %v1060
        %v1074 = vunpack.c.l.b16 %v1044
        %v1075 = vunpack.c.l.b16 %v1045
        %v1076 = vunpack.c.l.b16 %v1046
        %v1077 = vunpack.c.l.b16 %v1047
        %v1078 = vunpack.c.l.b16 %v1048
        %v1079 = vunpack.c.l.b16 %v1049
        %v1080 = vunpack.c.l.b16 %v1050
        %v1081 = vunpack.c.l.b16 %v1051
        %v1082 = vunpack.c.l.b16 %v1052
        %v1083 = vunpack.c.l.b16 %v1053
        %v1084 = vunpack.c.l.b16 %v1054
        %v1085 = vunpack.c.l.b16 %v1055
        %v1086 = vpack.c.b16 %v1075, %v1074
        %v1087 = vpack.c.b16 %v1077, %v1076
        %v1088 = vpack.c.b16 %v1079, %v1078
        %v1089 = vpack.c.b16 %v1081, %v1080
        %v1090 = vpack.c.b16 %v1083, %v1082
        %v1091 = vpack.c.b16 %v1085, %v1084
        %v1099 = vsel %vm576, %v1056, 0
        %1101 = vmatprep.subr.bf16.mxu0 0
        %1102 = vmatpush1.bf16.msra.mxu0 %v1086
        %1103 = vmatprep.subr.bf16.mxu0 0
        %1104 = vmatpush1.bf16.msra.mxu0 %v1087
        %1105 = vmatprep.subr.bf16.mxu0 0
        %1106 = vmatpush1.bf16.msra.mxu0 %v1088
        %1107 = vmatprep.subr.bf16.mxu0 0
        %1108 = vmatpush1.bf16.msra.mxu0 %v1089
        %1109 = vmatprep.subr.bf16.mxu0 0
        %1110 = vmatpush1.bf16.msra.mxu0 %v1090
        %1111 = vmatprep.subr.bf16.mxu0 0
        %1112 = vmatpush1.bf16.msra.mxu0 %v1091
        %1113 = vmatprep.subr.bf16.mxu0 0
        %1114 = vmatpush1.bf16.msra.mxu0 0
        %1115 = vmatprep.subr.bf16.mxu0 0
        %1116 = vmatpush1.bf16.msra.mxu0 0
        %1117 = vmatprep.subr.bf16.mxu0 0
        %1118 = vmatpush1.bf16.msra.mxu0 0
        %1119 = vmatprep.subr.bf16.mxu0 0
        %1120 = vmatpush1.bf16.msra.mxu0 0
        %1121 = vmatprep.subr.bf16.mxu0 0
        %1122 = vmatpush1.bf16.msra.mxu0 0
        %1123 = vmatprep.subr.bf16.mxu0 0
        %1124 = vmatpush1.bf16.msra.mxu0 0
        %1125 = vmatprep.subr.bf16.mxu0 0
        %1126 = vmatpush1.bf16.msra.mxu0 0
        %1127 = vmatprep.subr.bf16.mxu0 0
        %1128 = vmatpush1.bf16.msra.mxu0 0
        %1129 = vmatprep.subr.bf16.mxu0 0
        %1130 = vmatpush1.bf16.msra.mxu0 0
        %1131 = vmatprep.subr.bf16.mxu0 0
        %1132 = vmatpush1.bf16.msra.mxu0 0
        %1133 = vmatprep.mubr.bf16.mxu0 0
        %1134 = vmatmul.mubr.bf16.gmra.mrb[0].mxu0 %v1099
        %v1135 = vpop.f32.mrb[0].mxu0
        %v1136 = vadd.f32 %v1061, %v1135
        %v1137 = vpop.f32.mrb[0].mxu0
        %v1138 = vpop.f32.mrb[0].mxu0
        %v1139 = vpop.f32.mrb[0].mxu0
        %1140 = vdwg.mxu0
        %v1141 = vld [vmem:[#allocation14 + $0x8] sm:$0x1]
        %v1142 = vld [vmem:[#allocation14 + $0xd] sm:$0x1]
        %v1143 = vmul.f32 %v1136, %v1136
        %v1145 = vsel %vm576, %v1136, 0
        %v1148 = vsel %vm576, %v1143, 0
        %1150 = vmatprep.subr.mxu0 0.0
        %1151 = vmatpush1.msra.mxu0 %v499
        %1152 = vmatprep.subr.mxu0 0.0
        %1153 = vmatpush1.msra.mxu0 %v500
        %1154 = vmatprep.subr.mxu0 0.0
        %1155 = vmatpush1.msra.mxu0 %v501
        %1156 = vmatprep.subr.mxu0 0.0
        %1157 = vmatpush1.msra.mxu0 %v502
        %1158 = vmatprep.subr.mxu0 0.0
        %1159 = vmatpush1.msra.mxu0 %v503
        %1160 = vmatprep.subr.mxu0 0.0
        %1161 = vmatpush1.msra.mxu0 %v504
        %1162 = vmatprep.subr.mxu0 0.0
        %1163 = vmatpush1.msra.mxu0 %v505
        %1164 = vmatprep.subr.mxu0 0.0
        %1165 = vmatpush1.msra.mxu0 %v506
        %1166 = vmatprep.subr.mxu0 0.0
        %1167 = vmatpush1.msra.mxu0 %v507
        %1168 = vmatprep.subr.mxu0 0.0
        %1169 = vmatpush1.msra.mxu0 %v508
        %1170 = vmatprep.subr.mxu0 0.0
        %1171 = vmatpush1.msra.mxu0 %v509
        %1172 = vmatprep.subr.mxu0 0.0
        %1173 = vmatpush1.msra.mxu0 %v510
        %1174 = vmatprep.subr.mxu0 0.0
        %1175 = vmatpush1.msra.mxu0 0.0
        %1176 = vmatprep.subr.mxu0 0.0
        %1177 = vmatpush1.msra.mxu0 0.0
        %1178 = vmatprep.subr.mxu0 0.0
        %1179 = vmatpush1.msra.mxu0 0.0
        %1180 = vmatprep.subr.mxu0 0.0
        %1181 = vmatpush1.msra.mxu0 0.0
        %1182 = vmatprep.subr.mxu0 0.0
        %1183 = vmatpush1.msra.mxu0 0.0
        %1184 = vmatprep.subr.mxu0 0.0
        %1185 = vmatpush1.msra.mxu0 0.0
        %1186 = vmatprep.subr.mxu0 0.0
        %1187 = vmatpush1.msra.mxu0 0.0
        %1188 = vmatprep.subr.mxu0 0.0
        %1189 = vmatpush1.msra.mxu0 0.0
        %1190 = vmatprep.subr.mxu0 0.0
        %1191 = vmatpush1.msra.mxu0 0.0
        %1192 = vmatprep.subr.mxu0 0.0
        %1193 = vmatpush1.msra.mxu0 0.0
        %1194 = vmatprep.subr.mxu0 0.0
        %1195 = vmatpush1.msra.mxu0 0.0
        %1196 = vmatprep.subr.mxu0 0.0
        %1197 = vmatpush1.msra.mxu0 0.0
        %1198 = vmatprep.subr.mxu0 0.0
        %1199 = vmatpush1.msra.mxu0 0.0
        %1200 = vmatprep.subr.mxu0 0.0
        %1201 = vmatpush1.msra.mxu0 0.0
        %1202 = vmatprep.subr.mxu0 0.0
        %1203 = vmatpush1.msra.mxu0 0.0
        %1204 = vmatprep.subr.mxu0 0.0
        %1205 = vmatpush1.msra.mxu0 0.0
        %1206 = vmatprep.subr.mxu0 0.0
        %1207 = vmatpush1.msra.mxu0 0.0
        %1208 = vmatprep.subr.mxu0 0.0
        %1209 = vmatpush1.msra.mxu0 0.0
        %1210 = vmatprep.subr.mxu0 0.0
        %1211 = vmatpush1.msra.mxu0 0.0
        %1212 = vmatprep.subr.mxu0 0.0
        %1213 = vmatpush1.msra.mxu0 0.0
        %1214 = vmatprep.mubr.f32.mxu0 0.0
        %1215 = vmatmul.mubr.f32.gmra.mrb[0].mxu0 %v1145
        %v1216 = vpop.f32.mrb[0].mxu0
        %v1217 = vadd.f32 0.0, %v1216
        %v1218 = vpop.f32.mrb[0].mxu0
        %1219 = vmatprep.mubr.f32.mxu0 0.0
        %1220 = vmatmul.mubr.f32.gmra.mrb[0].mxu0 %v1148
        %v1221 = vpop.f32.mrb[0].mxu0
        %v1222 = vadd.f32 0.0, %v1221
        %v1223 = vpop.f32.mrb[0].mxu0
        %1224 = vdwg.mxu0
        %v1225 = vmul.f32 %v1217, %v1217
        %v1226 = vsub.f32 %v1222, %v1225
        %v1227 = vsub.f32 %v1136, %v1217
        %v1228 = vadd.f32 %v1226, 1e-05
        %v1229 = vrsqrt.pop %v1228
        %v1230 = vmul.f32 %v1227, %v1229
        %v1231 = vlaneseq
        %v1232 = vshrl.u32 %v1231, 7
        %v1233 = vsub.s32 0, %v1232
        %v1234 = vrot.slane %v1141, %v1233
        %v1235 = vmul.f32 %v1230, %v1234
        %v1236 = vlaneseq
        %v1237 = vshrl.u32 %v1236, 7
        %v1238 = vsub.s32 0, %v1237
        %v1239 = vrot.slane %v1142, %v1238
        %v1240 = vadd.f32 %v1235, %v1239
        %v1241 = vadd.f32 %v1038, %v1240
        %v1242 = vmul.f32 %v1241, 0.5
        %v1243 = vtanh.pop %v1242
        %v1244 = vmul.f32 %v1243, 0.5
        %v1245 = vadd.f32 %v1244, 0.5
        %s1246 = scalar_lea.vmem [#allocation12], 96
        %v1247 = vld [vmem:[%s1246] sm:$0xf]
        %v1248 = vld [vmem:[%s1246 + $0x4] sm:$0xf]
        %v1249 = vld [vmem:[%s1246 + $0x8] sm:$0xf]
        %v1250 = vld [vmem:[%s1246 + $0xc] sm:$0xf]
        %v1251 = vld [vmem:[%s1246 + $0x10] sm:$0xf]
        %v1252 = vld [vmem:[%s1246 + $0x14] sm:$0xf]
        %v1253 = vld [vmem:[%s1246 + $0x18] sm:$0xf]
        %v1254 = vld [vmem:[%s1246 + $0x1c] sm:$0xf]
        %v1255 = vld [vmem:[%s1246 + $0x20] sm:$0xf]
        %v1256 = vld [vmem:[%s1246 + $0x24] sm:$0xf]
        %v1257 = vld [vmem:[%s1246 + $0x28] sm:$0xf]
        %v1258 = vld [vmem:[%s1246 + $0x2c] sm:$0xf]
        %v1259 = vpack.c.bf16 %v1245, %v1245
        %v1260 = vld [vmem:[#allocation14 + $0x4] sm:$0x1]
        %v1261 = vlaneseq
        %v1262 = vshrl.u32 %v1261, 7
        %v1263 = vsub.s32 0, %v1262
        %v1264 = vrot.slane %v1260, %v1263
        %v1277 = vunpack.c.l.b16 %v1247
        %v1278 = vunpack.c.l.b16 %v1248
        %v1279 = vunpack.c.l.b16 %v1249
        %v1280 = vunpack.c.l.b16 %v1250
        %v1281 = vunpack.c.l.b16 %v1251
        %v1282 = vunpack.c.l.b16 %v1252
        %v1283 = vunpack.c.l.b16 %v1253
        %v1284 = vunpack.c.l.b16 %v1254
        %v1285 = vunpack.c.l.b16 %v1255
        %v1286 = vunpack.c.l.b16 %v1256
        %v1287 = vunpack.c.l.b16 %v1257
        %v1288 = vunpack.c.l.b16 %v1258
        %v1289 = vpack.c.b16 %v1278, %v1277
        %v1290 = vpack.c.b16 %v1280, %v1279
        %v1291 = vpack.c.b16 %v1282, %v1281
        %v1292 = vpack.c.b16 %v1284, %v1283
        %v1293 = vpack.c.b16 %v1286, %v1285
        %v1294 = vpack.c.b16 %v1288, %v1287
        %v1302 = vsel %vm576, %v1259, 0
        %1304 = vmatprep.subr.bf16.mxu0 0
        %1305 = vmatpush1.bf16.msra.mxu0 %v1289
        %1306 = vmatprep.subr.bf16.mxu0 0
        %1307 = vmatpush1.bf16.msra.mxu0 %v1290
        %1308 = vmatprep.subr.bf16.mxu0 0
        %1309 = vmatpush1.bf16.msra.mxu0 %v1291
        %1310 = vmatprep.subr.bf16.mxu0 0
        %1311 = vmatpush1.bf16.msra.mxu0 %v1292
        %1312 = vmatprep.subr.bf16.mxu0 0
        %1313 = vmatpush1.bf16.msra.mxu0 %v1293
        %1314 = vmatprep.subr.bf16.mxu0 0
        %1315 = vmatpush1.bf16.msra.mxu0 %v1294
        %1316 = vmatprep.subr.bf16.mxu0 0
        %1317 = vmatpush1.bf16.msra.mxu0 0
        %1318 = vmatprep.subr.bf16.mxu0 0
        %1319 = vmatpush1.bf16.msra.mxu0 0
        %1320 = vmatprep.subr.bf16.mxu0 0
        %1321 = vmatpush1.bf16.msra.mxu0 0
        %1322 = vmatprep.subr.bf16.mxu0 0
        %1323 = vmatpush1.bf16.msra.mxu0 0
        %1324 = vmatprep.subr.bf16.mxu0 0
        %1325 = vmatpush1.bf16.msra.mxu0 0
        %1326 = vmatprep.subr.bf16.mxu0 0
        %1327 = vmatpush1.bf16.msra.mxu0 0
        %1328 = vmatprep.subr.bf16.mxu0 0
        %1329 = vmatpush1.bf16.msra.mxu0 0
        %1330 = vmatprep.subr.bf16.mxu0 0
        %1331 = vmatpush1.bf16.msra.mxu0 0
        %1332 = vmatprep.subr.bf16.mxu0 0
        %1333 = vmatpush1.bf16.msra.mxu0 0
        %1334 = vmatprep.subr.bf16.mxu0 0
        %1335 = vmatpush1.bf16.msra.mxu0 0
        %1336 = vmatprep.mubr.bf16.mxu0 0
        %1337 = vmatmul.mubr.bf16.gmra.mrb[0].mxu0 %v1302
        %v1338 = vpop.f32.mrb[0].mxu0
        %v1339 = vadd.f32 %v1264, %v1338
        %v1340 = vpop.f32.mrb[0].mxu0
        %v1341 = vpop.f32.mrb[0].mxu0
        %v1342 = vpop.f32.mrb[0].mxu0
        %1343 = vdwg.mxu0
        %v1344 = vld [vmem:[#allocation14 + $0x9] sm:$0x1]
        %v1345 = vld [vmem:[#allocation14 + $0xe] sm:$0x1]
        %v1346 = vmul.f32 %v1339, %v1339
        %v1348 = vsel %vm576, %v1339, 0
        %v1351 = vsel %vm576, %v1346, 0
        %1353 = vmatprep.subr.mxu0 0.0
        %1354 = vmatpush1.msra.mxu0 %v499
        %1355 = vmatprep.subr.mxu0 0.0
        %1356 = vmatpush1.msra.mxu0 %v500
        %1357 = vmatprep.subr.mxu0 0.0
        %1358 = vmatpush1.msra.mxu0 %v501
        %1359 = vmatprep.subr.mxu0 0.0
        %1360 = vmatpush1.msra.mxu0 %v502
        %1361 = vmatprep.subr.mxu0 0.0
        %1362 = vmatpush1.msra.mxu0 %v503
        %1363 = vmatprep.subr.mxu0 0.0
        %1364 = vmatpush1.msra.mxu0 %v504
        %1365 = vmatprep.subr.mxu0 0.0
        %1366 = vmatpush1.msra.mxu0 %v505
        %1367 = vmatprep.subr.mxu0 0.0
        %1368 = vmatpush1.msra.mxu0 %v506
        %1369 = vmatprep.subr.mxu0 0.0
        %1370 = vmatpush1.msra.mxu0 %v507
        %1371 = vmatprep.subr.mxu0 0.0
        %1372 = vmatpush1.msra.mxu0 %v508
        %1373 = vmatprep.subr.mxu0 0.0
        %1374 = vmatpush1.msra.mxu0 %v509
        %1375 = vmatprep.subr.mxu0 0.0
        %1376 = vmatpush1.msra.mxu0 %v510
        %1377 = vmatprep.subr.mxu0 0.0
        %1378 = vmatpush1.msra.mxu0 0.0
        %1379 = vmatprep.subr.mxu0 0.0
        %1380 = vmatpush1.msra.mxu0 0.0
        %1381 = vmatprep.subr.mxu0 0.0
        %1382 = vmatpush1.msra.mxu0 0.0
        %1383 = vmatprep.subr.mxu0 0.0
        %1384 = vmatpush1.msra.mxu0 0.0
        %1385 = vmatprep.subr.mxu0 0.0
        %1386 = vmatpush1.msra.mxu0 0.0
        %1387 = vmatprep.subr.mxu0 0.0
        %1388 = vmatpush1.msra.mxu0 0.0
        %1389 = vmatprep.subr.mxu0 0.0
        %1390 = vmatpush1.msra.mxu0 0.0
        %1391 = vmatprep.subr.mxu0 0.0
        %1392 = vmatpush1.msra.mxu0 0.0
        %1393 = vmatprep.subr.mxu0 0.0
        %1394 = vmatpush1.msra.mxu0 0.0
        %1395 = vmatprep.subr.mxu0 0.0
        %1396 = vmatpush1.msra.mxu0 0.0
        %1397 = vmatprep.subr.mxu0 0.0
        %1398 = vmatpush1.msra.mxu0 0.0
        %1399 = vmatprep.subr.mxu0 0.0
        %1400 = vmatpush1.msra.mxu0 0.0
        %1401 = vmatprep.subr.mxu0 0.0
        %1402 = vmatpush1.msra.mxu0 0.0
        %1403 = vmatprep.subr.mxu0 0.0
        %1404 = vmatpush1.msra.mxu0 0.0
        %1405 = vmatprep.subr.mxu0 0.0
        %1406 = vmatpush1.msra.mxu0 0.0
        %1407 = vmatprep.subr.mxu0 0.0
        %1408 = vmatpush1.msra.mxu0 0.0
        %1409 = vmatprep.subr.mxu0 0.0
        %1410 = vmatpush1.msra.mxu0 0.0
        %1411 = vmatprep.subr.mxu0 0.0
        %1412 = vmatpush1.msra.mxu0 0.0
        %1413 = vmatprep.subr.mxu0 0.0
        %1414 = vmatpush1.msra.mxu0 0.0
        %1415 = vmatprep.subr.mxu0 0.0
        %1416 = vmatpush1.msra.mxu0 0.0
        %1417 = vmatprep.mubr.f32.mxu0 0.0
        %1418 = vmatmul.mubr.f32.gmra.mrb[0].mxu0 %v1348
        %v1419 = vpop.f32.mrb[0].mxu0
        %v1420 = vadd.f32 0.0, %v1419
        %v1421 = vpop.f32.mrb[0].mxu0
        %1422 = vmatprep.mubr.f32.mxu0 0.0
        %1423 = vmatmul.mubr.f32.gmra.mrb[0].mxu0 %v1351
        %v1424 = vpop.f32.mrb[0].mxu0
        %v1425 = vadd.f32 0.0, %v1424
        %v1426 = vpop.f32.mrb[0].mxu0
        %1427 = vdwg.mxu0
        %v1428 = vmul.f32 %v1420, %v1420
        %v1429 = vsub.f32 %v1425, %v1428
        %v1430 = vsub.f32 %v1339, %v1420
        %v1431 = vadd.f32 %v1429, 1e-05
        %v1432 = vrsqrt.pop %v1431
        %v1433 = vmul.f32 %v1430, %v1432
        %v1434 = vlaneseq
        %v1435 = vshrl.u32 %v1434, 7
        %v1436 = vsub.s32 0, %v1435
        %v1437 = vrot.slane %v1344, %v1436
        %v1438 = vmul.f32 %v1433, %v1437
        %v1439 = vlaneseq
        %v1440 = vshrl.u32 %v1439, 7
        %v1441 = vsub.s32 0, %v1440
        %v1442 = vrot.slane %v1345, %v1441
        %v1443 = vadd.f32 %v1438, %v1442
        %v1444 = vadd.f32 %v1241, %v1443
        %v1445 = vmul.f32 %v1444, 0.5
        %v1446 = vtanh.pop %v1445
        %v1447 = vmul.f32 %v1446, 0.5
        %v1448 = vadd.f32 %v1447, 0.5
        %1450 = vrot.lane.b32.xlu0 %v1448, 96
        %v1451 = vpop.permute.xlu0 %1450
        %v1453 = vsub.f32 %v1448, %v1451
        %v1454 = vmul.f32 %v1453, %v498
        %v1455 = vld [vmem:[#allocation9] sm:$0xff]
        %v1456 = vld [vmem:[#allocation9 + $0x8] sm:$0xff]
        %v1457 = vld [vmem:[#allocation9 + $0x10] sm:$0xff]
        %v1458 = vld [vmem:[#allocation9 + $0x18] sm:$0xff]
        %v1459 = vld [vmem:[#allocation9 + $0x20] sm:$0xff]
        %v1460 = vld [vmem:[#allocation9 + $0x28] sm:$0xff]
        %v1461 = vld [vmem:[#allocation9 + $0x30] sm:$0xff]
        %v1462 = vld [vmem:[#allocation9 + $0x38] sm:$0xff]
        %v1463 = vld [vmem:[%s7] sm:$0xf]
        %v1464 = vld [vmem:[%s7 + $0x4] sm:$0xf]
        %v1465 = vld [vmem:[%s7 + $0x8] sm:$0xf]
        %v1466 = vld [vmem:[%s7 + $0xc] sm:$0xf]
        %v1467 = vld [vmem:[%s7 + $0x10] sm:$0xf]
        %v1468 = vld [vmem:[%s7 + $0x14] sm:$0xf]
        %v1469 = vld [vmem:[#allocation17] sm:$0x1]
        %v1470 = vlaneseq
        %v1471 = vshrl.u32 %v1470, 7
        %v1472 = vsub.s32 0, %v1471
        %v1473 = vrot.slane %v1469, %v1472
        %v1476 = vunpack.c.l.b16 %v1463
        %v1477 = vunpack.c.l.b16 %v1464
        %v1478 = vpack.c.b16 %v1477, %v1476
        %1480 = vmatprep.subr.bf16.mxu0 0
        %1481 = vmatpush1.bf16.msra.mxu0 %v1478
        %1482 = vmatprep.subr.bf16.mxu0 0
        %1483 = vmatpush1.bf16.msra.mxu0 0
        %1484 = vmatprep.subr.bf16.mxu0 0
        %1485 = vmatpush1.bf16.msra.mxu0 0
        %1486 = vmatprep.subr.bf16.mxu0 0
        %1487 = vmatpush1.bf16.msra.mxu0 0
        %1488 = vmatprep.subr.bf16.mxu0 0
        %1489 = vmatpush1.bf16.msra.mxu0 0
        %1490 = vmatprep.subr.bf16.mxu0 0
        %1491 = vmatpush1.bf16.msra.mxu0 0
        %1492 = vmatprep.subr.bf16.mxu0 0
        %1493 = vmatpush1.bf16.msra.mxu0 0
        %1494 = vmatprep.subr.bf16.mxu0 0
        %1495 = vmatpush1.bf16.msra.mxu0 0
        %1496 = vmatprep.subr.bf16.mxu0 0
        %1497 = vmatpush1.bf16.msra.mxu0 0
        %1498 = vmatprep.subr.bf16.mxu0 0
        %1499 = vmatpush1.bf16.msra.mxu0 0
        %1500 = vmatprep.subr.bf16.mxu0 0
        %1501 = vmatpush1.bf16.msra.mxu0 0
        %1502 = vmatprep.subr.bf16.mxu0 0
        %1503 = vmatpush1.bf16.msra.mxu0 0
        %1504 = vmatprep.subr.bf16.mxu0 0
        %1505 = vmatpush1.bf16.msra.mxu0 0
        %1506 = vmatprep.subr.bf16.mxu0 0
        %1507 = vmatpush1.bf16.msra.mxu0 0
        %1508 = vmatprep.subr.bf16.mxu0 0
        %1509 = vmatpush1.bf16.msra.mxu0 0
        %1510 = vmatprep.subr.bf16.mxu0 0
        %1511 = vmatpush1.bf16.msra.mxu0 0
        %1512 = vmatprep.mubr.bf16.mxu0 0
        %1513 = vmatmul.mubr.bf16.gmra.mrb[0].mxu0 %v531
        %v1514 = vpop.f32.mrb[0].mxu0
        %v1515 = vadd.f32 %v1473, %v1514
        %v1516 = vpop.f32.mrb[0].mxu0
        %v1517 = vpop.f32.mrb[0].mxu0
        %v1518 = vpop.f32.mrb[0].mxu0
        %1519 = vdwg.mxu0
        %v1520 = vld [vmem:[#allocation17 + $0x5] sm:$0x1]
        %v1521 = vld [vmem:[#allocation17 + $0xa] sm:$0x1]
        %v1522 = vmul.f32 %v1515, %v1515
        %vm1523 = vcmask 523264
        %v1525 = vsel %vm1523, %v1515, 0
        %v1528 = vsel %vm1523, %v1522, 0
        %1530 = vmatprep.subr.mxu0 0.0
        %1531 = vmatpush1.msra.mxu0 %v1455
        %1532 = vmatprep.subr.mxu0 0.0
        %1533 = vmatpush1.msra.mxu0 %v1456
        %1534 = vmatprep.subr.mxu0 0.0
        %1535 = vmatpush1.msra.mxu0 %v1457
        %1536 = vmatprep.subr.mxu0 0.0
        %1537 = vmatpush1.msra.mxu0 %v1458
        %1538 = vmatprep.subr.mxu0 0.0
        %1539 = vmatpush1.msra.mxu0 %v1459
        %1540 = vmatprep.subr.mxu0 0.0
        %1541 = vmatpush1.msra.mxu0 %v1460
        %1542 = vmatprep.subr.mxu0 0.0
        %1543 = vmatpush1.msra.mxu0 %v1461
        %1544 = vmatprep.subr.mxu0 0.0
        %1545 = vmatpush1.msra.mxu0 %v1462
        %1546 = vmatprep.subr.mxu0 0.0
        %1547 = vmatpush1.msra.mxu0 0.0
        %1548 = vmatprep.subr.mxu0 0.0
        %1549 = vmatpush1.msra.mxu0 0.0
        %1550 = vmatprep.subr.mxu0 0.0
        %1551 = vmatpush1.msra.mxu0 0.0
        %1552 = vmatprep.subr.mxu0 0.0
        %1553 = vmatpush1.msra.mxu0 0.0
        %1554 = vmatprep.subr.mxu0 0.0
        %1555 = vmatpush1.msra.mxu0 0.0
        %1556 = vmatprep.subr.mxu0 0.0
        %1557 = vmatpush1.msra.mxu0 0.0
        %1558 = vmatprep.subr.mxu0 0.0
        %1559 = vmatpush1.msra.mxu0 0.0
        %1560 = vmatprep.subr.mxu0 0.0
        %1561 = vmatpush1.msra.mxu0 0.0
        %1562 = vmatprep.subr.mxu0 0.0
        %1563 = vmatpush1.msra.mxu0 0.0
        %1564 = vmatprep.subr.mxu0 0.0
        %1565 = vmatpush1.msra.mxu0 0.0
        %1566 = vmatprep.subr.mxu0 0.0
        %1567 = vmatpush1.msra.mxu0 0.0
        %1568 = vmatprep.subr.mxu0 0.0
        %1569 = vmatpush1.msra.mxu0 0.0
        %1570 = vmatprep.subr.mxu0 0.0
        %1571 = vmatpush1.msra.mxu0 0.0
        %1572 = vmatprep.subr.mxu0 0.0
        %1573 = vmatpush1.msra.mxu0 0.0
        %1574 = vmatprep.subr.mxu0 0.0
        %1575 = vmatpush1.msra.mxu0 0.0
        %1576 = vmatprep.subr.mxu0 0.0
        %1577 = vmatpush1.msra.mxu0 0.0
        %1578 = vmatprep.subr.mxu0 0.0
        %1579 = vmatpush1.msra.mxu0 0.0
        %1580 = vmatprep.subr.mxu0 0.0
        %1581 = vmatpush1.msra.mxu0 0.0
        %1582 = vmatprep.subr.mxu0 0.0
        %1583 = vmatpush1.msra.mxu0 0.0
        %1584 = vmatprep.subr.mxu0 0.0
        %1585 = vmatpush1.msra.mxu0 0.0
        %1586 = vmatprep.subr.mxu0 0.0
        %1587 = vmatpush1.msra.mxu0 0.0
        %1588 = vmatprep.subr.mxu0 0.0
        %1589 = vmatpush1.msra.mxu0 0.0
        %1590 = vmatprep.subr.mxu0 0.0
        %1591 = vmatpush1.msra.mxu0 0.0
        %1592 = vmatprep.subr.mxu0 0.0
        %1593 = vmatpush1.msra.mxu0 0.0
        %1594 = vmatprep.mubr.f32.mxu0 0.0
        %1595 = vmatmul.mubr.f32.gmra.mrb[0].mxu0 %v1525
        %v1596 = vpop.f32.mrb[0].mxu0
        %v1597 = vadd.f32 0.0, %v1596
        %v1598 = vpop.f32.mrb[0].mxu0
        %1599 = vmatprep.mubr.f32.mxu0 0.0
        %1600 = vmatmul.mubr.f32.gmra.mrb[0].mxu0 %v1528
        %v1601 = vpop.f32.mrb[0].mxu0
        %v1602 = vadd.f32 0.0, %v1601
        %v1603 = vpop.f32.mrb[0].mxu0
        %1604 = vdwg.mxu0
        %v1605 = vmul.f32 %v1597, %v1597
        %v1606 = vsub.f32 %v1602, %v1605
        %v1607 = vsub.f32 %v1515, %v1597
        %v1608 = vadd.f32 %v1606, 1e-05
        %v1609 = vrsqrt.pop %v1608
        %v1610 = vmul.f32 %v1607, %v1609
        %v1611 = vlaneseq
        %v1612 = vshrl.u32 %v1611, 7
        %v1613 = vsub.s32 0, %v1612
        %v1614 = vrot.slane %v1520, %v1613
        %v1615 = vmul.f32 %v1610, %v1614
        %v1616 = vlaneseq
        %v1617 = vshrl.u32 %v1616, 7
        %v1618 = vsub.s32 0, %v1617
        %v1619 = vrot.slane %v1521, %v1618
        %v1620 = vadd.f32 %v1615, %v1619
        %v1621 = vpack.c.bf16 %v1454, %v1454
        %v1622 = vld [vmem:[#allocation17 + $0x1] sm:$0x1]
        %v1623 = vlaneseq
        %v1624 = vshrl.u32 %v1623, 7
        %v1625 = vsub.s32 0, %v1624
        %v1626 = vrot.slane %v1622, %v1625
        %v1631 = vunpack.c.l.b16 %v1465
        %v1632 = vunpack.c.l.b16 %v1466
        %v1633 = vunpack.c.l.b16 %v1467
        %v1634 = vunpack.c.l.b16 %v1468
        %v1635 = vpack.c.b16 %v1632, %v1631
        %v1636 = vpack.c.b16 %v1634, %v1633
        %v1640 = vsel %vm692, %v1621, 0
        %1642 = vmatprep.subr.bf16.mxu0 0
        %1643 = vmatpush1.bf16.msra.mxu0 %v1635
        %1644 = vmatprep.subr.bf16.mxu0 0
        %1645 = vmatpush1.bf16.msra.mxu0 %v1636
        %1646 = vmatprep.subr.bf16.mxu0 0
        %1647 = vmatpush1.bf16.msra.mxu0 0
        %1648 = vmatprep.subr.bf16.mxu0 0
        %1649 = vmatpush1.bf16.msra.mxu0 0
        %1650 = vmatprep.subr.bf16.mxu0 0
        %1651 = vmatpush1.bf16.msra.mxu0 0
        %1652 = vmatprep.subr.bf16.mxu0 0
        %1653 = vmatpush1.bf16.msra.mxu0 0
        %1654 = vmatprep.subr.bf16.mxu0 0
        %1655 = vmatpush1.bf16.msra.mxu0 0
        %1656 = vmatprep.subr.bf16.mxu0 0
        %1657 = vmatpush1.bf16.msra.mxu0 0
        %1658 = vmatprep.subr.bf16.mxu0 0
        %1659 = vmatpush1.bf16.msra.mxu0 0
        %1660 = vmatprep.subr.bf16.mxu0 0
        %1661 = vmatpush1.bf16.msra.mxu0 0
        %1662 = vmatprep.subr.bf16.mxu0 0
        %1663 = vmatpush1.bf16.msra.mxu0 0
        %1664 = vmatprep.subr.bf16.mxu0 0
        %1665 = vmatpush1.bf16.msra.mxu0 0
        %1666 = vmatprep.subr.bf16.mxu0 0
        %1667 = vmatpush1.bf16.msra.mxu0 0
        %1668 = vmatprep.subr.bf16.mxu0 0
        %1669 = vmatpush1.bf16.msra.mxu0 0
        %1670 = vmatprep.subr.bf16.mxu0 0
        %1671 = vmatpush1.bf16.msra.mxu0 0
        %1672 = vmatprep.subr.bf16.mxu0 0
        %1673 = vmatpush1.bf16.msra.mxu0 0
        %1674 = vmatprep.mubr.bf16.mxu0 0
        %1675 = vmatmul.mubr.bf16.gmra.mrb[0].mxu0 %v1640
        %v1676 = vpop.f32.mrb[0].mxu0
        %v1677 = vadd.f32 %v1626, %v1676
        %v1678 = vpop.f32.mrb[0].mxu0
        %v1679 = vpop.f32.mrb[0].mxu0
        %v1680 = vpop.f32.mrb[0].mxu0
        %1681 = vdwg.mxu0
        %v1682 = vld [vmem:[#allocation17 + $0x6] sm:$0x1]
        %v1683 = vld [vmem:[#allocation17 + $0xb] sm:$0x1]
        %v1684 = vmul.f32 %v1677, %v1677
        %v1686 = vsel %vm1523, %v1677, 0
        %v1689 = vsel %vm1523, %v1684, 0
        %1691 = vmatprep.subr.mxu0 0.0
        %1692 = vmatpush1.msra.mxu0 %v1455
        %1693 = vmatprep.subr.mxu0 0.0
        %1694 = vmatpush1.msra.mxu0 %v1456
        %1695 = vmatprep.subr.mxu0 0.0
        %1696 = vmatpush1.msra.mxu0 %v1457
        %1697 = vmatprep.subr.mxu0 0.0
        %1698 = vmatpush1.msra.mxu0 %v1458
        %1699 = vmatprep.subr.mxu0 0.0
        %1700 = vmatpush1.msra.mxu0 %v1459
        %1701 = vmatprep.subr.mxu0 0.0
        %1702 = vmatpush1.msra.mxu0 %v1460
        %1703 = vmatprep.subr.mxu0 0.0
        %1704 = vmatpush1.msra.mxu0 %v1461
        %1705 = vmatprep.subr.mxu0 0.0
        %1706 = vmatpush1.msra.mxu0 %v1462
        %1707 = vmatprep.subr.mxu0 0.0
        %1708 = vmatpush1.msra.mxu0 0.0
        %1709 = vmatprep.subr.mxu0 0.0
        %1710 = vmatpush1.msra.mxu0 0.0
        %1711 = vmatprep.subr.mxu0 0.0
        %1712 = vmatpush1.msra.mxu0 0.0
        %1713 = vmatprep.subr.mxu0 0.0
        %1714 = vmatpush1.msra.mxu0 0.0
        %1715 = vmatprep.subr.mxu0 0.0
        %1716 = vmatpush1.msra.mxu0 0.0
        %1717 = vmatprep.subr.mxu0 0.0
        %1718 = vmatpush1.msra.mxu0 0.0
        %1719 = vmatprep.subr.mxu0 0.0
        %1720 = vmatpush1.msra.mxu0 0.0
        %1721 = vmatprep.subr.mxu0 0.0
        %1722 = vmatpush1.msra.mxu0 0.0
        %1723 = vmatprep.subr.mxu0 0.0
        %1724 = vmatpush1.msra.mxu0 0.0
        %1725 = vmatprep.subr.mxu0 0.0
        %1726 = vmatpush1.msra.mxu0 0.0
        %1727 = vmatprep.subr.mxu0 0.0
        %1728 = vmatpush1.msra.mxu0 0.0
        %1729 = vmatprep.subr.mxu0 0.0
        %1730 = vmatpush1.msra.mxu0 0.0
        %1731 = vmatprep.subr.mxu0 0.0
        %1732 = vmatpush1.msra.mxu0 0.0
        %1733 = vmatprep.subr.mxu0 0.0
        %1734 = vmatpush1.msra.mxu0 0.0
        %1735 = vmatprep.subr.mxu0 0.0
        %1736 = vmatpush1.msra.mxu0 0.0
        %1737 = vmatprep.subr.mxu0 0.0
        %1738 = vmatpush1.msra.mxu0 0.0
        %1739 = vmatprep.subr.mxu0 0.0
        %1740 = vmatpush1.msra.mxu0 0.0
        %1741 = vmatprep.subr.mxu0 0.0
        %1742 = vmatpush1.msra.mxu0 0.0
        %1743 = vmatprep.subr.mxu0 0.0
        %1744 = vmatpush1.msra.mxu0 0.0
        %1745 = vmatprep.subr.mxu0 0.0
        %1746 = vmatpush1.msra.mxu0 0.0
        %1747 = vmatprep.subr.mxu0 0.0
        %1748 = vmatpush1.msra.mxu0 0.0
        %1749 = vmatprep.subr.mxu0 0.0
        %1750 = vmatpush1.msra.mxu0 0.0
        %1751 = vmatprep.subr.mxu0 0.0
        %1752 = vmatpush1.msra.mxu0 0.0
        %1753 = vmatprep.subr.mxu0 0.0
        %1754 = vmatpush1.msra.mxu0 0.0
        %1755 = vmatprep.mubr.f32.mxu0 0.0
        %1756 = vmatmul.mubr.f32.gmra.mrb[0].mxu0 %v1686
        %v1757 = vpop.f32.mrb[0].mxu0
        %v1758 = vadd.f32 0.0, %v1757
        %v1759 = vpop.f32.mrb[0].mxu0
        %1760 = vmatprep.mubr.f32.mxu0 0.0
        %1761 = vmatmul.mubr.f32.gmra.mrb[0].mxu0 %v1689
        %v1762 = vpop.f32.mrb[0].mxu0
        %v1763 = vadd.f32 0.0, %v1762
        %v1764 = vpop.f32.mrb[0].mxu0
        %1765 = vdwg.mxu0
        %v1766 = vmul.f32 %v1758, %v1758
        %v1767 = vsub.f32 %v1763, %v1766
        %v1768 = vsub.f32 %v1677, %v1758
        %v1769 = vadd.f32 %v1767, 1e-05
        %v1770 = vrsqrt.pop %v1769
        %v1771 = vmul.f32 %v1768, %v1770
        %v1772 = vlaneseq
        %v1773 = vshrl.u32 %v1772, 7
        %v1774 = vsub.s32 0, %v1773
        %v1775 = vrot.slane %v1682, %v1774
        %v1776 = vmul.f32 %v1771, %v1775
        %v1777 = vlaneseq
        %v1778 = vshrl.u32 %v1777, 7
        %v1779 = vsub.s32 0, %v1778
        %v1780 = vrot.slane %v1683, %v1779
        %v1781 = vadd.f32 %v1776, %v1780
        %v1782 = vadd.f32 %v1620, %v1781
        %v1783 = vmul.f32 %v1782, 0.5
        %v1784 = vtanh.pop %v1783
        %v1785 = vmul.f32 %v1784, 0.5
        %v1786 = vadd.f32 %v1785, 0.5
        %v1787 = vld [vmem:[#allocation15] sm:$0xf]
        %v1788 = vld [vmem:[#allocation15 + $0x4] sm:$0xf]
        %v1789 = vld [vmem:[#allocation15 + $0x8] sm:$0xf]
        %v1790 = vld [vmem:[#allocation15 + $0xc] sm:$0xf]
        %v1791 = vld [vmem:[#allocation15 + $0x10] sm:$0xf]
        %v1792 = vld [vmem:[#allocation15 + $0x14] sm:$0xf]
        %v1793 = vld [vmem:[#allocation15 + $0x18] sm:$0xf]
        %v1794 = vld [vmem:[#allocation15 + $0x1c] sm:$0xf]
        %v1795 = vpack.c.bf16 %v1786, %v1786
        %v1796 = vld [vmem:[#allocation17 + $0x2] sm:$0x1]
        %v1797 = vlaneseq
        %v1798 = vshrl.u32 %v1797, 7
        %v1799 = vsub.s32 0, %v1798
        %v1800 = vrot.slane %v1796, %v1799
        %v1809 = vunpack.c.l.b16 %v1787
        %v1810 = vunpack.c.l.b16 %v1788
        %v1811 = vunpack.c.l.b16 %v1789
        %v1812 = vunpack.c.l.b16 %v1790
        %v1813 = vunpack.c.l.b16 %v1791
        %v1814 = vunpack.c.l.b16 %v1792
        %v1815 = vunpack.c.l.b16 %v1793
        %v1816 = vunpack.c.l.b16 %v1794
        %v1817 = vpack.c.b16 %v1810, %v1809
        %v1818 = vpack.c.b16 %v1812, %v1811
        %v1819 = vpack.c.b16 %v1814, %v1813
        %v1820 = vpack.c.b16 %v1816, %v1815
        %v1826 = vsel %vm1523, %v1795, 0
        %1828 = vmatprep.subr.bf16.mxu0 0
        %1829 = vmatpush1.bf16.msra.mxu0 %v1817
        %1830 = vmatprep.subr.bf16.mxu0 0
        %1831 = vmatpush1.bf16.msra.mxu0 %v1818
        %1832 = vmatprep.subr.bf16.mxu0 0
        %1833 = vmatpush1.bf16.msra.mxu0 %v1819
        %1834 = vmatprep.subr.bf16.mxu0 0
        %1835 = vmatpush1.bf16.msra.mxu0 %v1820
        %1836 = vmatprep.subr.bf16.mxu0 0
        %1837 = vmatpush1.bf16.msra.mxu0 0
        %1838 = vmatprep.subr.bf16.mxu0 0
        %1839 = vmatpush1.bf16.msra.mxu0 0
        %1840 = vmatprep.subr.bf16.mxu0 0
        %1841 = vmatpush1.bf16.msra.mxu0 0
        %1842 = vmatprep.subr.bf16.mxu0 0
        %1843 = vmatpush1.bf16.msra.mxu0 0
        %1844 = vmatprep.subr.bf16.mxu0 0
        %1845 = vmatpush1.bf16.msra.mxu0 0
        %1846 = vmatprep.subr.bf16.mxu0 0
        %1847 = vmatpush1.bf16.msra.mxu0 0
        %1848 = vmatprep.subr.bf16.mxu0 0
        %1849 = vmatpush1.bf16.msra.mxu0 0
        %1850 = vmatprep.subr.bf16.mxu0 0
        %1851 = vmatpush1.bf16.msra.mxu0 0
        %1852 = vmatprep.subr.bf16.mxu0 0
        %1853 = vmatpush1.bf16.msra.mxu0 0
        %1854 = vmatprep.subr.bf16.mxu0 0
        %1855 = vmatpush1.bf16.msra.mxu0 0
        %1856 = vmatprep.subr.bf16.mxu0 0
        %1857 = vmatpush1.bf16.msra.mxu0 0
        %1858 = vmatprep.subr.bf16.mxu0 0
        %1859 = vmatpush1.bf16.msra.mxu0 0
        %1860 = vmatprep.mubr.bf16.mxu0 0
        %1861 = vmatmul.mubr.bf16.gmra.mrb[0].mxu0 %v1826
        %v1862 = vpop.f32.mrb[0].mxu0
        %v1863 = vadd.f32 %v1800, %v1862
        %v1864 = vpop.f32.mrb[0].mxu0
        %v1865 = vpop.f32.mrb[0].mxu0
        %v1866 = vpop.f32.mrb[0].mxu0
        %1867 = vdwg.mxu0
        %v1868 = vld [vmem:[#allocation17 + $0x7] sm:$0x1]
        %v1869 = vld [vmem:[#allocation17 + $0xc] sm:$0x1]
        %v1870 = vmul.f32 %v1863, %v1863
        %v1872 = vsel %vm1523, %v1863, 0
        %v1875 = vsel %vm1523, %v1870, 0
        %1877 = vmatprep.subr.mxu0 0.0
        %1878 = vmatpush1.msra.mxu0 %v1455
        %1879 = vmatprep.subr.mxu0 0.0
        %1880 = vmatpush1.msra.mxu0 %v1456
        %1881 = vmatprep.subr.mxu0 0.0
        %1882 = vmatpush1.msra.mxu0 %v1457
        %1883 = vmatprep.subr.mxu0 0.0
        %1884 = vmatpush1.msra.mxu0 %v1458
        %1885 = vmatprep.subr.mxu0 0.0
        %1886 = vmatpush1.msra.mxu0 %v1459
        %1887 = vmatprep.subr.mxu0 0.0
        %1888 = vmatpush1.msra.mxu0 %v1460
        %1889 = vmatprep.subr.mxu0 0.0
        %1890 = vmatpush1.msra.mxu0 %v1461
        %1891 = vmatprep.subr.mxu0 0.0
        %1892 = vmatpush1.msra.mxu0 %v1462
        %1893 = vmatprep.subr.mxu0 0.0
        %1894 = vmatpush1.msra.mxu0 0.0
        %1895 = vmatprep.subr.mxu0 0.0
        %1896 = vmatpush1.msra.mxu0 0.0
        %1897 = vmatprep.subr.mxu0 0.0
        %1898 = vmatpush1.msra.mxu0 0.0
        %1899 = vmatprep.subr.mxu0 0.0
        %1900 = vmatpush1.msra.mxu0 0.0
        %1901 = vmatprep.subr.mxu0 0.0
        %1902 = vmatpush1.msra.mxu0 0.0
        %1903 = vmatprep.subr.mxu0 0.0
        %1904 = vmatpush1.msra.mxu0 0.0
        %1905 = vmatprep.subr.mxu0 0.0
        %1906 = vmatpush1.msra.mxu0 0.0
        %1907 = vmatprep.subr.mxu0 0.0
        %1908 = vmatpush1.msra.mxu0 0.0
        %1909 = vmatprep.subr.mxu0 0.0
        %1910 = vmatpush1.msra.mxu0 0.0
        %1911 = vmatprep.subr.mxu0 0.0
        %1912 = vmatpush1.msra.mxu0 0.0
        %1913 = vmatprep.subr.mxu0 0.0
        %1914 = vmatpush1.msra.mxu0 0.0
        %1915 = vmatprep.subr.mxu0 0.0
        %1916 = vmatpush1.msra.mxu0 0.0
        %1917 = vmatprep.subr.mxu0 0.0
        %1918 = vmatpush1.msra.mxu0 0.0
        %1919 = vmatprep.subr.mxu0 0.0
        %1920 = vmatpush1.msra.mxu0 0.0
        %1921 = vmatprep.subr.mxu0 0.0
        %1922 = vmatpush1.msra.mxu0 0.0
        %1923 = vmatprep.subr.mxu0 0.0
        %1924 = vmatpush1.msra.mxu0 0.0
        %1925 = vmatprep.subr.mxu0 0.0
        %1926 = vmatpush1.msra.mxu0 0.0
        %1927 = vmatprep.subr.mxu0 0.0
        %1928 = vmatpush1.msra.mxu0 0.0
        %1929 = vmatprep.subr.mxu0 0.0
        %1930 = vmatpush1.msra.mxu0 0.0
        %1931 = vmatprep.subr.mxu0 0.0
        %1932 = vmatpush1.msra.mxu0 0.0
        %1933 = vmatprep.subr.mxu0 0.0
        %1934 = vmatpush1.msra.mxu0 0.0
        %1935 = vmatprep.subr.mxu0 0.0
        %1936 = vmatpush1.msra.mxu0 0.0
        %1937 = vmatprep.subr.mxu0 0.0
        %1938 = vmatpush1.msra.mxu0 0.0
        %1939 = vmatprep.subr.mxu0 0.0
        %1940 = vmatpush1.msra.mxu0 0.0
        %1941 = vmatprep.mubr.f32.mxu0 0.0
        %1942 = vmatmul.mubr.f32.gmra.mrb[0].mxu0 %v1872
        %v1943 = vpop.f32.mrb[0].mxu0
        %v1944 = vadd.f32 0.0, %v1943
        %v1945 = vpop.f32.mrb[0].mxu0
        %1946 = vmatprep.mubr.f32.mxu0 0.0
        %1947 = vmatmul.mubr.f32.gmra.mrb[0].mxu0 %v1875
        %v1948 = vpop.f32.mrb[0].mxu0
        %v1949 = vadd.f32 0.0, %v1948
        %v1950 = vpop.f32.mrb[0].mxu0
        %1951 = vdwg.mxu0
        %v1952 = vmul.f32 %v1944, %v1944
        %v1953 = vsub.f32 %v1949, %v1952
        %v1954 = vsub.f32 %v1863, %v1944
        %v1955 = vadd.f32 %v1953, 1e-05
        %v1956 = vrsqrt.pop %v1955
        %v1957 = vmul.f32 %v1954, %v1956
        %v1958 = vlaneseq
        %v1959 = vshrl.u32 %v1958, 7
        %v1960 = vsub.s32 0, %v1959
        %v1961 = vrot.slane %v1868, %v1960
        %v1962 = vmul.f32 %v1957, %v1961
        %v1963 = vlaneseq
        %v1964 = vshrl.u32 %v1963, 7
        %v1965 = vsub.s32 0, %v1964
        %v1966 = vrot.slane %v1869, %v1965
        %v1967 = vadd.f32 %v1962, %v1966
        %v1968 = vadd.f32 %v1782, %v1967
        %v1969 = vmul.f32 %v1968, 0.5
        %v1970 = vtanh.pop %v1969
        %v1971 = vmul.f32 %v1970, 0.5
        %v1972 = vadd.f32 %v1971, 0.5
        %s1973 = scalar_lea.vmem [#allocation15], 32
        %v1974 = vld [vmem:[%s1973] sm:$0xf]
        %v1975 = vld [vmem:[%s1973 + $0x4] sm:$0xf]
        %v1976 = vld [vmem:[%s1973 + $0x8] sm:$0xf]
        %v1977 = vld [vmem:[%s1973 + $0xc] sm:$0xf]
        %v1978 = vld [vmem:[%s1973 + $0x10] sm:$0xf]
        %v1979 = vld [vmem:[%s1973 + $0x14] sm:$0xf]
        %v1980 = vld [vmem:[%s1973 + $0x18] sm:$0xf]
        %v1981 = vld [vmem:[%s1973 + $0x1c] sm:$0xf]
        %v1982 = vpack.c.bf16 %v1972, %v1972
        %v1983 = vld [vmem:[#allocation17 + $0x3] sm:$0x1]
        %v1984 = vlaneseq
        %v1985 = vshrl.u32 %v1984, 7
        %v1986 = vsub.s32 0, %v1985
        %v1987 = vrot.slane %v1983, %v1986
        %v1996 = vunpack.c.l.b16 %v1974
        %v1997 = vunpack.c.l.b16 %v1975
        %v1998 = vunpack.c.l.b16 %v1976
        %v1999 = vunpack.c.l.b16 %v1977
        %v2000 = vunpack.c.l.b16 %v1978
        %v2001 = vunpack.c.l.b16 %v1979
        %v2002 = vunpack.c.l.b16 %v1980
        %v2003 = vunpack.c.l.b16 %v1981
        %v2004 = vpack.c.b16 %v1997, %v1996
        %v2005 = vpack.c.b16 %v1999, %v1998
        %v2006 = vpack.c.b16 %v2001, %v2000
        %v2007 = vpack.c.b16 %v2003, %v2002
        %v2013 = vsel %vm1523, %v1982, 0
        %2015 = vmatprep.subr.bf16.mxu0 0
        %2016 = vmatpush1.bf16.msra.mxu0 %v2004
        %2017 = vmatprep.subr.bf16.mxu0 0
        %2018 = vmatpush1.bf16.msra.mxu0 %v2005
        %2019 = vmatprep.subr.bf16.mxu0 0
        %2020 = vmatpush1.bf16.msra.mxu0 %v2006
        %2021 = vmatprep.subr.bf16.mxu0 0
        %2022 = vmatpush1.bf16.msra.mxu0 %v2007
        %2023 = vmatprep.subr.bf16.mxu0 0
        %2024 = vmatpush1.bf16.msra.mxu0 0
        %2025 = vmatprep.subr.bf16.mxu0 0
        %2026 = vmatpush1.bf16.msra.mxu0 0
        %2027 = vmatprep.subr.bf16.mxu0 0
        %2028 = vmatpush1.bf16.msra.mxu0 0
        %2029 = vmatprep.subr.bf16.mxu0 0
        %2030 = vmatpush1.bf16.msra.mxu0 0
        %2031 = vmatprep.subr.bf16.mxu0 0
        %2032 = vmatpush1.bf16.msra.mxu0 0
        %2033 = vmatprep.subr.bf16.mxu0 0
        %2034 = vmatpush1.bf16.msra.mxu0 0
        %2035 = vmatprep.subr.bf16.mxu0 0
        %2036 = vmatpush1.bf16.msra.mxu0 0
        %2037 = vmatprep.subr.bf16.mxu0 0
        %2038 = vmatpush1.bf16.msra.mxu0 0
        %2039 = vmatprep.subr.bf16.mxu0 0
        %2040 = vmatpush1.bf16.msra.mxu0 0
        %2041 = vmatprep.subr.bf16.mxu0 0
        %2042 = vmatpush1.bf16.msra.mxu0 0
        %2043 = vmatprep.subr.bf16.mxu0 0
        %2044 = vmatpush1.bf16.msra.mxu0 0
        %2045 = vmatprep.subr.bf16.mxu0 0
        %2046 = vmatpush1.bf16.msra.mxu0 0
        %2047 = vmatprep.mubr.bf16.mxu0 0
        %2048 = vmatmul.mubr.bf16.gmra.mrb[0].mxu0 %v2013
        %v2049 = vpop.f32.mrb[0].mxu0
        %v2050 = vadd.f32 %v1987, %v2049
        %v2051 = vpop.f32.mrb[0].mxu0
        %v2052 = vpop.f32.mrb[0].mxu0
        %v2053 = vpop.f32.mrb[0].mxu0
        %2054 = vdwg.mxu0
        %v2055 = vld [vmem:[#allocation17 + $0x8] sm:$0x1]
        %v2056 = vld [vmem:[#allocation17 + $0xd] sm:$0x1]
        %v2057 = vmul.f32 %v2050, %v2050
        %v2059 = vsel %vm1523, %v2050, 0
        %v2062 = vsel %vm1523, %v2057, 0
        %2064 = vmatprep.subr.mxu0 0.0
        %2065 = vmatpush1.msra.mxu0 %v1455
        %2066 = vmatprep.subr.mxu0 0.0
        %2067 = vmatpush1.msra.mxu0 %v1456
        %2068 = vmatprep.subr.mxu0 0.0
        %2069 = vmatpush1.msra.mxu0 %v1457
        %2070 = vmatprep.subr.mxu0 0.0
        %2071 = vmatpush1.msra.mxu0 %v1458
        %2072 = vmatprep.subr.mxu0 0.0
        %2073 = vmatpush1.msra.mxu0 %v1459
        %2074 = vmatprep.subr.mxu0 0.0
        %2075 = vmatpush1.msra.mxu0 %v1460
        %2076 = vmatprep.subr.mxu0 0.0
        %2077 = vmatpush1.msra.mxu0 %v1461
        %2078 = vmatprep.subr.mxu0 0.0
        %2079 = vmatpush1.msra.mxu0 %v1462
        %2080 = vmatprep.subr.mxu0 0.0
        %2081 = vmatpush1.msra.mxu0 0.0
        %2082 = vmatprep.subr.mxu0 0.0
        %2083 = vmatpush1.msra.mxu0 0.0
        %2084 = vmatprep.subr.mxu0 0.0
        %2085 = vmatpush1.msra.mxu0 0.0
        %2086 = vmatprep.subr.mxu0 0.0
        %2087 = vmatpush1.msra.mxu0 0.0
        %2088 = vmatprep.subr.mxu0 0.0
        %2089 = vmatpush1.msra.mxu0 0.0
        %2090 = vmatprep.subr.mxu0 0.0
        %2091 = vmatpush1.msra.mxu0 0.0
        %2092 = vmatprep.subr.mxu0 0.0
        %2093 = vmatpush1.msra.mxu0 0.0
        %2094 = vmatprep.subr.mxu0 0.0
        %2095 = vmatpush1.msra.mxu0 0.0
        %2096 = vmatprep.subr.mxu0 0.0
        %2097 = vmatpush1.msra.mxu0 0.0
        %2098 = vmatprep.subr.mxu0 0.0
        %2099 = vmatpush1.msra.mxu0 0.0
        %2100 = vmatprep.subr.mxu0 0.0
        %2101 = vmatpush1.msra.mxu0 0.0
        %2102 = vmatprep.subr.mxu0 0.0
        %2103 = vmatpush1.msra.mxu0 0.0
        %2104 = vmatprep.subr.mxu0 0.0
        %2105 = vmatpush1.msra.mxu0 0.0
        %2106 = vmatprep.subr.mxu0 0.0
        %2107 = vmatpush1.msra.mxu0 0.0
        %2108 = vmatprep.subr.mxu0 0.0
        %2109 = vmatpush1.msra.mxu0 0.0
        %2110 = vmatprep.subr.mxu0 0.0
        %2111 = vmatpush1.msra.mxu0 0.0
        %2112 = vmatprep.subr.mxu0 0.0
        %2113 = vmatpush1.msra.mxu0 0.0
        %2114 = vmatprep.subr.mxu0 0.0
        %2115 = vmatpush1.msra.mxu0 0.0
        %2116 = vmatprep.subr.mxu0 0.0
        %2117 = vmatpush1.msra.mxu0 0.0
        %2118 = vmatprep.subr.mxu0 0.0
        %2119 = vmatpush1.msra.mxu0 0.0
        %2120 = vmatprep.subr.mxu0 0.0
        %2121 = vmatpush1.msra.mxu0 0.0
        %2122 = vmatprep.subr.mxu0 0.0
        %2123 = vmatpush1.msra.mxu0 0.0
        %2124 = vmatprep.subr.mxu0 0.0
        %2125 = vmatpush1.msra.mxu0 0.0
        %2126 = vmatprep.subr.mxu0 0.0
        %2127 = vmatpush1.msra.mxu0 0.0
        %2128 = vmatprep.mubr.f32.mxu0 0.0
        %2129 = vmatmul.mubr.f32.gmra.mrb[0].mxu0 %v2059
        %v2130 = vpop.f32.mrb[0].mxu0
        %v2131 = vadd.f32 0.0, %v2130
        %v2132 = vpop.f32.mrb[0].mxu0
        %2133 = vmatprep.mubr.f32.mxu0 0.0
        %2134 = vmatmul.mubr.f32.gmra.mrb[0].mxu0 %v2062
        %v2135 = vpop.f32.mrb[0].mxu0
        %v2136 = vadd.f32 0.0, %v2135
        %v2137 = vpop.f32.mrb[0].mxu0
        %2138 = vdwg.mxu0
        %v2139 = vmul.f32 %v2131, %v2131
        %v2140 = vsub.f32 %v2136, %v2139
        %v2141 = vsub.f32 %v2050, %v2131
        %v2142 = vadd.f32 %v2140, 1e-05
        %v2143 = vrsqrt.pop %v2142
        %v2144 = vmul.f32 %v2141, %v2143
        %v2145 = vlaneseq
        %v2146 = vshrl.u32 %v2145, 7
        %v2147 = vsub.s32 0, %v2146
        %v2148 = vrot.slane %v2055, %v2147
        %v2149 = vmul.f32 %v2144, %v2148
        %v2150 = vlaneseq
        %v2151 = vshrl.u32 %v2150, 7
        %v2152 = vsub.s32 0, %v2151
        %v2153 = vrot.slane %v2056, %v2152
        %v2154 = vadd.f32 %v2149, %v2153
        %v2155 = vadd.f32 %v1968, %v2154
        %v2156 = vmul.f32 %v2155, 0.5
        %v2157 = vtanh.pop %v2156
        %v2158 = vmul.f32 %v2157, 0.5
        %v2159 = vadd.f32 %v2158, 0.5
        %s2160 = scalar_lea.vmem [#allocation15], 64
        %v2161 = vld [vmem:[%s2160] sm:$0xf]
        %v2162 = vld [vmem:[%s2160 + $0x4] sm:$0xf]
        %v2163 = vld [vmem:[%s2160 + $0x8] sm:$0xf]
        %v2164 = vld [vmem:[%s2160 + $0xc] sm:$0xf]
        %v2165 = vld [vmem:[%s2160 + $0x10] sm:$0xf]
        %v2166 = vld [vmem:[%s2160 + $0x14] sm:$0xf]
        %v2167 = vld [vmem:[%s2160 + $0x18] sm:$0xf]
        %v2168 = vld [vmem:[%s2160 + $0x1c] sm:$0xf]
        %v2169 = vpack.c.bf16 %v2159, %v2159
        %v2170 = vld [vmem:[#allocation17 + $0x4] sm:$0x1]
        %v2171 = vlaneseq
        %v2172 = vshrl.u32 %v2171, 7
        %v2173 = vsub.s32 0, %v2172
        %v2174 = vrot.slane %v2170, %v2173
        %v2183 = vunpack.c.l.b16 %v2161
        %v2184 = vunpack.c.l.b16 %v2162
        %v2185 = vunpack.c.l.b16 %v2163
        %v2186 = vunpack.c.l.b16 %v2164
        %v2187 = vunpack.c.l.b16 %v2165
        %v2188 = vunpack.c.l.b16 %v2166
        %v2189 = vunpack.c.l.b16 %v2167
        %v2190 = vunpack.c.l.b16 %v2168
        %v2191 = vpack.c.b16 %v2184, %v2183
        %v2192 = vpack.c.b16 %v2186, %v2185
        %v2193 = vpack.c.b16 %v2188, %v2187
        %v2194 = vpack.c.b16 %v2190, %v2189
        %v2200 = vsel %vm1523, %v2169, 0
        %2202 = vmatprep.subr.bf16.mxu0 0
        %2203 = vmatpush1.bf16.msra.mxu0 %v2191
        %2204 = vmatprep.subr.bf16.mxu0 0
        %2205 = vmatpush1.bf16.msra.mxu0 %v2192
        %2206 = vmatprep.subr.bf16.mxu0 0
        %2207 = vmatpush1.bf16.msra.mxu0 %v2193
        %2208 = vmatprep.subr.bf16.mxu0 0
        %2209 = vmatpush1.bf16.msra.mxu0 %v2194
        %2210 = vmatprep.subr.bf16.mxu0 0
        %2211 = vmatpush1.bf16.msra.mxu0 0
        %2212 = vmatprep.subr.bf16.mxu0 0
        %2213 = vmatpush1.bf16.msra.mxu0 0
        %2214 = vmatprep.subr.bf16.mxu0 0
        %2215 = vmatpush1.bf16.msra.mxu0 0
        %2216 = vmatprep.subr.bf16.mxu0 0
        %2217 = vmatpush1.bf16.msra.mxu0 0
        %2218 = vmatprep.subr.bf16.mxu0 0
        %2219 = vmatpush1.bf16.msra.mxu0 0
        %2220 = vmatprep.subr.bf16.mxu0 0
        %2221 = vmatpush1.bf16.msra.mxu0 0
        %2222 = vmatprep.subr.bf16.mxu0 0
        %2223 = vmatpush1.bf16.msra.mxu0 0
        %2224 = vmatprep.subr.bf16.mxu0 0
        %2225 = vmatpush1.bf16.msra.mxu0 0
        %2226 = vmatprep.subr.bf16.mxu0 0
        %2227 = vmatpush1.bf16.msra.mxu0 0
        %2228 = vmatprep.subr.bf16.mxu0 0
        %2229 = vmatpush1.bf16.msra.mxu0 0
        %2230 = vmatprep.subr.bf16.mxu0 0
        %2231 = vmatpush1.bf16.msra.mxu0 0
        %2232 = vmatprep.subr.bf16.mxu0 0
        %2233 = vmatpush1.bf16.msra.mxu0 0
        %2234 = vmatprep.mubr.bf16.mxu0 0
        %2235 = vmatmul.mubr.bf16.gmra.mrb[0].mxu0 %v2200
        %v2236 = vpop.f32.mrb[0].mxu0
        %v2237 = vadd.f32 %v2174, %v2236
        %v2238 = vpop.f32.mrb[0].mxu0
        %v2239 = vpop.f32.mrb[0].mxu0
        %v2240 = vpop.f32.mrb[0].mxu0
        %2241 = vdwg.mxu0
        %v2242 = vld [vmem:[#allocation17 + $0x9] sm:$0x1]
        %v2243 = vld [vmem:[#allocation17 + $0xe] sm:$0x1]
        %v2244 = vmul.f32 %v2237, %v2237
        %v2246 = vsel %vm1523, %v2237, 0
        %v2249 = vsel %vm1523, %v2244, 0
        %2251 = vmatprep.subr.mxu0 0.0
        %2252 = vmatpush1.msra.mxu0 %v1455
        %2253 = vmatprep.subr.mxu0 0.0
        %2254 = vmatpush1.msra.mxu0 %v1456
        %2255 = vmatprep.subr.mxu0 0.0
        %2256 = vmatpush1.msra.mxu0 %v1457
        %2257 = vmatprep.subr.mxu0 0.0
        %2258 = vmatpush1.msra.mxu0 %v1458
        %2259 = vmatprep.subr.mxu0 0.0
        %2260 = vmatpush1.msra.mxu0 %v1459
        %2261 = vmatprep.subr.mxu0 0.0
        %2262 = vmatpush1.msra.mxu0 %v1460
        %2263 = vmatprep.subr.mxu0 0.0
        %2264 = vmatpush1.msra.mxu0 %v1461
        %2265 = vmatprep.subr.mxu0 0.0
        %2266 = vmatpush1.msra.mxu0 %v1462
        %2267 = vmatprep.subr.mxu0 0.0
        %2268 = vmatpush1.msra.mxu0 0.0
        %2269 = vmatprep.subr.mxu0 0.0
        %2270 = vmatpush1.msra.mxu0 0.0
        %2271 = vmatprep.subr.mxu0 0.0
        %2272 = vmatpush1.msra.mxu0 0.0
        %2273 = vmatprep.subr.mxu0 0.0
        %2274 = vmatpush1.msra.mxu0 0.0
        %2275 = vmatprep.subr.mxu0 0.0
        %2276 = vmatpush1.msra.mxu0 0.0
        %2277 = vmatprep.subr.mxu0 0.0
        %2278 = vmatpush1.msra.mxu0 0.0
        %2279 = vmatprep.subr.mxu0 0.0
        %2280 = vmatpush1.msra.mxu0 0.0
        %2281 = vmatprep.subr.mxu0 0.0
        %2282 = vmatpush1.msra.mxu0 0.0
        %2283 = vmatprep.subr.mxu0 0.0
        %2284 = vmatpush1.msra.mxu0 0.0
        %2285 = vmatprep.subr.mxu0 0.0
        %2286 = vmatpush1.msra.mxu0 0.0
        %2287 = vmatprep.subr.mxu0 0.0
        %2288 = vmatpush1.msra.mxu0 0.0
        %2289 = vmatprep.subr.mxu0 0.0
        %2290 = vmatpush1.msra.mxu0 0.0
        %2291 = vmatprep.subr.mxu0 0.0
        %2292 = vmatpush1.msra.mxu0 0.0
        %2293 = vmatprep.subr.mxu0 0.0
        %2294 = vmatpush1.msra.mxu0 0.0
        %2295 = vmatprep.subr.mxu0 0.0
        %2296 = vmatpush1.msra.mxu0 0.0
        %2297 = vmatprep.subr.mxu0 0.0
        %2298 = vmatpush1.msra.mxu0 0.0
        %2299 = vmatprep.subr.mxu0 0.0
        %2300 = vmatpush1.msra.mxu0 0.0
        %2301 = vmatprep.subr.mxu0 0.0
        %2302 = vmatpush1.msra.mxu0 0.0
        %2303 = vmatprep.subr.mxu0 0.0
        %2304 = vmatpush1.msra.mxu0 0.0
        %2305 = vmatprep.subr.mxu0 0.0
        %2306 = vmatpush1.msra.mxu0 0.0
        %2307 = vmatprep.subr.mxu0 0.0
        %2308 = vmatpush1.msra.mxu0 0.0
        %2309 = vmatprep.subr.mxu0 0.0
        %2310 = vmatpush1.msra.mxu0 0.0
        %2311 = vmatprep.subr.mxu0 0.0
        %2312 = vmatpush1.msra.mxu0 0.0
        %2313 = vmatprep.subr.mxu0 0.0
        %2314 = vmatpush1.msra.mxu0 0.0
        %2315 = vmatprep.mubr.f32.mxu0 0.0
        %2316 = vmatmul.mubr.f32.gmra.mrb[0].mxu0 %v2246
        %v2317 = vpop.f32.mrb[0].mxu0
        %v2318 = vadd.f32 0.0, %v2317
        %v2319 = vpop.f32.mrb[0].mxu0
        %2320 = vmatprep.mubr.f32.mxu0 0.0
        %2321 = vmatmul.mubr.f32.gmra.mrb[0].mxu0 %v2249
        %v2322 = vpop.f32.mrb[0].mxu0
        %v2323 = vadd.f32 0.0, %v2322
        %v2324 = vpop.f32.mrb[0].mxu0
        %2325 = vdwg.mxu0
        %v2326 = vmul.f32 %v2318, %v2318
        %v2327 = vsub.f32 %v2323, %v2326
        %v2328 = vsub.f32 %v2237, %v2318
        %v2329 = vadd.f32 %v2327, 1e-05
        %v2330 = vrsqrt.pop %v2329
        %v2331 = vmul.f32 %v2328, %v2330
        %v2332 = vlaneseq
        %v2333 = vshrl.u32 %v2332, 7
        %v2334 = vsub.s32 0, %v2333
        %v2335 = vrot.slane %v2242, %v2334
        %v2336 = vmul.f32 %v2331, %v2335
        %v2337 = vlaneseq
        %v2338 = vshrl.u32 %v2337, 7
        %v2339 = vsub.s32 0, %v2338
        %v2340 = vrot.slane %v2243, %v2339
        %v2341 = vadd.f32 %v2336, %v2340
        %v2342 = vadd.f32 %v2155, %v2341
        %v2343 = vmul.f32 %v2342, 0.5
        %v2344 = vtanh.pop %v2343
        %v2345 = vmul.f32 %v2344, 0.5
        %v2346 = vadd.f32 %v2345, 0.5
        %2348 = vrot.lane.b32.xlu0 %v2346, 96
        %v2349 = vpop.permute.xlu0 %2348
        %v2351 = vsub.f32 %v2346, %v2349
        %v2352 = vsub.f32 %v2351, %v498
        %2354 = vrot.lane.b32.xlu0 %v2352, 64
        %v2355 = vpop.permute.xlu0 %2354
        %v2357 = vmul.f32 %v1448, %v2355
        %2359 = vrot.lane.b32.xlu0 %v2357, 64
        %v2360 = vpop.permute.xlu0 %2359
        %v2362 = vadd.f32 %v498, %v2360
        %2363 = vst.msk [vmem:[#allocation2] sm:$0xff] %vm692, %v2362
        %v2364 = vsel %vm692, %v2362, 0.0
        %2365 = vst [vmem:[%s488] sm:$0xff] %v2364
        %s2366 = sand.u32 %s254, 1
        %s2367 = scalar_lea.sflag [#allocation5], %s2366
        %s2368 = sand.u32 %s254, 1
        %s2369 = smul.addr %s2368, 8
        %s2370 = scalar_lea.vmem [#allocation18], %s2369
        // Predicated region
        $region101: #{tpu_custom_call.1} parent=59 // pred_check
          %p2371 = pneg %p264
        $region102: #{tpu_custom_call.1} parent=59 // pred_check_branch
          %2373 = sbr.rel (%p2371) target = $region104
        $region103: #{tpu_custom_call.1} parent=59 // pred_region
          %s2375 = ssub.s32 128, 128
          %2376 = vsyncadd %s2367, %s2375
          %s2377 = smul.addr %s31, 128
          %s2378 = scalar_lea.hbm %s10, %s2377
          %s2380 = sshll.u32 %s2370, 4
          %s2381 = int_to_ptr.vmem [resolvable:$true] %s2380
          %2383 = dma.vmem_to_hbm [thread:$0]  %s2381, 128, %s2378, %s2367
        $region104: #{tpu_custom_call.1} parent=59 // pred_fallthru
          _
      $region60: #{tpu_custom_call.1} parent=5 // pred_fallthru
        _
      %p2384 = scmp.le.s32.totalorder 2, %s26
      // Predicated region
      $region105: #{tpu_custom_call.1} parent=5 // pred_check
        %p2385 = pneg %p2384
      $region106: #{tpu_custom_call.1} parent=5 // pred_check_branch
        %2387 = sbr.rel (%p2385) target = $region108
      $region107: #{tpu_custom_call.1} parent=5 // pred_region
        %s2388 = ssub.s32 %s26, 2
        // Predicated region
        $region109: #{tpu_custom_call.1} parent=107 // pred_check
          %p2389 = pneg %p270
        $region110: #{tpu_custom_call.1} parent=107 // pred_check_branch
          %2391 = sbr.rel (%p2389) target = $region112
        $region111: #{tpu_custom_call.1} parent=107 // pred_region
          %s2392 = sand.u32 %s255, 1
          %s2393 = scalar_lea.sflag [#allocation5], %s2392
          %s2394 = sand.u32 %s255, 1
          %s2395 = smul.addr %s2394, 8
          %s2396 = scalar_lea.vmem [#allocation18], %s2395
          %2397 = dma.done %s2393, 128
        $region112: #{tpu_custom_call.1} parent=107 // pred_fallthru
          _
      $region108: #{tpu_custom_call.1} parent=5 // pred_fallthru
        _
    $region6: #{tpu_custom_call.1} parent=1 // loop_footer
      %s30 = sadd.s32 1, %s26
    $region7: #{tpu_custom_call.1} parent=1 // loop_footer_branch
      %25 = sbr.rel target = $region3
    $region8: #{tpu_custom_call.1} parent=1 // loop_exit
      _
    %2398 = vsyncpa [#allocation4], 1
    %s2399 = scalar_lea.sflag [#allocation4], 1
    %2400 = vsyncpa %s2399, 1
    %2401 = vsyncpa [#allocation7], 1
    %2402 = vsyncpa [#allocation10], 1
    %2403 = vsyncpa [#allocation13], 1
    %2404 = vsyncpa [#allocation16], 1
    %2405 = vsyncpa [#allocation5], 1
    %s2406 = scalar_lea.sflag [#allocation5], 1
    %2407 = vsyncpa %s2406, 1

</llo_original>
